<compile_context>
chip_gen: v7x
topology: tpu7x:2x2x1
jax: 0.10.0
libtpu: 0.0.40
codegen_flags: <defaults>
</compile_context>

<pallas_src>
import jax
import jax.numpy as jnp
import numpy as np
from jax import lax
from jax.experimental import pallas as pl
from jax.experimental.pallas import tpu as pltpu


# ---------------------------------------------------------------------------
# Recurrent kernel: the serial LSTM work, one grid step per chunk of tc steps.
# ---------------------------------------------------------------------------
def _make_recurrent_kernel(batch, hidden, unroll):
    h_dim = hidden
    g_dim = 4 * hidden

    def kernel(x_ref, wih0_ref, whh0_ref, w1_ref, b0_ref, b1_ref,
               h1_ref, hn_ref, cn_ref, h_scr, c_scr):
        chunk = pl.program_id(0)
        tc = x_ref.shape[0]

        @pl.when(chunk == 0)
        def _():
            h_scr[...] = jnp.zeros_like(h_scr)
            c_scr[...] = jnp.zeros_like(c_scr)

        wih0 = wih0_ref[...]
        whh0 = whh0_ref[...]
        w1 = w1_ref[...]
        # Hoisted broadcasts (JAX does not CSE broadcast_in_dim in the loop).
        b0 = jnp.broadcast_to(b0_ref[...], (batch, g_dim))
        b1 = jnp.broadcast_to(b1_ref[...], (batch, g_dim))

        def activate(gates, c_prev):
            # Single EUP tanh pass over the whole [B, 4H] gate tensor.
            # i/f/o columns were pre-scaled by 0.5 in the wrapper, so
            # sigmoid(z) == 0.5 * (tanh(z/2) + 1) is recovered with one FMA.
            a = jnp.tanh(gates)
            i_g = 0.5 * (a[:, 0 * h_dim:1 * h_dim] + 1.0)
            f_g = 0.5 * (a[:, 1 * h_dim:2 * h_dim] + 1.0)
            g_g = a[:, 2 * h_dim:3 * h_dim]
            o_g = 0.5 * (a[:, 3 * h_dim:4 * h_dim] + 1.0)
            c_new = f_g * c_prev + i_g * g_g
            return o_g * jnp.tanh(c_new), c_new

        def step(t, carry):
            h0, c0, h1, c1 = carry
            # Layer-0 input projection: independent of the recurrent carry, so
            # the unrolled scheduler can issue it ahead of the serial chain
            # (embeddings streamed straight from HBM, no g0_pre intermediate).
            gx = jnp.dot(x_ref[t], wih0,
                         preferred_element_type=jnp.float32) + b0
            g0 = gx + jnp.dot(h0, whh0, preferred_element_type=jnp.float32)
            h0, c0 = activate(g0, c0)
            # Layer 1: one fused MXU dot over [h0 | h1] against the stacked
            # [wih1; whh1] weight instead of two dots + add.
            g1 = jnp.dot(jnp.concatenate([h0, h1], axis=-1), w1,
                         preferred_element_type=jnp.float32) + b1
            h1, c1 = activate(g1, c1)
            h1_ref[t] = h1
            return (h0, c0, h1, c1)

        carry0 = (h_scr[0], c_scr[0], h_scr[1], c_scr[1])
        h0, c0, h1, c1 = lax.fori_loop(0, tc, step, carry0, unroll=unroll)

        # Cross-chunk carry lives in VMEM scratch (2 stores per chunk).
        h_scr[0] = h0
        h_scr[1] = h1
        c_scr[0] = c0
        c_scr[1] = c1

        # (h_n, c_n) written once, on the last chunk only (resident outputs).
        @pl.when(chunk == pl.num_programs(0) - 1)
        def _():
            hn_ref[0] = h0
            hn_ref[1] = h1
            cn_ref[0] = c0
            cn_ref[1] = c1

    return kernel


# ---------------------------------------------------------------------------
# Final FC kernel: vocab-tiled, writes batch-major [B, tt, tv] blocks so no
# XLA transpose of the logits is needed afterwards.
# ---------------------------------------------------------------------------
def _fc_kernel(h_ref, w_ref, b_ref, o_ref):
    # h_ref: [tt, B, H] (time-major), w_ref: [H, tv], b_ref: [1, tv],
    # o_ref: [B, tt, tv] (batch-major).  The T<->B swap is folded into the
    # out_spec plus this static (trace-time) batch loop.
    h = h_ref[...]
    w = w_ref[...]
    b = b_ref[...]
    for bi in range(h.shape[1]):
        o_ref[bi] = jnp.dot(h[:, bi, :], w,
                            preferred_element_type=jnp.float32) + b


def _pick_time_chunk(t, max_chunk=16):
    for tc in range(min(t, max_chunk), 0, -1):
        if t % tc == 0:
            return tc
    return 1


def _pick_tile(n, max_tile, align):
    """Largest divisor of n <= max_tile that is a multiple of `align`; falls
    back to the full dimension (always a legal block)."""
    if n <= max_tile:
        return n
    for t in range(max_tile, 0, -1):
        if n % t == 0 and t % align == 0:
            return t
    # TODO(synk): pad + mask the tail instead of one full-size block when n is
    # large with no aligned divisor (VMEM-heavy but always legal / correct).
    return n


def lstm_basic_forward(x_tokens, params):
    """x_tokens: int32 [B, T]. Returns (logits [B, T, V], (h_n, c_n) [2, B, H])."""
    emb = params["embedding"]                    # [V, E]
    wih0, whh0 = params["wih0"], params["whh0"]  # [4H, E], [4H, H]
    wih1, whh1 = params["wih1"], params["whh1"]  # [4H, H], [4H, H]
    wfc, bfc = params["wfc"], params["bfc"]      # [V, H], [V]

    B, T = x_tokens.shape
    V, E = emb.shape
    H = whh0.shape[1]
    G = 4 * H

    # Embedding gather (plain JAX glue), produced directly time-major [T,B,E].
    x_tbe = jnp.take(emb, x_tokens.T, axis=0).astype(jnp.float32)

    # Gate pre-scaling for the single-tanh activation: gate column layout is
    # [i | f | g | o]; i/f/o columns scaled by 0.5 (sigmoid-via-tanh).
    half = jnp.full((H,), 0.5, jnp.float32)
    one = jnp.ones((H,), jnp.float32)
    scale = jnp.concatenate([half, half, one, half])                  # [4H]

    wih0s = wih0.T.astype(jnp.float32) * scale                        # [E, 4H]
    whh0s = whh0.T.astype(jnp.float32) * scale                        # [H, 4H]
    w1s = (jnp.concatenate([wih1.T, whh1.T], axis=0)
           .astype(jnp.float32) * scale)                              # [2H, 4H]
    b0 = ((params["bih0"] + params["bhh0"]) * scale
          ).reshape(1, G).astype(jnp.float32)
    b1 = ((params["bih1"] + params["bhh1"]) * scale
          ).reshape(1, G).astype(jnp.float32)

    tc = _pick_time_chunk(T)
    # Full unroll for small gate tensors; partial unroll for large H to keep
    # the 64-vreg file from spilling onto the vld/vst slots.
    unroll = True if H <= 256 else 4
    kernel = _make_recurrent_kernel(B, H, unroll)

    h1_seq, h_n, c_n = pl.pallas_call(
        kernel,
        out_shape=(
            jax.ShapeDtypeStruct((T, B, H), jnp.float32),   # h1 per timestep
            jax.ShapeDtypeStruct((2, B, H), jnp.float32),   # h_n
            jax.ShapeDtypeStruct((2, B, H), jnp.float32),   # c_n
        ),
        grid_spec=pltpu.PrefetchScalarGridSpec(
            num_scalar_prefetch=0,
            grid=(T // tc,),
            in_specs=[
                # streamed embeddings, chunked along time
                pl.BlockSpec((tc, B, E), lambda c: (c, 0, 0)),
                # constant weight/bias blocks: single-buffered (never change)
                pl.BlockSpec((E, G), lambda c: (0, 0),
                             pipeline_mode=pl.Buffered(1)),
                pl.BlockSpec((H, G), lambda c: (0, 0),
                             pipeline_mode=pl.Buffered(1)),
                pl.BlockSpec((2 * H, G), lambda c: (0, 0),
                             pipeline_mode=pl.Buffered(1)),
                pl.BlockSpec((1, G), lambda c: (0, 0),
                             pipeline_mode=pl.Buffered(1)),
                pl.BlockSpec((1, G), lambda c: (0, 0),
                             pipeline_mode=pl.Buffered(1)),
            ],
            out_specs=[
                pl.BlockSpec((tc, B, H), lambda c: (c, 0, 0)),   # h1_seq chunk
                pl.BlockSpec((2, B, H), lambda c: (0, 0, 0)),    # h_n resident
                pl.BlockSpec((2, B, H), lambda c: (0, 0, 0)),    # c_n resident
            ],
            scratch_shapes=[
                pltpu.VMEM((2, B, H), jnp.float32),   # h carry (both layers)
                pltpu.VMEM((2, B, H), jnp.float32),   # c carry (both layers)
            ],
        ),
        # Recurrence is serial.
        # TODO(synk): on v7x add a leading "parallel" batch-split grid axis
        # (per-half scratch + batch-indexed h_n/c_n blocks) to use both TCs.
        compiler_params=pltpu.CompilerParams(
            dimension_semantics=("arbitrary",)),
    )(x_tbe, wih0s, whh0s, w1s, b0, b1)

    # Final FC: vocab-tiled, batch-major output (no XLA logits transpose).
    tt = _pick_tile(T, 256, 8)
    tv = _pick_tile(V, 512, 128)
    # TODO(synk): cast wfc / h1_seq to bf16 (f32 accumulation) for the
    # throughput GEMM once tolerance requirements allow it.
    logits = pl.pallas_call(
        _fc_kernel,
        out_shape=jax.ShapeDtypeStruct((B, T, V), jnp.float32),
        grid_spec=pltpu.PrefetchScalarGridSpec(
            num_scalar_prefetch=0,
            # time is the fast axis -> the (H, tv) weight block stays resident
            # across the inner sweep.
            grid=(V // tv, T // tt),
            in_specs=[
                pl.BlockSpec((tt, B, H), lambda vi, ti: (ti, 0, 0)),
                pl.BlockSpec((H, tv), lambda vi, ti: (0, vi)),
                pl.BlockSpec((1, tv), lambda vi, ti: (0, vi)),
            ],
            out_specs=pl.BlockSpec((B, tt, tv), lambda vi, ti: (0, ti, vi)),
        ),
        compiler_params=pltpu.CompilerParams(
            dimension_semantics=("parallel", "parallel")),
    )(h1_seq, wfc.T.astype(jnp.float32),
      bfc.reshape(1, V).astype(jnp.float32))

    return logits, (h_n, c_n)


# ---------------------------------------------------------------------------
# Pure-JAX reference matching torch.nn.LSTM semantics (gate order i, f, g, o).
# ---------------------------------------------------------------------------
def _reference_forward(x_tokens, params):
    emb = params["embedding"]
    H = params["whh0"].shape[1]
    x = jnp.take(emb, x_tokens, axis=0).astype(jnp.float32)   # [B, T, E]
    B = x.shape[0]
    hp = jax.lax.Precision.HIGHEST

    def cell(inp, h, c, wih, whh, bih, bhh):
        gates = (jnp.dot(inp, wih.T, precision=hp)
                 + jnp.dot(h, whh.T, precision=hp) + bih + bhh)
        i = jax.nn.sigmoid(gates[:, 0 * H:1 * H])
        f = jax.nn.sigmoid(gates[:, 1 * H:2 * H])
        g = jnp.tanh(gates[:, 2 * H:3 * H])
        o = jax.nn.sigmoid(gates[:, 3 * H:4 * H])
        c_new = f * c + i * g
        return o * jnp.tanh(c_new), c_new

    def step(carry, x_t):
        h0, c0, h1, c1 = carry
        h0, c0 = cell(x_t, h0, c0, params["wih0"], params["whh0"],
                      params["bih0"], params["bhh0"])
        h1, c1 = cell(h0, h1, c1, params["wih1"], params["whh1"],
                      params["bih1"], params["bhh1"])
        return (h0, c0, h1, c1), h1

    z = jnp.zeros((B, H), jnp.float32)
    (h0, c0, h1, c1), hs = lax.scan(step, (z, z, z, z),
                                    jnp.transpose(x, (1, 0, 2)))
    hs = jnp.transpose(hs, (1, 0, 2))                          # [B, T, H]
    logits = jnp.dot(hs, params["wfc"].T, precision=hp) + params["bfc"]
    return logits, (jnp.stack([h0, h1]), jnp.stack([c0, c1]))


def init_params(key, vocab_size, embed_dim, hidden_dim):
    ks = jax.random.split(key, 12)
    s = 1.0 / np.sqrt(hidden_dim)
    u = lambda k, shape: jax.random.uniform(k, shape, jnp.float32, -s, s)
    return {
        "embedding": jax.random.normal(ks[0], (vocab_size, embed_dim), jnp.float32),
        "wih0": u(ks[1], (4 * hidden_dim, embed_dim)),
        "whh0": u(ks[2], (4 * hidden_dim, hidden_dim)),
        "bih0": u(ks[3], (4 * hidden_dim,)),
        "bhh0": u(ks[4], (4 * hidden_dim,)),
        "wih1": u(ks[5], (4 * hidden_dim, hidden_dim)),
        "whh1": u(ks[6], (4 * hidden_dim, hidden_dim)),
        "bih1": u(ks[7], (4 * hidden_dim,)),
        "bhh1": u(ks[8], (4 * hidden_dim,)),
        "wfc": u(ks[9], (vocab_size, hidden_dim)),
        "bfc": u(ks[10], (vocab_size,)),
    }


if __name__ == "__main__":
    VOCAB, EMBED, HIDDEN = 64, 32, 32
    B, T = 2, 8

    key = jax.random.PRNGKey(0)
    pkey, xkey = jax.random.split(key)
    params = init_params(pkey, VOCAB, EMBED, HIDDEN)
    x_tokens = jax.random.randint(xkey, (B, T), 0, VOCAB, dtype=jnp.int32)

    logits, (h_n, c_n) = jax.block_until_ready(
        jax.jit(lstm_basic_forward)(x_tokens, params))

    ref_logits, (ref_h, ref_c) = _reference_forward(x_tokens, params)

    assert logits.shape == (B, T, VOCAB)
    assert h_n.shape == (2, B, HIDDEN) and c_n.shape == (2, B, HIDDEN)
    np.testing.assert_allclose(np.asarray(logits), np.asarray(ref_logits),
                               rtol=5e-4, atol=5e-4)
    np.testing.assert_allclose(np.asarray(h_n), np.asarray(ref_h),
                               rtol=5e-4, atol=5e-4)
    np.testing.assert_allclose(np.asarray(c_n), np.asarray(ref_c),
                               rtol=5e-4, atol=5e-4)
    print("KERNEL_OK")
</pallas_src>

<mosaic_0001>
module attributes {stable_mosaic.version = 11 : i64} {
  func.func @_fc_kernel(%arg0: i32, %arg1: i32, %arg2: memref<8x2x32xf32, #tpu.memory_space<vmem>>, %arg3: memref<32x64xf32, #tpu.memory_space<vmem>>, %arg4: memref<1x64xf32, #tpu.memory_space<vmem>>, %arg5: memref<2x8x64xf32, #tpu.memory_space<vmem>>) attributes {dimension_semantics = [#tpu.dimension_semantics<parallel>, #tpu.dimension_semantics<parallel>], iteration_bounds = array<i64: 1, 1>, scalar_prefetch = 0 : i64, scratch_operands = 0 : i64, tpu.core_type = #tpu.core_type<tc>, window_params = [{transform_indices = @transform_0, window_bounds = array<i64: 8, 2, 32>}, {transform_indices = @transform_1, window_bounds = array<i64: 32, 64>}, {transform_indices = @transform_2, window_bounds = array<i64: 1, 64>}, {transform_indices = @transform_3, window_bounds = array<i64: 2, 8, 64>}]} {
    %c0 = arith.constant 0 : index
    %c0_0 = arith.constant 0 : index
    %c0_1 = arith.constant 0 : index
    %0 = vector.load %arg2[%c0, %c0_0, %c0_1] : memref<8x2x32xf32, #tpu.memory_space<vmem>>, vector<8x2x32xf32>
    %c0_2 = arith.constant 0 : index
    %c0_3 = arith.constant 0 : index
    %1 = vector.load %arg3[%c0_2, %c0_3] : memref<32x64xf32, #tpu.memory_space<vmem>>, vector<32x64xf32>
    %c0_4 = arith.constant 0 : index
    %c0_5 = arith.constant 0 : index
    %2 = vector.load %arg4[%c0_4, %c0_5] : memref<1x64xf32, #tpu.memory_space<vmem>>, vector<1x64xf32>
    %3 = vector.extract_strided_slice %0 {offsets = [0, 0, 0], sizes = [8, 1, 32], strides = [1, 1, 1]} : vector<8x2x32xf32> to vector<8x1x32xf32>
    %4 = vector.shape_cast %3 : vector<8x1x32xf32> to vector<8x32xf32>
    %cst = arith.constant dense<0.000000e+00> : vector<8x64xf32>
    %5 = tpu.matmul %4, %1, %cst {dimension_numbers = #tpu.dot_dimension_numbers<[1], [0], [0], [1], [0, 0, 1, 1], [], []>} : vector<8x32xf32>, vector<32x64xf32>, vector<8x64xf32> -> vector<8x64xf32>
    %6 = vector.broadcast %2 : vector<1x64xf32> to vector<8x64xf32>
    %7 = arith.addf %5, %6 : vector<8x64xf32>
    %c0_6 = arith.constant 0 : index
    %c0_7 = arith.constant 0 : index
    %c0_8 = arith.constant 0 : index
    %8 = vector.load %arg5[%c0_6, %c0_7, %c0_8] : memref<2x8x64xf32, #tpu.memory_space<vmem>>, vector<1x8x64xf32>
    %9 = vector.shape_cast %8 : vector<1x8x64xf32> to vector<8x64xf32>
    %10 = vector.shape_cast %7 : vector<8x64xf32> to vector<1x8x64xf32>
    tpu.vector_store %arg5[%c0_6, %c0_7, %c0_8], %10 {strides = array<i32>} : memref<2x8x64xf32, #tpu.memory_space<vmem>>, vector<1x8x64xf32>,
    %11 = vector.extract_strided_slice %0 {offsets = [0, 1, 0], sizes = [8, 1, 32], strides = [1, 1, 1]} : vector<8x2x32xf32> to vector<8x1x32xf32>
    %12 = vector.shape_cast %11 : vector<8x1x32xf32> to vector<8x32xf32>
    %cst_9 = arith.constant dense<0.000000e+00> : vector<8x64xf32>
    %13 = tpu.matmul %12, %1, %cst_9 {dimension_numbers = #tpu.dot_dimension_numbers<[1], [0], [0], [1], [0, 0, 1, 1], [], []>} : vector<8x32xf32>, vector<32x64xf32>, vector<8x64xf32> -> vector<8x64xf32>
    %14 = vector.broadcast %2 : vector<1x64xf32> to vector<8x64xf32>
    %15 = arith.addf %13, %14 : vector<8x64xf32>
    %c1 = arith.constant 1 : index
    %c0_10 = arith.constant 0 : index
    %c0_11 = arith.constant 0 : index
    %16 = vector.load %arg5[%c1, %c0_10, %c0_11] : memref<2x8x64xf32, #tpu.memory_space<vmem>>, vector<1x8x64xf32>
    %17 = vector.shape_cast %16 : vector<1x8x64xf32> to vector<8x64xf32>
    %18 = vector.shape_cast %15 : vector<8x64xf32> to vector<1x8x64xf32>
    tpu.vector_store %arg5[%c1, %c0_10, %c0_11], %18 {strides = array<i32>} : memref<2x8x64xf32, #tpu.memory_space<vmem>>, vector<1x8x64xf32>,
    return
  }
  func.func @transform_0(%arg0: i32, %arg1: i32) -> (i32, i32, i32) {
    %c0_i32 = arith.constant 0 : i32
    %c0_i32_0 = arith.constant 0 : i32
    %c0_i32_1 = arith.constant 0 : i32
    return %arg1, %c0_i32, %c0_i32_0 : i32, i32, i32
  }
  func.func @transform_1(%arg0: i32, %arg1: i32) -> (i32, i32) {
    %c0_i32 = arith.constant 0 : i32
    %c0_i32_0 = arith.constant 0 : i32
    return %c0_i32, %arg0 : i32, i32
  }
  func.func @transform_2(%arg0: i32, %arg1: i32) -> (i32, i32) {
    %c0_i32 = arith.constant 0 : i32
    %c0_i32_0 = arith.constant 0 : i32
    return %c0_i32, %arg0 : i32, i32
  }
  func.func @transform_3(%arg0: i32, %arg1: i32) -> (i32, i32, i32) {
    %c0_i32 = arith.constant 0 : i32
    %c0_i32_0 = arith.constant 0 : i32
    return %c0_i32, %arg1, %arg0 : i32, i32, i32
  }
}

module attributes {stable_mosaic.version = 11 : i64} {
  func.func @kernel(%arg0: i32, %arg1: memref<8x2x32xf32, #tpu.memory_space<vmem>>, %arg2: memref<32x128xf32, #tpu.memory_space<vmem>>, %arg3: memref<32x128xf32, #tpu.memory_space<vmem>>, %arg4: memref<64x128xf32, #tpu.memory_space<vmem>>, %arg5: memref<1x128xf32, #tpu.memory_space<vmem>>, %arg6: memref<1x128xf32, #tpu.memory_space<vmem>>, %arg7: memref<8x2x32xf32, #tpu.memory_space<vmem>>, %arg8: memref<2x2x32xf32, #tpu.memory_space<vmem>>, %arg9: memref<2x2x32xf32, #tpu.memory_space<vmem>>, %arg10: memref<2x2x32xf32, #tpu.memory_space<vmem>>, %arg11: memref<2x2x32xf32, #tpu.memory_space<vmem>>) attributes {dimension_semantics = [#tpu.dimension_semantics<arbitrary>], iteration_bounds = array<i64: 1>, scalar_prefetch = 0 : i64, scratch_operands = 2 : i64, tpu.core_type = #tpu.core_type<tc>, window_params = [{transform_indices = @transform_0, window_bounds = array<i64: 8, 2, 32>}, {pipeline_mode = #tpu.pipeline_mode<synchronous>, transform_indices = @transform_1, window_bounds = array<i64: 32, 128>}, {pipeline_mode = #tpu.pipeline_mode<synchronous>, transform_indices = @transform_2, window_bounds = array<i64: 32, 128>}, {pipeline_mode = #tpu.pipeline_mode<synchronous>, transform_indices = @transform_3, window_bounds = array<i64: 64, 128>}, {pipeline_mode = #tpu.pipeline_mode<synchronous>, transform_indices = @transform_4, window_bounds = array<i64: 1, 128>}, {pipeline_mode = #tpu.pipeline_mode<synchronous>, transform_indices = @transform_5, window_bounds = array<i64: 1, 128>}, {transform_indices = @transform_6, window_bounds = array<i64: 8, 2, 32>}, {pipeline_mode = #tpu.pipeline_mode<synchronous>, transform_indices = @transform_7, window_bounds = array<i64: 2, 2, 32>}, {pipeline_mode = #tpu.pipeline_mode<synchronous>, transform_indices = @transform_8, window_bounds = array<i64: 2, 2, 32>}]} {
    %c0_i32 = arith.constant 0 : i32
    %0 = arith.cmpi eq, %arg0, %c0_i32 : i32
    %1 = arith.extui %0 : i1 to i32
    %c0_i32_0 = arith.constant 0 : i32
    %2 = arith.cmpi ne, %1, %c0_i32_0 : i32
    scf.if %2 {
      %cst_187 = arith.constant 0.000000e+00 : f32
      %499 = vector.broadcast %cst_187 : f32 to vector<2x2x32xf32>
      %c0_188 = arith.constant 0 : index
      %c0_189 = arith.constant 0 : index
      %c0_190 = arith.constant 0 : index
      %500 = vector.load %arg10[%c0_188, %c0_189, %c0_190] : memref<2x2x32xf32, #tpu.memory_space<vmem>>, vector<2x2x32xf32>
      tpu.vector_store %arg10[%c0_188, %c0_189, %c0_190], %499 {strides = array<i32>} : memref<2x2x32xf32, #tpu.memory_space<vmem>>, vector<2x2x32xf32>,
      %cst_191 = arith.constant 0.000000e+00 : f32
      %501 = vector.broadcast %cst_191 : f32 to vector<2x2x32xf32>
      %c0_192 = arith.constant 0 : index
      %c0_193 = arith.constant 0 : index
      %c0_194 = arith.constant 0 : index
      %502 = vector.load %arg11[%c0_192, %c0_193, %c0_194] : memref<2x2x32xf32, #tpu.memory_space<vmem>>, vector<2x2x32xf32>
      tpu.vector_store %arg11[%c0_192, %c0_193, %c0_194], %501 {strides = array<i32>} : memref<2x2x32xf32, #tpu.memory_space<vmem>>, vector<2x2x32xf32>,
    } else {
    }
    %c0 = arith.constant 0 : index
    %c0_1 = arith.constant 0 : index
    %3 = vector.load %arg2[%c0, %c0_1] : memref<32x128xf32, #tpu.memory_space<vmem>>, vector<32x128xf32>
    %c0_2 = arith.constant 0 : index
    %c0_3 = arith.constant 0 : index
    %4 = vector.load %arg3[%c0_2, %c0_3] : memref<32x128xf32, #tpu.memory_space<vmem>>, vector<32x128xf32>
    %c0_4 = arith.constant 0 : index
    %c0_5 = arith.constant 0 : index
    %5 = vector.load %arg4[%c0_4, %c0_5] : memref<64x128xf32, #tpu.memory_space<vmem>>, vector<64x128xf32>
    %c0_6 = arith.constant 0 : index
    %c0_7 = arith.constant 0 : index
    %6 = vector.load %arg5[%c0_6, %c0_7] : memref<1x128xf32, #tpu.memory_space<vmem>>, vector<1x128xf32>
    %7 = vector.shape_cast %6 : vector<1x128xf32> to vector<1x128xf32>
    %8 = vector.broadcast %7 : vector<1x128xf32> to vector<2x128xf32>
    %c0_8 = arith.constant 0 : index
    %c0_9 = arith.constant 0 : index
    %9 = vector.load %arg6[%c0_8, %c0_9] : memref<1x128xf32, #tpu.memory_space<vmem>>, vector<1x128xf32>
    %10 = vector.shape_cast %9 : vector<1x128xf32> to vector<1x128xf32>
    %11 = vector.broadcast %10 : vector<1x128xf32> to vector<2x128xf32>
    %c0_10 = arith.constant 0 : index
    %c0_11 = arith.constant 0 : index
    %c0_12 = arith.constant 0 : index
    %12 = vector.load %arg10[%c0_10, %c0_11, %c0_12] : memref<2x2x32xf32, #tpu.memory_space<vmem>>, vector<1x2x32xf32>
    %13 = vector.shape_cast %12 : vector<1x2x32xf32> to vector<2x32xf32>
    %c0_13 = arith.constant 0 : index
    %c0_14 = arith.constant 0 : index
    %c0_15 = arith.constant 0 : index
    %14 = vector.load %arg11[%c0_13, %c0_14, %c0_15] : memref<2x2x32xf32, #tpu.memory_space<vmem>>, vector<1x2x32xf32>
    %15 = vector.shape_cast %14 : vector<1x2x32xf32> to vector<2x32xf32>
    %c1 = arith.constant 1 : index
    %c0_16 = arith.constant 0 : index
    %c0_17 = arith.constant 0 : index
    %16 = vector.load %arg10[%c1, %c0_16, %c0_17] : memref<2x2x32xf32, #tpu.memory_space<vmem>>, vector<1x2x32xf32>
    %17 = vector.shape_cast %16 : vector<1x2x32xf32> to vector<2x32xf32>
    %c1_18 = arith.constant 1 : index
    %c0_19 = arith.constant 0 : index
    %c0_20 = arith.constant 0 : index
    %18 = vector.load %arg11[%c1_18, %c0_19, %c0_20] : memref<2x2x32xf32, #tpu.memory_space<vmem>>, vector<1x2x32xf32>
    %19 = vector.shape_cast %18 : vector<1x2x32xf32> to vector<2x32xf32>
    %c0_i32_21 = arith.constant 0 : i32
    %20 = arith.index_cast %c0_i32_21 : i32 to index
    %c0_22 = arith.constant 0 : index
    %c0_23 = arith.constant 0 : index
    %21 = vector.load %arg1[%20, %c0_22, %c0_23] : memref<8x2x32xf32, #tpu.memory_space<vmem>>, vector<1x2x32xf32>
    %22 = vector.shape_cast %21 : vector<1x2x32xf32> to vector<2x32xf32>
    %cst = arith.constant dense<0.000000e+00> : vector<2x128xf32>
    %23 = tpu.matmul %22, %3, %cst {dimension_numbers = #tpu.dot_dimension_numbers<[1], [0], [0], [1], [0, 0, 1, 1], [], []>} : vector<2x32xf32>, vector<32x128xf32>, vector<2x128xf32> -> vector<2x128xf32>
    %24 = arith.addf %23, %8 : vector<2x128xf32>
    %cst_24 = arith.constant dense<0.000000e+00> : vector<2x128xf32>
    %25 = tpu.matmul %13, %4, %cst_24 {dimension_numbers = #tpu.dot_dimension_numbers<[1], [0], [0], [1], [0, 0, 1, 1], [], []>} : vector<2x32xf32>, vector<32x128xf32>, vector<2x128xf32> -> vector<2x128xf32>
    %26 = arith.addf %24, %25 : vector<2x128xf32>
    %27 = math.tanh %26 : vector<2x128xf32>
    %28 = vector.extract_strided_slice %27 {offsets = [0, 0], sizes = [2, 32], strides = [1, 1]} : vector<2x128xf32> to vector<2x32xf32>
    %cst_25 = arith.constant 1.000000e+00 : f32
    %29 = vector.broadcast %cst_25 : f32 to vector<2x32xf32>
    %30 = arith.addf %28, %29 : vector<2x32xf32>
    %cst_26 = arith.constant 5.000000e-01 : f32
    %31 = vector.broadcast %cst_26 : f32 to vector<2x32xf32>
    %32 = arith.mulf %31, %30 : vector<2x32xf32>
    %33 = vector.extract_strided_slice %27 {offsets = [0, 32], sizes = [2, 32], strides = [1, 1]} : vector<2x128xf32> to vector<2x32xf32>
    %cst_27 = arith.constant 1.000000e+00 : f32
    %34 = vector.broadcast %cst_27 : f32 to vector<2x32xf32>
    %35 = arith.addf %33, %34 : vector<2x32xf32>
    %cst_28 = arith.constant 5.000000e-01 : f32
    %36 = vector.broadcast %cst_28 : f32 to vector<2x32xf32>
    %37 = arith.mulf %36, %35 : vector<2x32xf32>
    %38 = vector.extract_strided_slice %27 {offsets = [0, 64], sizes = [2, 32], strides = [1, 1]} : vector<2x128xf32> to vector<2x32xf32>
    %39 = vector.extract_strided_slice %27 {offsets = [0, 96], sizes = [2, 32], strides = [1, 1]} : vector<2x128xf32> to vector<2x32xf32>
    %cst_29 = arith.constant 1.000000e+00 : f32
    %40 = vector.broadcast %cst_29 : f32 to vector<2x32xf32>
    %41 = arith.addf %39, %40 : vector<2x32xf32>
    %cst_30 = arith.constant 5.000000e-01 : f32
    %42 = vector.broadcast %cst_30 : f32 to vector<2x32xf32>
    %43 = arith.mulf %42, %41 : vector<2x32xf32>
    %44 = arith.mulf %37, %15 : vector<2x32xf32>
    %45 = arith.mulf %32, %38 : vector<2x32xf32>
    %46 = arith.addf %44, %45 : vector<2x32xf32>
    %47 = math.tanh %46 : vector<2x32xf32>
    %48 = arith.mulf %43, %47 : vector<2x32xf32>
    %49 = tpu.concatenate %48, %17 in 1 : vector<2x32xf32>, vector<2x32xf32> -> vector<2x64xf32>
    %cst_31 = arith.constant dense<0.000000e+00> : vector<2x128xf32>
    %50 = tpu.matmul %49, %5, %cst_31 {dimension_numbers = #tpu.dot_dimension_numbers<[1], [0], [0], [1], [0, 0, 1, 1], [], []>} : vector<2x64xf32>, vector<64x128xf32>, vector<2x128xf32> -> vector<2x128xf32>
    %51 = arith.addf %50, %11 : vector<2x128xf32>
    %52 = math.tanh %51 : vector<2x128xf32>
    %53 = vector.extract_strided_slice %52 {offsets = [0, 0], sizes = [2, 32], strides = [1, 1]} : vector<2x128xf32> to vector<2x32xf32>
    %cst_32 = arith.constant 1.000000e+00 : f32
    %54 = vector.broadcast %cst_32 : f32 to vector<2x32xf32>
    %55 = arith.addf %53, %54 : vector<2x32xf32>
    %cst_33 = arith.constant 5.000000e-01 : f32
    %56 = vector.broadcast %cst_33 : f32 to vector<2x32xf32>
    %57 = arith.mulf %56, %55 : vector<2x32xf32>
    %58 = vector.extract_strided_slice %52 {offsets = [0, 32], sizes = [2, 32], strides = [1, 1]} : vector<2x128xf32> to vector<2x32xf32>
    %cst_34 = arith.constant 1.000000e+00 : f32
    %59 = vector.broadcast %cst_34 : f32 to vector<2x32xf32>
    %60 = arith.addf %58, %59 : vector<2x32xf32>
    %cst_35 = arith.constant 5.000000e-01 : f32
    %61 = vector.broadcast %cst_35 : f32 to vector<2x32xf32>
    %62 = arith.mulf %61, %60 : vector<2x32xf32>
    %63 = vector.extract_strided_slice %52 {offsets = [0, 64], sizes = [2, 32], strides = [1, 1]} : vector<2x128xf32> to vector<2x32xf32>
    %64 = vector.extract_strided_slice %52 {offsets = [0, 96], sizes = [2, 32], strides = [1, 1]} : vector<2x128xf32> to vector<2x32xf32>
    %cst_36 = arith.constant 1.000000e+00 : f32
    %65 = vector.broadcast %cst_36 : f32 to vector<2x32xf32>
    %66 = arith.addf %64, %65 : vector<2x32xf32>
    %cst_37 = arith.constant 5.000000e-01 : f32
    %67 = vector.broadcast %cst_37 : f32 to vector<2x32xf32>
    %68 = arith.mulf %67, %66 : vector<2x32xf32>
    %69 = arith.mulf %62, %19 : vector<2x32xf32>
    %70 = arith.mulf %57, %63 : vector<2x32xf32>
    %71 = arith.addf %69, %70 : vector<2x32xf32>
    %72 = math.tanh %71 : vector<2x32xf32>
    %73 = arith.mulf %68, %72 : vector<2x32xf32>
    %74 = arith.index_cast %c0_i32_21 : i32 to index
    %c0_38 = arith.constant 0 : index
    %c0_39 = arith.constant 0 : index
    %75 = vector.load %arg7[%74, %c0_38, %c0_39] : memref<8x2x32xf32, #tpu.memory_space<vmem>>, vector<1x2x32xf32>
    %76 = vector.shape_cast %75 : vector<1x2x32xf32> to vector<2x32xf32>
    %77 = vector.shape_cast %73 : vector<2x32xf32> to vector<1x2x32xf32>
    tpu.vector_store %arg7[%74, %c0_38, %c0_39], %77 {strides = array<i32>} : memref<8x2x32xf32, #tpu.memory_space<vmem>>, vector<1x2x32xf32>,
    %c1_i32 = arith.constant 1 : i32
    %78 = arith.index_cast %c1_i32 : i32 to index
    %c0_40 = arith.constant 0 : index
    %c0_41 = arith.constant 0 : index
    %79 = vector.load %arg1[%78, %c0_40, %c0_41] : memref<8x2x32xf32, #tpu.memory_space<vmem>>, vector<1x2x32xf32>
    %80 = vector.shape_cast %79 : vector<1x2x32xf32> to vector<2x32xf32>
    %cst_42 = arith.constant dense<0.000000e+00> : vector<2x128xf32>
    %81 = tpu.matmul %80, %3, %cst_42 {dimension_numbers = #tpu.dot_dimension_numbers<[1], [0], [0], [1], [0, 0, 1, 1], [], []>} : vector<2x32xf32>, vector<32x128xf32>, vector<2x128xf32> -> vector<2x128xf32>
    %82 = arith.addf %81, %8 : vector<2x128xf32>
    %cst_43 = arith.constant dense<0.000000e+00> : vector<2x128xf32>
    %83 = tpu.matmul %48, %4, %cst_43 {dimension_numbers = #tpu.dot_dimension_numbers<[1], [0], [0], [1], [0, 0, 1, 1], [], []>} : vector<2x32xf32>, vector<32x128xf32>, vector<2x128xf32> -> vector<2x128xf32>
    %84 = arith.addf %82, %83 : vector<2x128xf32>
    %85 = math.tanh %84 : vector<2x128xf32>
    %86 = vector.extract_strided_slice %85 {offsets = [0, 0], sizes = [2, 32], strides = [1, 1]} : vector<2x128xf32> to vector<2x32xf32>
    %cst_44 = arith.constant 1.000000e+00 : f32
    %87 = vector.broadcast %cst_44 : f32 to vector<2x32xf32>
    %88 = arith.addf %86, %87 : vector<2x32xf32>
    %cst_45 = arith.constant 5.000000e-01 : f32
    %89 = vector.broadcast %cst_45 : f32 to vector<2x32xf32>
    %90 = arith.mulf %89, %88 : vector<2x32xf32>
    %91 = vector.extract_strided_slice %85 {offsets = [0, 32], sizes = [2, 32], strides = [1, 1]} : vector<2x128xf32> to vector<2x32xf32>
    %cst_46 = arith.constant 1.000000e+00 : f32
    %92 = vector.broadcast %cst_46 : f32 to vector<2x32xf32>
    %93 = arith.addf %91, %92 : vector<2x32xf32>
    %cst_47 = arith.constant 5.000000e-01 : f32
    %94 = vector.broadcast %cst_47 : f32 to vector<2x32xf32>
    %95 = arith.mulf %94, %93 : vector<2x32xf32>
    %96 = vector.extract_strided_slice %85 {offsets = [0, 64], sizes = [2, 32], strides = [1, 1]} : vector<2x128xf32> to vector<2x32xf32>
    %97 = vector.extract_strided_slice %85 {offsets = [0, 96], sizes = [2, 32], strides = [1, 1]} : vector<2x128xf32> to vector<2x32xf32>
    %cst_48 = arith.constant 1.000000e+00 : f32
    %98 = vector.broadcast %cst_48 : f32 to vector<2x32xf32>
    %99 = arith.addf %97, %98 : vector<2x32xf32>
    %cst_49 = arith.constant 5.000000e-01 : f32
    %100 = vector.broadcast %cst_49 : f32 to vector<2x32xf32>
    %101 = arith.mulf %100, %99 : vector<2x32xf32>
    %102 = arith.mulf %95, %46 : vector<2x32xf32>
    %103 = arith.mulf %90, %96 : vector<2x32xf32>
    %104 = arith.addf %102, %103 : vector<2x32xf32>
    %105 = math.tanh %104 : vector<2x32xf32>
    %106 = arith.mulf %101, %105 : vector<2x32xf32>
    %107 = tpu.concatenate %106, %73 in 1 : vector<2x32xf32>, vector<2x32xf32> -> vector<2x64xf32>
    %cst_50 = arith.constant dense<0.000000e+00> : vector<2x128xf32>
    %108 = tpu.matmul %107, %5, %cst_50 {dimension_numbers = #tpu.dot_dimension_numbers<[1], [0], [0], [1], [0, 0, 1, 1], [], []>} : vector<2x64xf32>, vector<64x128xf32>, vector<2x128xf32> -> vector<2x128xf32>
    %109 = arith.addf %108, %11 : vector<2x128xf32>
    %110 = math.tanh %109 : vector<2x128xf32>
    %111 = vector.extract_strided_slice %110 {offsets = [0, 0], sizes = [2, 32], strides = [1, 1]} : vector<2x128xf32> to vector<2x32xf32>
    %cst_51 = arith.constant 1.000000e+00 : f32
    %112 = vector.broadcast %cst_51 : f32 to vector<2x32xf32>
    %113 = arith.addf %111, %112 : vector<2x32xf32>
    %cst_52 = arith.constant 5.000000e-01 : f32
    %114 = vector.broadcast %cst_52 : f32 to vector<2x32xf32>
    %115 = arith.mulf %114, %113 : vector<2x32xf32>
    %116 = vector.extract_strided_slice %110 {offsets = [0, 32], sizes = [2, 32], strides = [1, 1]} : vector<2x128xf32> to vector<2x32xf32>
    %cst_53 = arith.constant 1.000000e+00 : f32
    %117 = vector.broadcast %cst_53 : f32 to vector<2x32xf32>
    %118 = arith.addf %116, %117 : vector<2x32xf32>
    %cst_54 = arith.constant 5.000000e-01 : f32
    %119 = vector.broadcast %cst_54 : f32 to vector<2x32xf32>
    %120 = arith.mulf %119, %118 : vector<2x32xf32>
    %121 = vector.extract_strided_slice %110 {offsets = [0, 64], sizes = [2, 32], strides = [1, 1]} : vector<2x128xf32> to vector<2x32xf32>
    %122 = vector.extract_strided_slice %110 {offsets = [0, 96], sizes = [2, 32], strides = [1, 1]} : vector<2x128xf32> to vector<2x32xf32>
    %cst_55 = arith.constant 1.000000e+00 : f32
    %123 = vector.broadcast %cst_55 : f32 to vector<2x32xf32>
    %124 = arith.addf %122, %123 : vector<2x32xf32>
    %cst_56 = arith.constant 5.000000e-01 : f32
    %125 = vector.broadcast %cst_56 : f32 to vector<2x32xf32>
    %126 = arith.mulf %125, %124 : vector<2x32xf32>
    %127 = arith.mulf %120, %71 : vector<2x32xf32>
    %128 = arith.mulf %115, %121 : vector<2x32xf32>
    %129 = arith.addf %127, %128 : vector<2x32xf32>
    %130 = math.tanh %129 : vector<2x32xf32>
    %131 = arith.mulf %126, %130 : vector<2x32xf32>
    %132 = arith.index_cast %c1_i32 : i32 to index
    %c0_57 = arith.constant 0 : index
    %c0_58 = arith.constant 0 : index
    %133 = vector.load %arg7[%132, %c0_57, %c0_58] : memref<8x2x32xf32, #tpu.memory_space<vmem>>, vector<1x2x32xf32>
    %134 = vector.shape_cast %133 : vector<1x2x32xf32> to vector<2x32xf32>
    %135 = vector.shape_cast %131 : vector<2x32xf32> to vector<1x2x32xf32>
    tpu.vector_store %arg7[%132, %c0_57, %c0_58], %135 {strides = array<i32>} : memref<8x2x32xf32, #tpu.memory_space<vmem>>, vector<1x2x32xf32>,
    %c2_i32 = arith.constant 2 : i32
    %136 = arith.index_cast %c2_i32 : i32 to index
    %c0_59 = arith.constant 0 : index
    %c0_60 = arith.constant 0 : index
    %137 = vector.load %arg1[%136, %c0_59, %c0_60] : memref<8x2x32xf32, #tpu.memory_space<vmem>>, vector<1x2x32xf32>
    %138 = vector.shape_cast %137 : vector<1x2x32xf32> to vector<2x32xf32>
    %cst_61 = arith.constant dense<0.000000e+00> : vector<2x128xf32>
    %139 = tpu.matmul %138, %3, %cst_61 {dimension_numbers = #tpu.dot_dimension_numbers<[1], [0], [0], [1], [0, 0, 1, 1], [], []>} : vector<2x32xf32>, vector<32x128xf32>, vector<2x128xf32> -> vector<2x128xf32>
    %140 = arith.addf %139, %8 : vector<2x128xf32>
    %cst_62 = arith.constant dense<0.000000e+00> : vector<2x128xf32>
    %141 = tpu.matmul %106, %4, %cst_62 {dimension_numbers = #tpu.dot_dimension_numbers<[1], [0], [0], [1], [0, 0, 1, 1], [], []>} : vector<2x32xf32>, vector<32x128xf32>, vector<2x128xf32> -> vector<2x128xf32>
    %142 = arith.addf %140, %141 : vector<2x128xf32>
    %143 = math.tanh %142 : vector<2x128xf32>
    %144 = vector.extract_strided_slice %143 {offsets = [0, 0], sizes = [2, 32], strides = [1, 1]} : vector<2x128xf32> to vector<2x32xf32>
    %cst_63 = arith.constant 1.000000e+00 : f32
    %145 = vector.broadcast %cst_63 : f32 to vector<2x32xf32>
    %146 = arith.addf %144, %145 : vector<2x32xf32>
    %cst_64 = arith.constant 5.000000e-01 : f32
    %147 = vector.broadcast %cst_64 : f32 to vector<2x32xf32>
    %148 = arith.mulf %147, %146 : vector<2x32xf32>
    %149 = vector.extract_strided_slice %143 {offsets = [0, 32], sizes = [2, 32], strides = [1, 1]} : vector<2x128xf32> to vector<2x32xf32>
    %cst_65 = arith.constant 1.000000e+00 : f32
    %150 = vector.broadcast %cst_65 : f32 to vector<2x32xf32>
    %151 = arith.addf %149, %150 : vector<2x32xf32>
    %cst_66 = arith.constant 5.000000e-01 : f32
    %152 = vector.broadcast %cst_66 : f32 to vector<2x32xf32>
    %153 = arith.mulf %152, %151 : vector<2x32xf32>
    %154 = vector.extract_strided_slice %143 {offsets = [0, 64], sizes = [2, 32], strides = [1, 1]} : vector<2x128xf32> to vector<2x32xf32>
    %155 = vector.extract_strided_slice %143 {offsets = [0, 96], sizes = [2, 32], strides = [1, 1]} : vector<2x128xf32> to vector<2x32xf32>
    %cst_67 = arith.constant 1.000000e+00 : f32
    %156 = vector.broadcast %cst_67 : f32 to vector<2x32xf32>
    %157 = arith.addf %155, %156 : vector<2x32xf32>
    %cst_68 = arith.constant 5.000000e-01 : f32
    %158 = vector.broadcast %cst_68 : f32 to vector<2x32xf32>
    %159 = arith.mulf %158, %157 : vector<2x32xf32>
    %160 = arith.mulf %153, %104 : vector<2x32xf32>
    %161 = arith.mulf %148, %154 : vector<2x32xf32>
    %162 = arith.addf %160, %161 : vector<2x32xf32>
    %163 = math.tanh %162 : vector<2x32xf32>
    %164 = arith.mulf %159, %163 : vector<2x32xf32>
    %165 = tpu.concatenate %164, %131 in 1 : vector<2x32xf32>, vector<2x32xf32> -> vector<2x64xf32>
    %cst_69 = arith.constant dense<0.000000e+00> : vector<2x128xf32>
    %166 = tpu.matmul %165, %5, %cst_69 {dimension_numbers = #tpu.dot_dimension_numbers<[1], [0], [0], [1], [0, 0, 1, 1], [], []>} : vector<2x64xf32>, vector<64x128xf32>, vector<2x128xf32> -> vector<2x128xf32>
    %167 = arith.addf %166, %11 : vector<2x128xf32>
    %168 = math.tanh %167 : vector<2x128xf32>
    %169 = vector.extract_strided_slice %168 {offsets = [0, 0], sizes = [2, 32], strides = [1, 1]} : vector<2x128xf32> to vector<2x32xf32>
    %cst_70 = arith.constant 1.000000e+00 : f32
    %170 = vector.broadcast %cst_70 : f32 to vector<2x32xf32>
    %171 = arith.addf %169, %170 : vector<2x32xf32>
    %cst_71 = arith.constant 5.000000e-01 : f32
    %172 = vector.broadcast %cst_71 : f32 to vector<2x32xf32>
    %173 = arith.mulf %172, %171 : vector<2x32xf32>
    %174 = vector.extract_strided_slice %168 {offsets = [0, 32], sizes = [2, 32], strides = [1, 1]} : vector<2x128xf32> to vector<2x32xf32>
    %cst_72 = arith.constant 1.000000e+00 : f32
    %175 = vector.broadcast %cst_72 : f32 to vector<2x32xf32>
    %176 = arith.addf %174, %175 : vector<2x32xf32>
    %cst_73 = arith.constant 5.000000e-01 : f32
    %177 = vector.broadcast %cst_73 : f32 to vector<2x32xf32>
    %178 = arith.mulf %177, %176 : vector<2x32xf32>
    %179 = vector.extract_strided_slice %168 {offsets = [0, 64], sizes = [2, 32], strides = [1, 1]} : vector<2x128xf32> to vector<2x32xf32>
    %180 = vector.extract_strided_slice %168 {offsets = [0, 96], sizes = [2, 32], strides = [1, 1]} : vector<2x128xf32> to vector<2x32xf32>
    %cst_74 = arith.constant 1.000000e+00 : f32
    %181 = vector.broadcast %cst_74 : f32 to vector<2x32xf32>
    %182 = arith.addf %180, %181 : vector<2x32xf32>
    %cst_75 = arith.constant 5.000000e-01 : f32
    %183 = vector.broadcast %cst_75 : f32 to vector<2x32xf32>
    %184 = arith.mulf %183, %182 : vector<2x32xf32>
    %185 = arith.mulf %178, %129 : vector<2x32xf32>
    %186 = arith.mulf %173, %179 : vector<2x32xf32>
    %187 = arith.addf %185, %186 : vector<2x32xf32>
    %188 = math.tanh %187 : vector<2x32xf32>
    %189 = arith.mulf %184, %188 : vector<2x32xf32>
    %190 = arith.index_cast %c2_i32 : i32 to index
    %c0_76 = arith.constant 0 : index
    %c0_77 = arith.constant 0 : index
    %191 = vector.load %arg7[%190, %c0_76, %c0_77] : memref<8x2x32xf32, #tpu.memory_space<vmem>>, vector<1x2x32xf32>
    %192 = vector.shape_cast %191 : vector<1x2x32xf32> to vector<2x32xf32>
    %193 = vector.shape_cast %189 : vector<2x32xf32> to vector<1x2x32xf32>
    tpu.vector_store %arg7[%190, %c0_76, %c0_77], %193 {strides = array<i32>} : memref<8x2x32xf32, #tpu.memory_space<vmem>>, vector<1x2x32xf32>,
    %c3_i32 = arith.constant 3 : i32
    %194 = arith.index_cast %c3_i32 : i32 to index
    %c0_78 = arith.constant 0 : index
    %c0_79 = arith.constant 0 : index
    %195 = vector.load %arg1[%194, %c0_78, %c0_79] : memref<8x2x32xf32, #tpu.memory_space<vmem>>, vector<1x2x32xf32>
    %196 = vector.shape_cast %195 : vector<1x2x32xf32> to vector<2x32xf32>
    %cst_80 = arith.constant dense<0.000000e+00> : vector<2x128xf32>
    %197 = tpu.matmul %196, %3, %cst_80 {dimension_numbers = #tpu.dot_dimension_numbers<[1], [0], [0], [1], [0, 0, 1, 1], [], []>} : vector<2x32xf32>, vector<32x128xf32>, vector<2x128xf32> -> vector<2x128xf32>
    %198 = arith.addf %197, %8 : vector<2x128xf32>
    %cst_81 = arith.constant dense<0.000000e+00> : vector<2x128xf32>
    %199 = tpu.matmul %164, %4, %cst_81 {dimension_numbers = #tpu.dot_dimension_numbers<[1], [0], [0], [1], [0, 0, 1, 1], [], []>} : vector<2x32xf32>, vector<32x128xf32>, vector<2x128xf32> -> vector<2x128xf32>
    %200 = arith.addf %198, %199 : vector<2x128xf32>
    %201 = math.tanh %200 : vector<2x128xf32>
    %202 = vector.extract_strided_slice %201 {offsets = [0, 0], sizes = [2, 32], strides = [1, 1]} : vector<2x128xf32> to vector<2x32xf32>
    %cst_82 = arith.constant 1.000000e+00 : f32
    %203 = vector.broadcast %cst_82 : f32 to vector<2x32xf32>
    %204 = arith.addf %202, %203 : vector<2x32xf32>
    %cst_83 = arith.constant 5.000000e-01 : f32
    %205 = vector.broadcast %cst_83 : f32 to vector<2x32xf32>
    %206 = arith.mulf %205, %204 : vector<2x32xf32>
    %207 = vector.extract_strided_slice %201 {offsets = [0, 32], sizes = [2, 32], strides = [1, 1]} : vector<2x128xf32> to vector<2x32xf32>
    %cst_84 = arith.constant 1.000000e+00 : f32
    %208 = vector.broadcast %cst_84 : f32 to vector<2x32xf32>
    %209 = arith.addf %207, %208 : vector<2x32xf32>
    %cst_85 = arith.constant 5.000000e-01 : f32
    %210 = vector.broadcast %cst_85 : f32 to vector<2x32xf32>
    %211 = arith.mulf %210, %209 : vector<2x32xf32>
    %212 = vector.extract_strided_slice %201 {offsets = [0, 64], sizes = [2, 32], strides = [1, 1]} : vector<2x128xf32> to vector<2x32xf32>
    %213 = vector.extract_strided_slice %201 {offsets = [0, 96], sizes = [2, 32], strides = [1, 1]} : vector<2x128xf32> to vector<2x32xf32>
    %cst_86 = arith.constant 1.000000e+00 : f32
    %214 = vector.broadcast %cst_86 : f32 to vector<2x32xf32>
    %215 = arith.addf %213, %214 : vector<2x32xf32>
    %cst_87 = arith.constant 5.000000e-01 : f32
    %216 = vector.broadcast %cst_87 : f32 to vector<2x32xf32>
    %217 = arith.mulf %216, %215 : vector<2x32xf32>
    %218 = arith.mulf %211, %162 : vector<2x32xf32>
    %219 = arith.mulf %206, %212 : vector<2x32xf32>
    %220 = arith.addf %218, %219 : vector<2x32xf32>
    %221 = math.tanh %220 : vector<2x32xf32>
    %222 = arith.mulf %217, %221 : vector<2x32xf32>
    %223 = tpu.concatenate %222, %189 in 1 : vector<2x32xf32>, vector<2x32xf32> -> vector<2x64xf32>
    %cst_88 = arith.constant dense<0.000000e+00> : vector<2x128xf32>
    %224 = tpu.matmul %223, %5, %cst_88 {dimension_numbers = #tpu.dot_dimension_numbers<[1], [0], [0], [1], [0, 0, 1, 1], [], []>} : vector<2x64xf32>, vector<64x128xf32>, vector<2x128xf32> -> vector<2x128xf32>
    %225 = arith.addf %224, %11 : vector<2x128xf32>
    %226 = math.tanh %225 : vector<2x128xf32>
    %227 = vector.extract_strided_slice %226 {offsets = [0, 0], sizes = [2, 32], strides = [1, 1]} : vector<2x128xf32> to vector<2x32xf32>
    %cst_89 = arith.constant 1.000000e+00 : f32
    %228 = vector.broadcast %cst_89 : f32 to vector<2x32xf32>
    %229 = arith.addf %227, %228 : vector<2x32xf32>
    %cst_90 = arith.constant 5.000000e-01 : f32
    %230 = vector.broadcast %cst_90 : f32 to vector<2x32xf32>
    %231 = arith.mulf %230, %229 : vector<2x32xf32>
    %232 = vector.extract_strided_slice %226 {offsets = [0, 32], sizes = [2, 32], strides = [1, 1]} : vector<2x128xf32> to vector<2x32xf32>
    %cst_91 = arith.constant 1.000000e+00 : f32
    %233 = vector.broadcast %cst_91 : f32 to vector<2x32xf32>
    %234 = arith.addf %232, %233 : vector<2x32xf32>
    %cst_92 = arith.constant 5.000000e-01 : f32
    %235 = vector.broadcast %cst_92 : f32 to vector<2x32xf32>
    %236 = arith.mulf %235, %234 : vector<2x32xf32>
    %237 = vector.extract_strided_slice %226 {offsets = [0, 64], sizes = [2, 32], strides = [1, 1]} : vector<2x128xf32> to vector<2x32xf32>
    %238 = vector.extract_strided_slice %226 {offsets = [0, 96], sizes = [2, 32], strides = [1, 1]} : vector<2x128xf32> to vector<2x32xf32>
    %cst_93 = arith.constant 1.000000e+00 : f32
    %239 = vector.broadcast %cst_93 : f32 to vector<2x32xf32>
    %240 = arith.addf %238, %239 : vector<2x32xf32>
    %cst_94 = arith.constant 5.000000e-01 : f32
    %241 = vector.broadcast %cst_94 : f32 to vector<2x32xf32>
    %242 = arith.mulf %241, %240 : vector<2x32xf32>
    %243 = arith.mulf %236, %187 : vector<2x32xf32>
    %244 = arith.mulf %231, %237 : vector<2x32xf32>
    %245 = arith.addf %243, %244 : vector<2x32xf32>
    %246 = math.tanh %245 : vector<2x32xf32>
    %247 = arith.mulf %242, %246 : vector<2x32xf32>
    %248 = arith.index_cast %c3_i32 : i32 to index
    %c0_95 = arith.constant 0 : index
    %c0_96 = arith.constant 0 : index
    %249 = vector.load %arg7[%248, %c0_95, %c0_96] : memref<8x2x32xf32, #tpu.memory_space<vmem>>, vector<1x2x32xf32>
    %250 = vector.shape_cast %249 : vector<1x2x32xf32> to vector<2x32xf32>
    %251 = vector.shape_cast %247 : vector<2x32xf32> to vector<1x2x32xf32>
    tpu.vector_store %arg7[%248, %c0_95, %c0_96], %251 {strides = array<i32>} : memref<8x2x32xf32, #tpu.memory_space<vmem>>, vector<1x2x32xf32>,
    %c4_i32 = arith.constant 4 : i32
    %252 = arith.index_cast %c4_i32 : i32 to index
    %c0_97 = arith.constant 0 : index
    %c0_98 = arith.constant 0 : index
    %253 = vector.load %arg1[%252, %c0_97, %c0_98] : memref<8x2x32xf32, #tpu.memory_space<vmem>>, vector<1x2x32xf32>
    %254 = vector.shape_cast %253 : vector<1x2x32xf32> to vector<2x32xf32>
    %cst_99 = arith.constant dense<0.000000e+00> : vector<2x128xf32>
    %255 = tpu.matmul %254, %3, %cst_99 {dimension_numbers = #tpu.dot_dimension_numbers<[1], [0], [0], [1], [0, 0, 1, 1], [], []>} : vector<2x32xf32>, vector<32x128xf32>, vector<2x128xf32> -> vector<2x128xf32>
    %256 = arith.addf %255, %8 : vector<2x128xf32>
    %cst_100 = arith.constant dense<0.000000e+00> : vector<2x128xf32>
    %257 = tpu.matmul %222, %4, %cst_100 {dimension_numbers = #tpu.dot_dimension_numbers<[1], [0], [0], [1], [0, 0, 1, 1], [], []>} : vector<2x32xf32>, vector<32x128xf32>, vector<2x128xf32> -> vector<2x128xf32>
    %258 = arith.addf %256, %257 : vector<2x128xf32>
    %259 = math.tanh %258 : vector<2x128xf32>
    %260 = vector.extract_strided_slice %259 {offsets = [0, 0], sizes = [2, 32], strides = [1, 1]} : vector<2x128xf32> to vector<2x32xf32>
    %cst_101 = arith.constant 1.000000e+00 : f32
    %261 = vector.broadcast %cst_101 : f32 to vector<2x32xf32>
    %262 = arith.addf %260, %261 : vector<2x32xf32>
    %cst_102 = arith.constant 5.000000e-01 : f32
    %263 = vector.broadcast %cst_102 : f32 to vector<2x32xf32>
    %264 = arith.mulf %263, %262 : vector<2x32xf32>
    %265 = vector.extract_strided_slice %259 {offsets = [0, 32], sizes = [2, 32], strides = [1, 1]} : vector<2x128xf32> to vector<2x32xf32>
    %cst_103 = arith.constant 1.000000e+00 : f32
    %266 = vector.broadcast %cst_103 : f32 to vector<2x32xf32>
    %267 = arith.addf %265, %266 : vector<2x32xf32>
    %cst_104 = arith.constant 5.000000e-01 : f32
    %268 = vector.broadcast %cst_104 : f32 to vector<2x32xf32>
    %269 = arith.mulf %268, %267 : vector<2x32xf32>
    %270 = vector.extract_strided_slice %259 {offsets = [0, 64], sizes = [2, 32], strides = [1, 1]} : vector<2x128xf32> to vector<2x32xf32>
    %271 = vector.extract_strided_slice %259 {offsets = [0, 96], sizes = [2, 32], strides = [1, 1]} : vector<2x128xf32> to vector<2x32xf32>
    %cst_105 = arith.constant 1.000000e+00 : f32
    %272 = vector.broadcast %cst_105 : f32 to vector<2x32xf32>
    %273 = arith.addf %271, %272 : vector<2x32xf32>
    %cst_106 = arith.constant 5.000000e-01 : f32
    %274 = vector.broadcast %cst_106 : f32 to vector<2x32xf32>
    %275 = arith.mulf %274, %273 : vector<2x32xf32>
    %276 = arith.mulf %269, %220 : vector<2x32xf32>
    %277 = arith.mulf %264, %270 : vector<2x32xf32>
    %278 = arith.addf %276, %277 : vector<2x32xf32>
    %279 = math.tanh %278 : vector<2x32xf32>
    %280 = arith.mulf %275, %279 : vector<2x32xf32>
    %281 = tpu.concatenate %280, %247 in 1 : vector<2x32xf32>, vector<2x32xf32> -> vector<2x64xf32>
    %cst_107 = arith.constant dense<0.000000e+00> : vector<2x128xf32>
    %282 = tpu.matmul %281, %5, %cst_107 {dimension_numbers = #tpu.dot_dimension_numbers<[1], [0], [0], [1], [0, 0, 1, 1], [], []>} : vector<2x64xf32>, vector<64x128xf32>, vector<2x128xf32> -> vector<2x128xf32>
    %283 = arith.addf %282, %11 : vector<2x128xf32>
    %284 = math.tanh %283 : vector<2x128xf32>
    %285 = vector.extract_strided_slice %284 {offsets = [0, 0], sizes = [2, 32], strides = [1, 1]} : vector<2x128xf32> to vector<2x32xf32>
    %cst_108 = arith.constant 1.000000e+00 : f32
    %286 = vector.broadcast %cst_108 : f32 to vector<2x32xf32>
    %287 = arith.addf %285, %286 : vector<2x32xf32>
    %cst_109 = arith.constant 5.000000e-01 : f32
    %288 = vector.broadcast %cst_109 : f32 to vector<2x32xf32>
    %289 = arith.mulf %288, %287 : vector<2x32xf32>
    %290 = vector.extract_strided_slice %284 {offsets = [0, 32], sizes = [2, 32], strides = [1, 1]} : vector<2x128xf32> to vector<2x32xf32>
    %cst_110 = arith.constant 1.000000e+00 : f32
    %291 = vector.broadcast %cst_110 : f32 to vector<2x32xf32>
    %292 = arith.addf %290, %291 : vector<2x32xf32>
    %cst_111 = arith.constant 5.000000e-01 : f32
    %293 = vector.broadcast %cst_111 : f32 to vector<2x32xf32>
    %294 = arith.mulf %293, %292 : vector<2x32xf32>
    %295 = vector.extract_strided_slice %284 {offsets = [0, 64], sizes = [2, 32], strides = [1, 1]} : vector<2x128xf32> to vector<2x32xf32>
    %296 = vector.extract_strided_slice %284 {offsets = [0, 96], sizes = [2, 32], strides = [1, 1]} : vector<2x128xf32> to vector<2x32xf32>
    %cst_112 = arith.constant 1.000000e+00 : f32
    %297 = vector.broadcast %cst_112 : f32 to vector<2x32xf32>
    %298 = arith.addf %296, %297 : vector<2x32xf32>
    %cst_113 = arith.constant 5.000000e-01 : f32
    %299 = vector.broadcast %cst_113 : f32 to vector<2x32xf32>
    %300 = arith.mulf %299, %298 : vector<2x32xf32>
    %301 = arith.mulf %294, %245 : vector<2x32xf32>
    %302 = arith.mulf %289, %295 : vector<2x32xf32>
    %303 = arith.addf %301, %302 : vector<2x32xf32>
    %304 = math.tanh %303 : vector<2x32xf32>
    %305 = arith.mulf %300, %304 : vector<2x32xf32>
    %306 = arith.index_cast %c4_i32 : i32 to index
    %c0_114 = arith.constant 0 : index
    %c0_115 = arith.constant 0 : index
    %307 = vector.load %arg7[%306, %c0_114, %c0_115] : memref<8x2x32xf32, #tpu.memory_space<vmem>>, vector<1x2x32xf32>
    %308 = vector.shape_cast %307 : vector<1x2x32xf32> to vector<2x32xf32>
    %309 = vector.shape_cast %305 : vector<2x32xf32> to vector<1x2x32xf32>
    tpu.vector_store %arg7[%306, %c0_114, %c0_115], %309 {strides = array<i32>} : memref<8x2x32xf32, #tpu.memory_space<vmem>>, vector<1x2x32xf32>,
    %c5_i32 = arith.constant 5 : i32
    %310 = arith.index_cast %c5_i32 : i32 to index
    %c0_116 = arith.constant 0 : index
    %c0_117 = arith.constant 0 : index
    %311 = vector.load %arg1[%310, %c0_116, %c0_117] : memref<8x2x32xf32, #tpu.memory_space<vmem>>, vector<1x2x32xf32>
    %312 = vector.shape_cast %311 : vector<1x2x32xf32> to vector<2x32xf32>
    %cst_118 = arith.constant dense<0.000000e+00> : vector<2x128xf32>
    %313 = tpu.matmul %312, %3, %cst_118 {dimension_numbers = #tpu.dot_dimension_numbers<[1], [0], [0], [1], [0, 0, 1, 1], [], []>} : vector<2x32xf32>, vector<32x128xf32>, vector<2x128xf32> -> vector<2x128xf32>
    %314 = arith.addf %313, %8 : vector<2x128xf32>
    %cst_119 = arith.constant dense<0.000000e+00> : vector<2x128xf32>
    %315 = tpu.matmul %280, %4, %cst_119 {dimension_numbers = #tpu.dot_dimension_numbers<[1], [0], [0], [1], [0, 0, 1, 1], [], []>} : vector<2x32xf32>, vector<32x128xf32>, vector<2x128xf32> -> vector<2x128xf32>
    %316 = arith.addf %314, %315 : vector<2x128xf32>
    %317 = math.tanh %316 : vector<2x128xf32>
    %318 = vector.extract_strided_slice %317 {offsets = [0, 0], sizes = [2, 32], strides = [1, 1]} : vector<2x128xf32> to vector<2x32xf32>
    %cst_120 = arith.constant 1.000000e+00 : f32
    %319 = vector.broadcast %cst_120 : f32 to vector<2x32xf32>
    %320 = arith.addf %318, %319 : vector<2x32xf32>
    %cst_121 = arith.constant 5.000000e-01 : f32
    %321 = vector.broadcast %cst_121 : f32 to vector<2x32xf32>
    %322 = arith.mulf %321, %320 : vector<2x32xf32>
    %323 = vector.extract_strided_slice %317 {offsets = [0, 32], sizes = [2, 32], strides = [1, 1]} : vector<2x128xf32> to vector<2x32xf32>
    %cst_122 = arith.constant 1.000000e+00 : f32
    %324 = vector.broadcast %cst_122 : f32 to vector<2x32xf32>
    %325 = arith.addf %323, %324 : vector<2x32xf32>
    %cst_123 = arith.constant 5.000000e-01 : f32
    %326 = vector.broadcast %cst_123 : f32 to vector<2x32xf32>
    %327 = arith.mulf %326, %325 : vector<2x32xf32>
    %328 = vector.extract_strided_slice %317 {offsets = [0, 64], sizes = [2, 32], strides = [1, 1]} : vector<2x128xf32> to vector<2x32xf32>
    %329 = vector.extract_strided_slice %317 {offsets = [0, 96], sizes = [2, 32], strides = [1, 1]} : vector<2x128xf32> to vector<2x32xf32>
    %cst_124 = arith.constant 1.000000e+00 : f32
    %330 = vector.broadcast %cst_124 : f32 to vector<2x32xf32>
    %331 = arith.addf %329, %330 : vector<2x32xf32>
    %cst_125 = arith.constant 5.000000e-01 : f32
    %332 = vector.broadcast %cst_125 : f32 to vector<2x32xf32>
    %333 = arith.mulf %332, %331 : vector<2x32xf32>
    %334 = arith.mulf %327, %278 : vector<2x32xf32>
    %335 = arith.mulf %322, %328 : vector<2x32xf32>
    %336 = arith.addf %334, %335 : vector<2x32xf32>
    %337 = math.tanh %336 : vector<2x32xf32>
    %338 = arith.mulf %333, %337 : vector<2x32xf32>
    %339 = tpu.concatenate %338, %305 in 1 : vector<2x32xf32>, vector<2x32xf32> -> vector<2x64xf32>
    %cst_126 = arith.constant dense<0.000000e+00> : vector<2x128xf32>
    %340 = tpu.matmul %339, %5, %cst_126 {dimension_numbers = #tpu.dot_dimension_numbers<[1], [0], [0], [1], [0, 0, 1, 1], [], []>} : vector<2x64xf32>, vector<64x128xf32>, vector<2x128xf32> -> vector<2x128xf32>
    %341 = arith.addf %340, %11 : vector<2x128xf32>
    %342 = math.tanh %341 : vector<2x128xf32>
    %343 = vector.extract_strided_slice %342 {offsets = [0, 0], sizes = [2, 32], strides = [1, 1]} : vector<2x128xf32> to vector<2x32xf32>
    %cst_127 = arith.constant 1.000000e+00 : f32
    %344 = vector.broadcast %cst_127 : f32 to vector<2x32xf32>
    %345 = arith.addf %343, %344 : vector<2x32xf32>
    %cst_128 = arith.constant 5.000000e-01 : f32
    %346 = vector.broadcast %cst_128 : f32 to vector<2x32xf32>
    %347 = arith.mulf %346, %345 : vector<2x32xf32>
    %348 = vector.extract_strided_slice %342 {offsets = [0, 32], sizes = [2, 32], strides = [1, 1]} : vector<2x128xf32> to vector<2x32xf32>
    %cst_129 = arith.constant 1.000000e+00 : f32
    %349 = vector.broadcast %cst_129 : f32 to vector<2x32xf32>
    %350 = arith.addf %348, %349 : vector<2x32xf32>
    %cst_130 = arith.constant 5.000000e-01 : f32
    %351 = vector.broadcast %cst_130 : f32 to vector<2x32xf32>
    %352 = arith.mulf %351, %350 : vector<2x32xf32>
    %353 = vector.extract_strided_slice %342 {offsets = [0, 64], sizes = [2, 32], strides = [1, 1]} : vector<2x128xf32> to vector<2x32xf32>
    %354 = vector.extract_strided_slice %342 {offsets = [0, 96], sizes = [2, 32], strides = [1, 1]} : vector<2x128xf32> to vector<2x32xf32>
    %cst_131 = arith.constant 1.000000e+00 : f32
    %355 = vector.broadcast %cst_131 : f32 to vector<2x32xf32>
    %356 = arith.addf %354, %355 : vector<2x32xf32>
    %cst_132 = arith.constant 5.000000e-01 : f32
    %357 = vector.broadcast %cst_132 : f32 to vector<2x32xf32>
    %358 = arith.mulf %357, %356 : vector<2x32xf32>
    %359 = arith.mulf %352, %303 : vector<2x32xf32>
    %360 = arith.mulf %347, %353 : vector<2x32xf32>
    %361 = arith.addf %359, %360 : vector<2x32xf32>
    %362 = math.tanh %361 : vector<2x32xf32>
    %363 = arith.mulf %358, %362 : vector<2x32xf32>
    %364 = arith.index_cast %c5_i32 : i32 to index
    %c0_133 = arith.constant 0 : index
    %c0_134 = arith.constant 0 : index
    %365 = vector.load %arg7[%364, %c0_133, %c0_134] : memref<8x2x32xf32, #tpu.memory_space<vmem>>, vector<1x2x32xf32>
    %366 = vector.shape_cast %365 : vector<1x2x32xf32> to vector<2x32xf32>
    %367 = vector.shape_cast %363 : vector<2x32xf32> to vector<1x2x32xf32>
    tpu.vector_store %arg7[%364, %c0_133, %c0_134], %367 {strides = array<i32>} : memref<8x2x32xf32, #tpu.memory_space<vmem>>, vector<1x2x32xf32>,
    %c6_i32 = arith.constant 6 : i32
    %368 = arith.index_cast %c6_i32 : i32 to index
    %c0_135 = arith.constant 0 : index
    %c0_136 = arith.constant 0 : index
    %369 = vector.load %arg1[%368, %c0_135, %c0_136] : memref<8x2x32xf32, #tpu.memory_space<vmem>>, vector<1x2x32xf32>
    %370 = vector.shape_cast %369 : vector<1x2x32xf32> to vector<2x32xf32>
    %cst_137 = arith.constant dense<0.000000e+00> : vector<2x128xf32>
    %371 = tpu.matmul %370, %3, %cst_137 {dimension_numbers = #tpu.dot_dimension_numbers<[1], [0], [0], [1], [0, 0, 1, 1], [], []>} : vector<2x32xf32>, vector<32x128xf32>, vector<2x128xf32> -> vector<2x128xf32>
    %372 = arith.addf %371, %8 : vector<2x128xf32>
    %cst_138 = arith.constant dense<0.000000e+00> : vector<2x128xf32>
    %373 = tpu.matmul %338, %4, %cst_138 {dimension_numbers = #tpu.dot_dimension_numbers<[1], [0], [0], [1], [0, 0, 1, 1], [], []>} : vector<2x32xf32>, vector<32x128xf32>, vector<2x128xf32> -> vector<2x128xf32>
    %374 = arith.addf %372, %373 : vector<2x128xf32>
    %375 = math.tanh %374 : vector<2x128xf32>
    %376 = vector.extract_strided_slice %375 {offsets = [0, 0], sizes = [2, 32], strides = [1, 1]} : vector<2x128xf32> to vector<2x32xf32>
    %cst_139 = arith.constant 1.000000e+00 : f32
    %377 = vector.broadcast %cst_139 : f32 to vector<2x32xf32>
    %378 = arith.addf %376, %377 : vector<2x32xf32>
    %cst_140 = arith.constant 5.000000e-01 : f32
    %379 = vector.broadcast %cst_140 : f32 to vector<2x32xf32>
    %380 = arith.mulf %379, %378 : vector<2x32xf32>
    %381 = vector.extract_strided_slice %375 {offsets = [0, 32], sizes = [2, 32], strides = [1, 1]} : vector<2x128xf32> to vector<2x32xf32>
    %cst_141 = arith.constant 1.000000e+00 : f32
    %382 = vector.broadcast %cst_141 : f32 to vector<2x32xf32>
    %383 = arith.addf %381, %382 : vector<2x32xf32>
    %cst_142 = arith.constant 5.000000e-01 : f32
    %384 = vector.broadcast %cst_142 : f32 to vector<2x32xf32>
    %385 = arith.mulf %384, %383 : vector<2x32xf32>
    %386 = vector.extract_strided_slice %375 {offsets = [0, 64], sizes = [2, 32], strides = [1, 1]} : vector<2x128xf32> to vector<2x32xf32>
    %387 = vector.extract_strided_slice %375 {offsets = [0, 96], sizes = [2, 32], strides = [1, 1]} : vector<2x128xf32> to vector<2x32xf32>
    %cst_143 = arith.constant 1.000000e+00 : f32
    %388 = vector.broadcast %cst_143 : f32 to vector<2x32xf32>
    %389 = arith.addf %387, %388 : vector<2x32xf32>
    %cst_144 = arith.constant 5.000000e-01 : f32
    %390 = vector.broadcast %cst_144 : f32 to vector<2x32xf32>
    %391 = arith.mulf %390, %389 : vector<2x32xf32>
    %392 = arith.mulf %385, %336 : vector<2x32xf32>
    %393 = arith.mulf %380, %386 : vector<2x32xf32>
    %394 = arith.addf %392, %393 : vector<2x32xf32>
    %395 = math.tanh %394 : vector<2x32xf32>
    %396 = arith.mulf %391, %395 : vector<2x32xf32>
    %397 = tpu.concatenate %396, %363 in 1 : vector<2x32xf32>, vector<2x32xf32> -> vector<2x64xf32>
    %cst_145 = arith.constant dense<0.000000e+00> : vector<2x128xf32>
    %398 = tpu.matmul %397, %5, %cst_145 {dimension_numbers = #tpu.dot_dimension_numbers<[1], [0], [0], [1], [0, 0, 1, 1], [], []>} : vector<2x64xf32>, vector<64x128xf32>, vector<2x128xf32> -> vector<2x128xf32>
    %399 = arith.addf %398, %11 : vector<2x128xf32>
    %400 = math.tanh %399 : vector<2x128xf32>
    %401 = vector.extract_strided_slice %400 {offsets = [0, 0], sizes = [2, 32], strides = [1, 1]} : vector<2x128xf32> to vector<2x32xf32>
    %cst_146 = arith.constant 1.000000e+00 : f32
    %402 = vector.broadcast %cst_146 : f32 to vector<2x32xf32>
    %403 = arith.addf %401, %402 : vector<2x32xf32>
    %cst_147 = arith.constant 5.000000e-01 : f32
    %404 = vector.broadcast %cst_147 : f32 to vector<2x32xf32>
    %405 = arith.mulf %404, %403 : vector<2x32xf32>
    %406 = vector.extract_strided_slice %400 {offsets = [0, 32], sizes = [2, 32], strides = [1, 1]} : vector<2x128xf32> to vector<2x32xf32>
    %cst_148 = arith.constant 1.000000e+00 : f32
    %407 = vector.broadcast %cst_148 : f32 to vector<2x32xf32>
    %408 = arith.addf %406, %407 : vector<2x32xf32>
    %cst_149 = arith.constant 5.000000e-01 : f32
    %409 = vector.broadcast %cst_149 : f32 to vector<2x32xf32>
    %410 = arith.mulf %409, %408 : vector<2x32xf32>
    %411 = vector.extract_strided_slice %400 {offsets = [0, 64], sizes = [2, 32], strides = [1, 1]} : vector<2x128xf32> to vector<2x32xf32>
    %412 = vector.extract_strided_slice %400 {offsets = [0, 96], sizes = [2, 32], strides = [1, 1]} : vector<2x128xf32> to vector<2x32xf32>
    %cst_150 = arith.constant 1.000000e+00 : f32
    %413 = vector.broadcast %cst_150 : f32 to vector<2x32xf32>
    %414 = arith.addf %412, %413 : vector<2x32xf32>
    %cst_151 = arith.constant 5.000000e-01 : f32
    %415 = vector.broadcast %cst_151 : f32 to vector<2x32xf32>
    %416 = arith.mulf %415, %414 : vector<2x32xf32>
    %417 = arith.mulf %410, %361 : vector<2x32xf32>
    %418 = arith.mulf %405, %411 : vector<2x32xf32>
    %419 = arith.addf %417, %418 : vector<2x32xf32>
    %420 = math.tanh %419 : vector<2x32xf32>
    %421 = arith.mulf %416, %420 : vector<2x32xf32>
    %422 = arith.index_cast %c6_i32 : i32 to index
    %c0_152 = arith.constant 0 : index
    %c0_153 = arith.constant 0 : index
    %423 = vector.load %arg7[%422, %c0_152, %c0_153] : memref<8x2x32xf32, #tpu.memory_space<vmem>>, vector<1x2x32xf32>
    %424 = vector.shape_cast %423 : vector<1x2x32xf32> to vector<2x32xf32>
    %425 = vector.shape_cast %421 : vector<2x32xf32> to vector<1x2x32xf32>
    tpu.vector_store %arg7[%422, %c0_152, %c0_153], %425 {strides = array<i32>} : memref<8x2x32xf32, #tpu.memory_space<vmem>>, vector<1x2x32xf32>,
    %c7_i32 = arith.constant 7 : i32
    %426 = arith.index_cast %c7_i32 : i32 to index
    %c0_154 = arith.constant 0 : index
    %c0_155 = arith.constant 0 : index
    %427 = vector.load %arg1[%426, %c0_154, %c0_155] : memref<8x2x32xf32, #tpu.memory_space<vmem>>, vector<1x2x32xf32>
    %428 = vector.shape_cast %427 : vector<1x2x32xf32> to vector<2x32xf32>
    %cst_156 = arith.constant dense<0.000000e+00> : vector<2x128xf32>
    %429 = tpu.matmul %428, %3, %cst_156 {dimension_numbers = #tpu.dot_dimension_numbers<[1], [0], [0], [1], [0, 0, 1, 1], [], []>} : vector<2x32xf32>, vector<32x128xf32>, vector<2x128xf32> -> vector<2x128xf32>
    %430 = arith.addf %429, %8 : vector<2x128xf32>
    %cst_157 = arith.constant dense<0.000000e+00> : vector<2x128xf32>
    %431 = tpu.matmul %396, %4, %cst_157 {dimension_numbers = #tpu.dot_dimension_numbers<[1], [0], [0], [1], [0, 0, 1, 1], [], []>} : vector<2x32xf32>, vector<32x128xf32>, vector<2x128xf32> -> vector<2x128xf32>
    %432 = arith.addf %430, %431 : vector<2x128xf32>
    %433 = math.tanh %432 : vector<2x128xf32>
    %434 = vector.extract_strided_slice %433 {offsets = [0, 0], sizes = [2, 32], strides = [1, 1]} : vector<2x128xf32> to vector<2x32xf32>
    %cst_158 = arith.constant 1.000000e+00 : f32
    %435 = vector.broadcast %cst_158 : f32 to vector<2x32xf32>
    %436 = arith.addf %434, %435 : vector<2x32xf32>
    %cst_159 = arith.constant 5.000000e-01 : f32
    %437 = vector.broadcast %cst_159 : f32 to vector<2x32xf32>
    %438 = arith.mulf %437, %436 : vector<2x32xf32>
    %439 = vector.extract_strided_slice %433 {offsets = [0, 32], sizes = [2, 32], strides = [1, 1]} : vector<2x128xf32> to vector<2x32xf32>
    %cst_160 = arith.constant 1.000000e+00 : f32
    %440 = vector.broadcast %cst_160 : f32 to vector<2x32xf32>
    %441 = arith.addf %439, %440 : vector<2x32xf32>
    %cst_161 = arith.constant 5.000000e-01 : f32
    %442 = vector.broadcast %cst_161 : f32 to vector<2x32xf32>
    %443 = arith.mulf %442, %441 : vector<2x32xf32>
    %444 = vector.extract_strided_slice %433 {offsets = [0, 64], sizes = [2, 32], strides = [1, 1]} : vector<2x128xf32> to vector<2x32xf32>
    %445 = vector.extract_strided_slice %433 {offsets = [0, 96], sizes = [2, 32], strides = [1, 1]} : vector<2x128xf32> to vector<2x32xf32>
    %cst_162 = arith.constant 1.000000e+00 : f32
    %446 = vector.broadcast %cst_162 : f32 to vector<2x32xf32>
    %447 = arith.addf %445, %446 : vector<2x32xf32>
    %cst_163 = arith.constant 5.000000e-01 : f32
    %448 = vector.broadcast %cst_163 : f32 to vector<2x32xf32>
    %449 = arith.mulf %448, %447 : vector<2x32xf32>
    %450 = arith.mulf %443, %394 : vector<2x32xf32>
    %451 = arith.mulf %438, %444 : vector<2x32xf32>
    %452 = arith.addf %450, %451 : vector<2x32xf32>
    %453 = math.tanh %452 : vector<2x32xf32>
    %454 = arith.mulf %449, %453 : vector<2x32xf32>
    %455 = tpu.concatenate %454, %421 in 1 : vector<2x32xf32>, vector<2x32xf32> -> vector<2x64xf32>
    %cst_164 = arith.constant dense<0.000000e+00> : vector<2x128xf32>
    %456 = tpu.matmul %455, %5, %cst_164 {dimension_numbers = #tpu.dot_dimension_numbers<[1], [0], [0], [1], [0, 0, 1, 1], [], []>} : vector<2x64xf32>, vector<64x128xf32>, vector<2x128xf32> -> vector<2x128xf32>
    %457 = arith.addf %456, %11 : vector<2x128xf32>
    %458 = math.tanh %457 : vector<2x128xf32>
    %459 = vector.extract_strided_slice %458 {offsets = [0, 0], sizes = [2, 32], strides = [1, 1]} : vector<2x128xf32> to vector<2x32xf32>
    %cst_165 = arith.constant 1.000000e+00 : f32
    %460 = vector.broadcast %cst_165 : f32 to vector<2x32xf32>
    %461 = arith.addf %459, %460 : vector<2x32xf32>
    %cst_166 = arith.constant 5.000000e-01 : f32
    %462 = vector.broadcast %cst_166 : f32 to vector<2x32xf32>
    %463 = arith.mulf %462, %461 : vector<2x32xf32>
    %464 = vector.extract_strided_slice %458 {offsets = [0, 32], sizes = [2, 32], strides = [1, 1]} : vector<2x128xf32> to vector<2x32xf32>
    %cst_167 = arith.constant 1.000000e+00 : f32
    %465 = vector.broadcast %cst_167 : f32 to vector<2x32xf32>
    %466 = arith.addf %464, %465 : vector<2x32xf32>
    %cst_168 = arith.constant 5.000000e-01 : f32
    %467 = vector.broadcast %cst_168 : f32 to vector<2x32xf32>
    %468 = arith.mulf %467, %466 : vector<2x32xf32>
    %469 = vector.extract_strided_slice %458 {offsets = [0, 64], sizes = [2, 32], strides = [1, 1]} : vector<2x128xf32> to vector<2x32xf32>
    %470 = vector.extract_strided_slice %458 {offsets = [0, 96], sizes = [2, 32], strides = [1, 1]} : vector<2x128xf32> to vector<2x32xf32>
    %cst_169 = arith.constant 1.000000e+00 : f32
    %471 = vector.broadcast %cst_169 : f32 to vector<2x32xf32>
    %472 = arith.addf %470, %471 : vector<2x32xf32>
    %cst_170 = arith.constant 5.000000e-01 : f32
    %473 = vector.broadcast %cst_170 : f32 to vector<2x32xf32>
    %474 = arith.mulf %473, %472 : vector<2x32xf32>
    %475 = arith.mulf %468, %419 : vector<2x32xf32>
    %476 = arith.mulf %463, %469 : vector<2x32xf32>
    %477 = arith.addf %475, %476 : vector<2x32xf32>
    %478 = math.tanh %477 : vector<2x32xf32>
    %479 = arith.mulf %474, %478 : vector<2x32xf32>
    %480 = arith.index_cast %c7_i32 : i32 to index
    %c0_171 = arith.constant 0 : index
    %c0_172 = arith.constant 0 : index
    %481 = vector.load %arg7[%480, %c0_171, %c0_172] : memref<8x2x32xf32, #tpu.memory_space<vmem>>, vector<1x2x32xf32>
    %482 = vector.shape_cast %481 : vector<1x2x32xf32> to vector<2x32xf32>
    %483 = vector.shape_cast %479 : vector<2x32xf32> to vector<1x2x32xf32>
    tpu.vector_store %arg7[%480, %c0_171, %c0_172], %483 {strides = array<i32>} : memref<8x2x32xf32, #tpu.memory_space<vmem>>, vector<1x2x32xf32>,
    %c8_i32 = arith.constant 8 : i32
    %c0_173 = arith.constant 0 : index
    %c0_174 = arith.constant 0 : index
    %c0_175 = arith.constant 0 : index
    %484 = vector.load %arg10[%c0_173, %c0_174, %c0_175] : memref<2x2x32xf32, #tpu.memory_space<vmem>>, vector<1x2x32xf32>
    %485 = vector.shape_cast %484 : vector<1x2x32xf32> to vector<2x32xf32>
    %486 = vector.shape_cast %454 : vector<2x32xf32> to vector<1x2x32xf32>
    tpu.vector_store %arg10[%c0_173, %c0_174, %c0_175], %486 {strides = array<i32>} : memref<2x2x32xf32, #tpu.memory_space<vmem>>, vector<1x2x32xf32>,
    %c1_176 = arith.constant 1 : index
    %c0_177 = arith.constant 0 : index
    %c0_178 = arith.constant 0 : index
    %487 = vector.load %arg10[%c1_176, %c0_177, %c0_178] : memref<2x2x32xf32, #tpu.memory_space<vmem>>, vector<1x2x32xf32>
    %488 = vector.shape_cast %487 : vector<1x2x32xf32> to vector<2x32xf32>
    %489 = vector.shape_cast %479 : vector<2x32xf32> to vector<1x2x32xf32>
    tpu.vector_store %arg10[%c1_176, %c0_177, %c0_178], %489 {strides = array<i32>} : memref<2x2x32xf32, #tpu.memory_space<vmem>>, vector<1x2x32xf32>,
    %c0_179 = arith.constant 0 : index
    %c0_180 = arith.constant 0 : index
    %c0_181 = arith.constant 0 : index
    %490 = vector.load %arg11[%c0_179, %c0_180, %c0_181] : memref<2x2x32xf32, #tpu.memory_space<vmem>>, vector<1x2x32xf32>
    %491 = vector.shape_cast %490 : vector<1x2x32xf32> to vector<2x32xf32>
    %492 = vector.shape_cast %452 : vector<2x32xf32> to vector<1x2x32xf32>
    tpu.vector_store %arg11[%c0_179, %c0_180, %c0_181], %492 {strides = array<i32>} : memref<2x2x32xf32, #tpu.memory_space<vmem>>, vector<1x2x32xf32>,
    %c1_182 = arith.constant 1 : index
    %c0_183 = arith.constant 0 : index
    %c0_184 = arith.constant 0 : index
    %493 = vector.load %arg11[%c1_182, %c0_183, %c0_184] : memref<2x2x32xf32, #tpu.memory_space<vmem>>, vector<1x2x32xf32>
    %494 = vector.shape_cast %493 : vector<1x2x32xf32> to vector<2x32xf32>
    %495 = vector.shape_cast %477 : vector<2x32xf32> to vector<1x2x32xf32>
    tpu.vector_store %arg11[%c1_182, %c0_183, %c0_184], %495 {strides = array<i32>} : memref<2x2x32xf32, #tpu.memory_space<vmem>>, vector<1x2x32xf32>,
    %c0_i32_185 = arith.constant 0 : i32
    %496 = arith.cmpi eq, %arg0, %c0_i32_185 : i32
    %497 = arith.extui %496 : i1 to i32
    %c0_i32_186 = arith.constant 0 : i32
    %498 = arith.cmpi ne, %497, %c0_i32_186 : i32
    scf.if %498 {
      %c0_187 = arith.constant 0 : index
      %c0_188 = arith.constant 0 : index
      %c0_189 = arith.constant 0 : index
      %499 = vector.load %arg8[%c0_187, %c0_188, %c0_189] : memref<2x2x32xf32, #tpu.memory_space<vmem>>, vector<1x2x32xf32>
      %500 = vector.shape_cast %499 : vector<1x2x32xf32> to vector<2x32xf32>
      %501 = vector.shape_cast %454 : vector<2x32xf32> to vector<1x2x32xf32>
      tpu.vector_store %arg8[%c0_187, %c0_188, %c0_189], %501 {strides = array<i32>} : memref<2x2x32xf32, #tpu.memory_space<vmem>>, vector<1x2x32xf32>,
      %c1_190 = arith.constant 1 : index
      %c0_191 = arith.constant 0 : index
      %c0_192 = arith.constant 0 : index
      %502 = vector.load %arg8[%c1_190, %c0_191, %c0_192] : memref<2x2x32xf32, #tpu.memory_space<vmem>>, vector<1x2x32xf32>
      %503 = vector.shape_cast %502 : vector<1x2x32xf32> to vector<2x32xf32>
      %504 = vector.shape_cast %479 : vector<2x32xf32> to vector<1x2x32xf32>
      tpu.vector_store %arg8[%c1_190, %c0_191, %c0_192], %504 {strides = array<i32>} : memref<2x2x32xf32, #tpu.memory_space<vmem>>, vector<1x2x32xf32>,
      %c0_193 = arith.constant 0 : index
      %c0_194 = arith.constant 0 : index
      %c0_195 = arith.constant 0 : index
      %505 = vector.load %arg9[%c0_193, %c0_194, %c0_195] : memref<2x2x32xf32, #tpu.memory_space<vmem>>, vector<1x2x32xf32>
      %506 = vector.shape_cast %505 : vector<1x2x32xf32> to vector<2x32xf32>
      %507 = vector.shape_cast %452 : vector<2x32xf32> to vector<1x2x32xf32>
      tpu.vector_store %arg9[%c0_193, %c0_194, %c0_195], %507 {strides = array<i32>} : memref<2x2x32xf32, #tpu.memory_space<vmem>>, vector<1x2x32xf32>,
      %c1_196 = arith.constant 1 : index
      %c0_197 = arith.constant 0 : index
      %c0_198 = arith.constant 0 : index
      %508 = vector.load %arg9[%c1_196, %c0_197, %c0_198] : memref<2x2x32xf32, #tpu.memory_space<vmem>>, vector<1x2x32xf32>
      %509 = vector.shape_cast %508 : vector<1x2x32xf32> to vector<2x32xf32>
      %510 = vector.shape_cast %477 : vector<2x32xf32> to vector<1x2x32xf32>
      tpu.vector_store %arg9[%c1_196, %c0_197, %c0_198], %510 {strides = array<i32>} : memref<2x2x32xf32, #tpu.memory_space<vmem>>, vector<1x2x32xf32>,
    } else {
    }
    return
  }
  func.func @transform_0(%arg0: i32) -> (i32, i32, i32) {
    %c0_i32 = arith.constant 0 : i32
    %c0_i32_0 = arith.constant 0 : i32
    %c0_i32_1 = arith.constant 0 : i32
    return %arg0, %c0_i32, %c0_i32_0 : i32, i32, i32
  }
  func.func @transform_1(%arg0: i32) -> (i32, i32) {
    %c0_i32 = arith.constant 0 : i32
    %c0_i32_0 = arith.constant 0 : i32
    %c0_i32_1 = arith.constant 0 : i32
    return %c0_i32, %c0_i32_0 : i32, i32
  }
  func.func @transform_2(%arg0: i32) -> (i32, i32) {
    %c0_i32 = arith.constant 0 : i32
    %c0_i32_0 = arith.constant 0 : i32
    %c0_i32_1 = arith.constant 0 : i32
    return %c0_i32, %c0_i32_0 : i32, i32
  }
  func.func @transform_3(%arg0: i32) -> (i32, i32) {
    %c0_i32 = arith.constant 0 : i32
    %c0_i32_0 = arith.constant 0 : i32
    %c0_i32_1 = arith.constant 0 : i32
    return %c0_i32, %c0_i32_0 : i32, i32
  }
  func.func @transform_4(%arg0: i32) -> (i32, i32) {
    %c0_i32 = arith.constant 0 : i32
    %c0_i32_0 = arith.constant 0 : i32
    %c0_i32_1 = arith.constant 0 : i32
    return %c0_i32, %c0_i32_0 : i32, i32
  }
  func.func @transform_5(%arg0: i32) -> (i32, i32) {
    %c0_i32 = arith.constant 0 : i32
    %c0_i32_0 = arith.constant 0 : i32
    %c0_i32_1 = arith.constant 0 : i32
    return %c0_i32, %c0_i32_0 : i32, i32
  }
  func.func @transform_6(%arg0: i32) -> (i32, i32, i32) {
    %c0_i32 = arith.constant 0 : i32
    %c0_i32_0 = arith.constant 0 : i32
    %c0_i32_1 = arith.constant 0 : i32
    return %arg0, %c0_i32, %c0_i32_0 : i32, i32, i32
  }
  func.func @transform_7(%arg0: i32) -> (i32, i32, i32) {
    %c0_i32 = arith.constant 0 : i32
    %c0_i32_0 = arith.constant 0 : i32
    %c0_i32_1 = arith.constant 0 : i32
    %c0_i32_2 = arith.constant 0 : i32
    return %c0_i32, %c0_i32_0, %c0_i32_1 : i32, i32, i32
  }
  func.func @transform_8(%arg0: i32) -> (i32, i32, i32) {
    %c0_i32 = arith.constant 0 : i32
    %c0_i32_0 = arith.constant 0 : i32
    %c0_i32_1 = arith.constant 0 : i32
    %c0_i32_2 = arith.constant 0 : i32
    return %c0_i32, %c0_i32_0, %c0_i32_1 : i32, i32, i32
  }
}

</mosaic_0001>

<llo_original>
// kernel: lstm_basic_forward.3
$region0: #{lstm_basic_forward.3}
  #allocation0 [shape = 'u32[]', space=smem, size = 0x4, offset = 0x4, fixed_abs, tag = 'smem constant byte address 0x4 - core index']
  #allocation1 [shape = 'u32[144,128]{1,0:T(1,128)}', space=vmem, size = 0x12000, scoped, tag = 'internal scratch']
  %s0 = inlined_call_operand.vmem [shape: f32[8,2,32], index: 0, kind: input, shape index: {}]
  %s1 = inlined_call_operand.vmem [shape: f32[32,64], index: 1, kind: input, shape index: {}]
  %s2 = inlined_call_operand.vmem [shape: f32[1,64], index: 2, kind: input, shape index: {}]
  %s3 = inlined_call_operand.hbm [shape: f32[2,8,64], index: 3, kind: output, shape index: {}]
  %s4 = sld [smem:[#allocation0]]
  $region22: #{lstm_basic_forward.3} parent=0
    _
  %s6 = ssub.s32 1, %s4
  %s7 = scalar_select 0, %s6, %s4
  $region1: #{lstm_basic_forward.3} parent=0
    #allocation2 [shape = 'u8[8192]{0}', space=vmem, size = 0x2000, scoped, tag = 'output window, operand 0, single buffered']
    #allocation3 [shape = 's32[1]{0}', space=sflag, size = 0x4, scoped, tag = 'scoped memory for lstm_basic_forward.3']
    %8 = vsyncpa [#allocation3], 0
    // Predicated region
    $region2: #{lstm_basic_forward.3} parent=1 // pred_check
      _
    $region3: #{lstm_basic_forward.3} parent=1 // pred_check_branch
      %10 = sbr.rel (0) target = $region5
    $region4: #{lstm_basic_forward.3} parent=1 // pred_region
      _
    $region5: #{lstm_basic_forward.3} parent=1 // pred_fallthru
      _
    // Predicated region
    $region6: #{lstm_basic_forward.3} parent=1 // pred_check
      _
    $region7: #{lstm_basic_forward.3} parent=1 // pred_check_branch
      %12 = sbr.rel (0) target = $region9
    $region8: #{lstm_basic_forward.3} parent=1 // pred_region
      _
    $region9: #{lstm_basic_forward.3} parent=1 // pred_fallthru
      _
    // Predicated region
    $region10: #{lstm_basic_forward.3} parent=1 // pred_check
      _
    $region11: #{lstm_basic_forward.3} parent=1 // pred_check_branch
      %14 = sbr.rel (0) target = $region13
    $region12: #{lstm_basic_forward.3} parent=1 // pred_region
      _
    $region13: #{lstm_basic_forward.3} parent=1 // pred_fallthru
      _
    %v15 = vld [vmem:[%s0] sm:$0x3]
    %v16 = vld [vmem:[%s0 + $0x2] sm:$0x3]
    %v17 = vld [vmem:[%s0 + $0x4] sm:$0x3]
    %v18 = vld [vmem:[%s0 + $0x6] sm:$0x3]
    %v19 = vld [vmem:[%s0 + $0x8] sm:$0x3]
    %v20 = vld [vmem:[%s0 + $0xa] sm:$0x3]
    %v21 = vld [vmem:[%s0 + $0xc] sm:$0x3]
    %v22 = vld [vmem:[%s0 + $0xe] sm:$0x3]
    %v23 = vld [vmem:[%s1] sm:$0xff]
    %v24 = vld [vmem:[%s1 + $0x8] sm:$0xff]
    %v25 = vld [vmem:[%s1 + $0x10] sm:$0xff]
    %v26 = vld [vmem:[%s1 + $0x18] sm:$0xff]
    %v27 = vld [vmem:[%s2] sm:$0x1]
    %v29 = vlaneseq
    %v30 = vshrl.u32 %v29, 7
    %v31 = vsub.s32 0, %v30
    %v32 = vrot.slane %v27, %v31
    %v42 = vrot.slane %v16, 7
    %vm43 = vcmask 1041409
    %v44 = vsel %vm43, %v42, %v15
    %v45 = vrot.slane %v17, 6
    %vm46 = vcmask 1042434
    %v47 = vsel %vm46, %v45, %v44
    %v48 = vrot.slane %v18, 5
    %vm49 = vcmask 1043459
    %v50 = vsel %vm49, %v48, %v47
    %v51 = vrot.slane %v19, 4
    %vm52 = vcmask 1044484
    %v53 = vsel %vm52, %v51, %v50
    %v54 = vrot.slane %v20, 3
    %vm55 = vcmask 1045509
    %v56 = vsel %vm55, %v54, %v53
    %v57 = vrot.slane %v21, 2
    %vm58 = vcmask 1046534
    %v59 = vsel %vm58, %v57, %v56
    %v60 = vrot.slane %v22, 1
    %vm61 = vcmask 1047559
    %v62 = vsel %vm61, %v60, %v59
    %vm63 = vcmask 261120
    %v64 = vsel %vm63, %v62, 0
    %66 = vmatprep.subr.mxu0 0.0
    %67 = vmatpush1.msra.mxu0 %v23
    %68 = vmatprep.subr.mxu0 0.0
    %69 = vmatpush1.msra.mxu0 %v24
    %70 = vmatprep.subr.mxu0 0.0
    %71 = vmatpush1.msra.mxu0 %v25
    %72 = vmatprep.subr.mxu0 0.0
    %73 = vmatpush1.msra.mxu0 %v26
    %74 = vmatprep.subr.mxu0 0.0
    %75 = vmatpush1.msra.mxu0 0.0
    %76 = vmatprep.subr.mxu0 0.0
    %77 = vmatpush1.msra.mxu0 0.0
    %78 = vmatprep.subr.mxu0 0.0
    %79 = vmatpush1.msra.mxu0 0.0
    %80 = vmatprep.subr.mxu0 0.0
    %81 = vmatpush1.msra.mxu0 0.0
    %82 = vmatprep.subr.mxu0 0.0
    %83 = vmatpush1.msra.mxu0 0.0
    %84 = vmatprep.subr.mxu0 0.0
    %85 = vmatpush1.msra.mxu0 0.0
    %86 = vmatprep.subr.mxu0 0.0
    %87 = vmatpush1.msra.mxu0 0.0
    %88 = vmatprep.subr.mxu0 0.0
    %89 = vmatpush1.msra.mxu0 0.0
    %90 = vmatprep.subr.mxu0 0.0
    %91 = vmatpush1.msra.mxu0 0.0
    %92 = vmatprep.subr.mxu0 0.0
    %93 = vmatpush1.msra.mxu0 0.0
    %94 = vmatprep.subr.mxu0 0.0
    %95 = vmatpush1.msra.mxu0 0.0
    %96 = vmatprep.subr.mxu0 0.0
    %97 = vmatpush1.msra.mxu0 0.0
    %98 = vmatprep.subr.mxu0 0.0
    %99 = vmatpush1.msra.mxu0 0.0
    %100 = vmatprep.subr.mxu0 0.0
    %101 = vmatpush1.msra.mxu0 0.0
    %102 = vmatprep.subr.mxu0 0.0
    %103 = vmatpush1.msra.mxu0 0.0
    %104 = vmatprep.subr.mxu0 0.0
    %105 = vmatpush1.msra.mxu0 0.0
    %106 = vmatprep.subr.mxu0 0.0
    %107 = vmatpush1.msra.mxu0 0.0
    %108 = vmatprep.subr.mxu0 0.0
    %109 = vmatpush1.msra.mxu0 0.0
    %110 = vmatprep.subr.mxu0 0.0
    %111 = vmatpush1.msra.mxu0 0.0
    %112 = vmatprep.subr.mxu0 0.0
    %113 = vmatpush1.msra.mxu0 0.0
    %114 = vmatprep.subr.mxu0 0.0
    %115 = vmatpush1.msra.mxu0 0.0
    %116 = vmatprep.subr.mxu0 0.0
    %117 = vmatpush1.msra.mxu0 0.0
    %118 = vmatprep.subr.mxu0 0.0
    %119 = vmatpush1.msra.mxu0 0.0
    %120 = vmatprep.subr.mxu0 0.0
    %121 = vmatpush1.msra.mxu0 0.0
    %122 = vmatprep.subr.mxu0 0.0
    %123 = vmatpush1.msra.mxu0 0.0
    %124 = vmatprep.subr.mxu0 0.0
    %125 = vmatpush1.msra.mxu0 0.0
    %126 = vmatprep.subr.mxu0 0.0
    %127 = vmatpush1.msra.mxu0 0.0
    %128 = vmatprep.subr.mxu0 0.0
    %129 = vmatpush1.msra.mxu0 0.0
    %130 = vmatprep.mubr.f32.mxu0 0.0
    %131 = vmatmul.mubr.f32.gmra.mrb[0].mxu0 %v64
    %v132 = vpop.f32.mrb[0].mxu0
    %v133 = vadd.f32 %v32, %v132
    %v134 = vpop.f32.mrb[0].mxu0
    %135 = vdwg.mxu0
    %vm136 = vcmask 523264
    %137 = vst.msk [vmem:[#allocation2] sm:$0xff] %vm136, %v133
    %v138 = vrot.slane %v15, 1
    %v139 = vsel %vm43, %v16, %v138
    %v140 = vrot.slane %v17, 7
    %v141 = vsel %vm46, %v140, %v139
    %v142 = vrot.slane %v18, 6
    %v143 = vsel %vm49, %v142, %v141
    %v144 = vrot.slane %v19, 5
    %v145 = vsel %vm52, %v144, %v143
    %v146 = vrot.slane %v20, 4
    %v147 = vsel %vm55, %v146, %v145
    %v148 = vrot.slane %v21, 3
    %v149 = vsel %vm58, %v148, %v147
    %v150 = vrot.slane %v22, 2
    %v151 = vsel %vm61, %v150, %v149
    %v152 = vsel %vm63, %v151, 0
    %154 = vmatprep.subr.mxu0 0.0
    %155 = vmatpush1.msra.mxu0 %v23
    %156 = vmatprep.subr.mxu0 0.0
    %157 = vmatpush1.msra.mxu0 %v24
    %158 = vmatprep.subr.mxu0 0.0
    %159 = vmatpush1.msra.mxu0 %v25
    %160 = vmatprep.subr.mxu0 0.0
    %161 = vmatpush1.msra.mxu0 %v26
    %162 = vmatprep.subr.mxu0 0.0
    %163 = vmatpush1.msra.mxu0 0.0
    %164 = vmatprep.subr.mxu0 0.0
    %165 = vmatpush1.msra.mxu0 0.0
    %166 = vmatprep.subr.mxu0 0.0
    %167 = vmatpush1.msra.mxu0 0.0
    %168 = vmatprep.subr.mxu0 0.0
    %169 = vmatpush1.msra.mxu0 0.0
    %170 = vmatprep.subr.mxu0 0.0
    %171 = vmatpush1.msra.mxu0 0.0
    %172 = vmatprep.subr.mxu0 0.0
    %173 = vmatpush1.msra.mxu0 0.0
    %174 = vmatprep.subr.mxu0 0.0
    %175 = vmatpush1.msra.mxu0 0.0
    %176 = vmatprep.subr.mxu0 0.0
    %177 = vmatpush1.msra.mxu0 0.0
    %178 = vmatprep.subr.mxu0 0.0
    %179 = vmatpush1.msra.mxu0 0.0
    %180 = vmatprep.subr.mxu0 0.0
    %181 = vmatpush1.msra.mxu0 0.0
    %182 = vmatprep.subr.mxu0 0.0
    %183 = vmatpush1.msra.mxu0 0.0
    %184 = vmatprep.subr.mxu0 0.0
    %185 = vmatpush1.msra.mxu0 0.0
    %186 = vmatprep.subr.mxu0 0.0
    %187 = vmatpush1.msra.mxu0 0.0
    %188 = vmatprep.subr.mxu0 0.0
    %189 = vmatpush1.msra.mxu0 0.0
    %190 = vmatprep.subr.mxu0 0.0
    %191 = vmatpush1.msra.mxu0 0.0
    %192 = vmatprep.subr.mxu0 0.0
    %193 = vmatpush1.msra.mxu0 0.0
    %194 = vmatprep.subr.mxu0 0.0
    %195 = vmatpush1.msra.mxu0 0.0
    %196 = vmatprep.subr.mxu0 0.0
    %197 = vmatpush1.msra.mxu0 0.0
    %198 = vmatprep.subr.mxu0 0.0
    %199 = vmatpush1.msra.mxu0 0.0
    %200 = vmatprep.subr.mxu0 0.0
    %201 = vmatpush1.msra.mxu0 0.0
    %202 = vmatprep.subr.mxu0 0.0
    %203 = vmatpush1.msra.mxu0 0.0
    %204 = vmatprep.subr.mxu0 0.0
    %205 = vmatpush1.msra.mxu0 0.0
    %206 = vmatprep.subr.mxu0 0.0
    %207 = vmatpush1.msra.mxu0 0.0
    %208 = vmatprep.subr.mxu0 0.0
    %209 = vmatpush1.msra.mxu0 0.0
    %210 = vmatprep.subr.mxu0 0.0
    %211 = vmatpush1.msra.mxu0 0.0
    %212 = vmatprep.subr.mxu0 0.0
    %213 = vmatpush1.msra.mxu0 0.0
    %214 = vmatprep.subr.mxu0 0.0
    %215 = vmatpush1.msra.mxu0 0.0
    %216 = vmatprep.subr.mxu0 0.0
    %217 = vmatpush1.msra.mxu0 0.0
    %218 = vmatprep.mubr.f32.mxu0 0.0
    %219 = vmatmul.mubr.f32.gmra.mrb[0].mxu0 %v152
    %v220 = vpop.f32.mrb[0].mxu0
    %v221 = vadd.f32 %v32, %v220
    %v222 = vpop.f32.mrb[0].mxu0
    %223 = vdwg.mxu0
    %s224 = scalar_lea.vmem [#allocation2], 8
    %225 = vst.msk [vmem:[%s224] sm:$0xff] %vm136, %v221
    // Predicated region
    $region14: #{lstm_basic_forward.3} parent=1 // pred_check
      _
    $region15: #{lstm_basic_forward.3} parent=1 // pred_check_branch
      %227 = sbr.rel (0) target = $region17
    $region16: #{lstm_basic_forward.3} parent=1 // pred_region
      %s229 = ssub.s32 256, 256
      %230 = vsyncadd [#allocation3], %s229
      %s231 = sshll.u32 [#allocation2], 4
      %s232 = int_to_ptr.vmem [resolvable:$true] %s231
      %237 = dma.vmem_to_hbm [thread:$0]  %s232, 256, %s3, [#allocation3], 128, 128, 8
    $region17: #{lstm_basic_forward.3} parent=1 // pred_fallthru
      _
    // Predicated region
    $region18: #{lstm_basic_forward.3} parent=1 // pred_check
      _
    $region19: #{lstm_basic_forward.3} parent=1 // pred_check_branch
      %239 = sbr.rel (0) target = $region21
    $region20: #{lstm_basic_forward.3} parent=1 // pred_region
      %240 = dma.done [#allocation3], 256
    $region21: #{lstm_basic_forward.3} parent=1 // pred_fallthru
      _
    %241 = vsyncpa [#allocation3], 1

// kernel: lstm_basic_forward.2
$region0: #{lstm_basic_forward.2}
  #allocation0 [shape = 'u32[]', space=smem, size = 0x4, offset = 0x4, fixed_abs, tag = 'smem constant byte address 0x4 - core index']
  #allocation1 [shape = 'u32[144,128]{1,0:T(1,128)}', space=vmem, size = 0x12000, scoped, tag = 'internal scratch']
  #allocation2 [shape = 'f32[2,2,32]{2,1,0:T(2,128)}', space=vmem, size = 0x800, scoped, tag = 'scratch operand']
  #allocation3 [shape = 'f32[2,2,32]{2,1,0:T(2,128)}', space=vmem, size = 0x800, scoped, tag = 'scratch operand']
  %s0 = inlined_call_operand.vmem [shape: f32[8,2,32], index: 0, kind: input, shape index: {}]
  %s1 = inlined_call_operand.vmem [shape: f32[32,128], index: 1, kind: input, shape index: {}]
  %s2 = inlined_call_operand.vmem [shape: f32[32,128], index: 2, kind: input, shape index: {}]
  %s3 = inlined_call_operand.vmem [shape: f32[64,128], index: 3, kind: input, shape index: {}]
  %s4 = inlined_call_operand.vmem [shape: f32[1,128], index: 4, kind: input, shape index: {}]
  %s5 = inlined_call_operand.vmem [shape: f32[1,128], index: 5, kind: input, shape index: {}]
  %s6 = inlined_call_operand.vmem [shape: f32[8,2,32], index: 6, kind: output, shape index: {0}]
  %s7 = inlined_call_operand.hbm [shape: f32[2,2,32], index: 7, kind: output, shape index: {1}]
  %s8 = inlined_call_operand.hbm [shape: f32[2,2,32], index: 8, kind: output, shape index: {2}]
  %9 = xla_tuple %s6, %s7, %s8
  %s10 = sld [smem:[#allocation0]]
  $region58: #{lstm_basic_forward.2} parent=0
    _
  %s12 = ssub.s32 1, %s10
  %s13 = scalar_select 0, %s12, %s10
  $region1: #{lstm_basic_forward.2} parent=0
    #allocation4 [shape = 'u8[2048]{0}', space=vmem, size = 0x800, scoped, tag = 'output window, operand 1, single buffered']
    #allocation5 [shape = 's32[1]{0}', space=sflag, size = 0x4, scoped, tag = 'scoped memory for lstm_basic_forward.2']
    #allocation6 [shape = 'u8[2048]{0}', space=vmem, size = 0x800, scoped, tag = 'output window, operand 2, single buffered']
    #allocation7 [shape = 's32[1]{0}', space=sflag, size = 0x4, scoped, tag = 'scoped memory for lstm_basic_forward.2']
    %14 = vsyncpa [#allocation5], 0
    %15 = vsyncpa [#allocation7], 0
    // Predicated region
    $region2: #{lstm_basic_forward.2} parent=1 // pred_check
      _
    $region3: #{lstm_basic_forward.2} parent=1 // pred_check_branch
      %17 = sbr.rel (0) target = $region5
    $region4: #{lstm_basic_forward.2} parent=1 // pred_region
      _
    $region5: #{lstm_basic_forward.2} parent=1 // pred_fallthru
      _
    // Predicated region
    $region6: #{lstm_basic_forward.2} parent=1 // pred_check
      _
    $region7: #{lstm_basic_forward.2} parent=1 // pred_check_branch
      %19 = sbr.rel (0) target = $region9
    $region8: #{lstm_basic_forward.2} parent=1 // pred_region
      _
    $region9: #{lstm_basic_forward.2} parent=1 // pred_fallthru
      _
    // Predicated region
    $region10: #{lstm_basic_forward.2} parent=1 // pred_check
      _
    $region11: #{lstm_basic_forward.2} parent=1 // pred_check_branch
      %21 = sbr.rel (0) target = $region13
    $region12: #{lstm_basic_forward.2} parent=1 // pred_region
      _
    $region13: #{lstm_basic_forward.2} parent=1 // pred_fallthru
      _
    // Predicated region
    $region14: #{lstm_basic_forward.2} parent=1 // pred_check
      _
    $region15: #{lstm_basic_forward.2} parent=1 // pred_check_branch
      %23 = sbr.rel (0) target = $region17
    $region16: #{lstm_basic_forward.2} parent=1 // pred_region
      _
    $region17: #{lstm_basic_forward.2} parent=1 // pred_fallthru
      _
    // Predicated region
    $region18: #{lstm_basic_forward.2} parent=1 // pred_check
      _
    $region19: #{lstm_basic_forward.2} parent=1 // pred_check_branch
      %25 = sbr.rel (0) target = $region21
    $region20: #{lstm_basic_forward.2} parent=1 // pred_region
      _
    $region21: #{lstm_basic_forward.2} parent=1 // pred_fallthru
      _
    // Predicated region
    $region22: #{lstm_basic_forward.2} parent=1 // pred_check
      _
    $region23: #{lstm_basic_forward.2} parent=1 // pred_check_branch
      %27 = sbr.rel (0) target = $region25
    $region24: #{lstm_basic_forward.2} parent=1 // pred_region
      _
    $region25: #{lstm_basic_forward.2} parent=1 // pred_fallthru
      _
    %p28 = scmp.eq.s32.totalorder 0, 0
    // Predicated region
    $region26: #{lstm_basic_forward.2} parent=1 // pred_check
      %p29 = pneg %p28
    $region27: #{lstm_basic_forward.2} parent=1 // pred_check_branch
      %31 = sbr.rel (%p29) target = $region29
    $region28: #{lstm_basic_forward.2} parent=1 // pred_region
      %vm32 = vcmask 254976
      %33 = vst.msk [vmem:[#allocation2] sm:$0x3] %vm32, 0.0
      %34 = vst.msk [vmem:[#allocation2 + $0x2] sm:$0x3] %vm32, 0.0
      %35 = vst.msk [vmem:[#allocation3] sm:$0x3] %vm32, 0.0
      %36 = vst.msk [vmem:[#allocation3 + $0x2] sm:$0x3] %vm32, 0.0
    $region29: #{lstm_basic_forward.2} parent=1 // pred_fallthru
      _
    %v37 = vld [vmem:[%s1] sm:$0xff]
    %v38 = vld [vmem:[%s1 + $0x8] sm:$0xff]
    %v39 = vld [vmem:[%s1 + $0x10] sm:$0xff]
    %v40 = vld [vmem:[%s1 + $0x18] sm:$0xff]
    %v41 = vld [vmem:[%s2] sm:$0xff]
    %v42 = vld [vmem:[%s2 + $0x8] sm:$0xff]
    %v43 = vld [vmem:[%s2 + $0x10] sm:$0xff]
    %v44 = vld [vmem:[%s2 + $0x18] sm:$0xff]
    %v45 = vld [vmem:[%s3] sm:$0xff]
    %v46 = vld [vmem:[%s3 + $0x8] sm:$0xff]
    %v47 = vld [vmem:[%s3 + $0x10] sm:$0xff]
    %v48 = vld [vmem:[%s3 + $0x18] sm:$0xff]
    %v49 = vld [vmem:[%s3 + $0x20] sm:$0xff]
    %v50 = vld [vmem:[%s3 + $0x28] sm:$0xff]
    %v51 = vld [vmem:[%s3 + $0x30] sm:$0xff]
    %v52 = vld [vmem:[%s3 + $0x38] sm:$0xff]
    %v53 = vld [vmem:[%s4] sm:$0x1]
    %v55 = vlaneseq
    %v56 = vshrl.u32 %v55, 7
    %v57 = vsub.s32 0, %v56
    %v58 = vrot.slane %v53, %v57
    %v60 = vld [vmem:[%s5] sm:$0x1]
    %v62 = vlaneseq
    %v63 = vshrl.u32 %v62, 7
    %v64 = vsub.s32 0, %v63
    %v65 = vrot.slane %v60, %v64
    %v67 = vld [vmem:[#allocation2] sm:$0x3]
    %v68 = vld [vmem:[#allocation3] sm:$0x3]
    %s69 = scalar_lea.vmem [#allocation2], 2
    %v70 = vld [vmem:[%s69] sm:$0x3]
    %s71 = scalar_lea.vmem [#allocation3], 2
    %v72 = vld [vmem:[%s71] sm:$0x3]
    %v73 = vld [vmem:[%s0] sm:$0x3]
    %vm74 = vcmask 261120
    %v76 = vsel %vm74, %v73, 0
    %78 = vmatprep.subr.mxu0 0.0
    %79 = vmatpush1.msra.mxu0 %v37
    %80 = vmatprep.subr.mxu0 0.0
    %81 = vmatpush1.msra.mxu0 %v38
    %82 = vmatprep.subr.mxu0 0.0
    %83 = vmatpush1.msra.mxu0 %v39
    %84 = vmatprep.subr.mxu0 0.0
    %85 = vmatpush1.msra.mxu0 %v40
    %86 = vmatprep.subr.mxu0 0.0
    %87 = vmatpush1.msra.mxu0 0.0
    %88 = vmatprep.subr.mxu0 0.0
    %89 = vmatpush1.msra.mxu0 0.0
    %90 = vmatprep.subr.mxu0 0.0
    %91 = vmatpush1.msra.mxu0 0.0
    %92 = vmatprep.subr.mxu0 0.0
    %93 = vmatpush1.msra.mxu0 0.0
    %94 = vmatprep.subr.mxu0 0.0
    %95 = vmatpush1.msra.mxu0 0.0
    %96 = vmatprep.subr.mxu0 0.0
    %97 = vmatpush1.msra.mxu0 0.0
    %98 = vmatprep.subr.mxu0 0.0
    %99 = vmatpush1.msra.mxu0 0.0
    %100 = vmatprep.subr.mxu0 0.0
    %101 = vmatpush1.msra.mxu0 0.0
    %102 = vmatprep.subr.mxu0 0.0
    %103 = vmatpush1.msra.mxu0 0.0
    %104 = vmatprep.subr.mxu0 0.0
    %105 = vmatpush1.msra.mxu0 0.0
    %106 = vmatprep.subr.mxu0 0.0
    %107 = vmatpush1.msra.mxu0 0.0
    %108 = vmatprep.subr.mxu0 0.0
    %109 = vmatpush1.msra.mxu0 0.0
    %110 = vmatprep.subr.mxu0 0.0
    %111 = vmatpush1.msra.mxu0 0.0
    %112 = vmatprep.subr.mxu0 0.0
    %113 = vmatpush1.msra.mxu0 0.0
    %114 = vmatprep.subr.mxu0 0.0
    %115 = vmatpush1.msra.mxu0 0.0
    %116 = vmatprep.subr.mxu0 0.0
    %117 = vmatpush1.msra.mxu0 0.0
    %118 = vmatprep.subr.mxu0 0.0
    %119 = vmatpush1.msra.mxu0 0.0
    %120 = vmatprep.subr.mxu0 0.0
    %121 = vmatpush1.msra.mxu0 0.0
    %122 = vmatprep.subr.mxu0 0.0
    %123 = vmatpush1.msra.mxu0 0.0
    %124 = vmatprep.subr.mxu0 0.0
    %125 = vmatpush1.msra.mxu0 0.0
    %126 = vmatprep.subr.mxu0 0.0
    %127 = vmatpush1.msra.mxu0 0.0
    %128 = vmatprep.subr.mxu0 0.0
    %129 = vmatpush1.msra.mxu0 0.0
    %130 = vmatprep.subr.mxu0 0.0
    %131 = vmatpush1.msra.mxu0 0.0
    %132 = vmatprep.subr.mxu0 0.0
    %133 = vmatpush1.msra.mxu0 0.0
    %134 = vmatprep.subr.mxu0 0.0
    %135 = vmatpush1.msra.mxu0 0.0
    %136 = vmatprep.subr.mxu0 0.0
    %137 = vmatpush1.msra.mxu0 0.0
    %138 = vmatprep.subr.mxu0 0.0
    %139 = vmatpush1.msra.mxu0 0.0
    %140 = vmatprep.subr.mxu0 0.0
    %141 = vmatpush1.msra.mxu0 0.0
    %142 = vmatprep.mubr.f32.mxu0 0.0
    %143 = vmatmul.mubr.f32.gmra.mrb[0].mxu0 %v76
    %v144 = vpop.f32.mrb[0].mxu0
    %v145 = vadd.f32 %v58, %v144
    %v146 = vpop.f32.mrb[0].mxu0
    %147 = vdwg.mxu0
    %v149 = vsel %vm74, %v67, 0
    %151 = vmatprep.subr.mxu0 0.0
    %152 = vmatpush1.msra.mxu0 %v41
    %153 = vmatprep.subr.mxu0 0.0
    %154 = vmatpush1.msra.mxu0 %v42
    %155 = vmatprep.subr.mxu0 0.0
    %156 = vmatpush1.msra.mxu0 %v43
    %157 = vmatprep.subr.mxu0 0.0
    %158 = vmatpush1.msra.mxu0 %v44
    %159 = vmatprep.subr.mxu0 0.0
    %160 = vmatpush1.msra.mxu0 0.0
    %161 = vmatprep.subr.mxu0 0.0
    %162 = vmatpush1.msra.mxu0 0.0
    %163 = vmatprep.subr.mxu0 0.0
    %164 = vmatpush1.msra.mxu0 0.0
    %165 = vmatprep.subr.mxu0 0.0
    %166 = vmatpush1.msra.mxu0 0.0
    %167 = vmatprep.subr.mxu0 0.0
    %168 = vmatpush1.msra.mxu0 0.0
    %169 = vmatprep.subr.mxu0 0.0
    %170 = vmatpush1.msra.mxu0 0.0
    %171 = vmatprep.subr.mxu0 0.0
    %172 = vmatpush1.msra.mxu0 0.0
    %173 = vmatprep.subr.mxu0 0.0
    %174 = vmatpush1.msra.mxu0 0.0
    %175 = vmatprep.subr.mxu0 0.0
    %176 = vmatpush1.msra.mxu0 0.0
    %177 = vmatprep.subr.mxu0 0.0
    %178 = vmatpush1.msra.mxu0 0.0
    %179 = vmatprep.subr.mxu0 0.0
    %180 = vmatpush1.msra.mxu0 0.0
    %181 = vmatprep.subr.mxu0 0.0
    %182 = vmatpush1.msra.mxu0 0.0
    %183 = vmatprep.subr.mxu0 0.0
    %184 = vmatpush1.msra.mxu0 0.0
    %185 = vmatprep.subr.mxu0 0.0
    %186 = vmatpush1.msra.mxu0 0.0
    %187 = vmatprep.subr.mxu0 0.0
    %188 = vmatpush1.msra.mxu0 0.0
    %189 = vmatprep.subr.mxu0 0.0
    %190 = vmatpush1.msra.mxu0 0.0
    %191 = vmatprep.subr.mxu0 0.0
    %192 = vmatpush1.msra.mxu0 0.0
    %193 = vmatprep.subr.mxu0 0.0
    %194 = vmatpush1.msra.mxu0 0.0
    %195 = vmatprep.subr.mxu0 0.0
    %196 = vmatpush1.msra.mxu0 0.0
    %197 = vmatprep.subr.mxu0 0.0
    %198 = vmatpush1.msra.mxu0 0.0
    %199 = vmatprep.subr.mxu0 0.0
    %200 = vmatpush1.msra.mxu0 0.0
    %201 = vmatprep.subr.mxu0 0.0
    %202 = vmatpush1.msra.mxu0 0.0
    %203 = vmatprep.subr.mxu0 0.0
    %204 = vmatpush1.msra.mxu0 0.0
    %205 = vmatprep.subr.mxu0 0.0
    %206 = vmatpush1.msra.mxu0 0.0
    %207 = vmatprep.subr.mxu0 0.0
    %208 = vmatpush1.msra.mxu0 0.0
    %209 = vmatprep.subr.mxu0 0.0
    %210 = vmatpush1.msra.mxu0 0.0
    %211 = vmatprep.subr.mxu0 0.0
    %212 = vmatpush1.msra.mxu0 0.0
    %213 = vmatprep.subr.mxu0 0.0
    %214 = vmatpush1.msra.mxu0 0.0
    %215 = vmatprep.mubr.f32.mxu0 0.0
    %216 = vmatmul.mubr.f32.gmra.mrb[0].mxu0 %v149
    %v217 = vpop.f32.mrb[0].mxu0
    %v218 = vadd.f32 0.0, %v217
    %v219 = vpop.f32.mrb[0].mxu0
    %220 = vdwg.mxu0
    %v221 = vadd.f32 %v145, %v218
    %v222 = vtanh.pop %v221
    %v223 = vadd.f32 %v222, 1.0
    %v224 = vmul.f32 %v223, 0.5
    %226 = vrot.lane.b32.xlu0 %v68, 32
    %v227 = vpop.permute.xlu0 %226
    %v229 = vmul.f32 %v224, %v227
    %231 = vrot.lane.b32.xlu0 %v222, 64
    %v232 = vpop.permute.xlu0 %231
    %v234 = vmul.f32 %v224, %v232
    %236 = vrot.lane.b32.xlu0 %v234, 32
    %v237 = vpop.permute.xlu0 %236
    %v239 = vadd.f32 %v229, %v237
    %v240 = vtanh.pop %v239
    %242 = vrot.lane.b32.xlu0 %v240, 64
    %v243 = vpop.permute.xlu0 %242
    %v245 = vmul.f32 %v224, %v243
    %247 = vrot.lane.b32.xlu0 %v245, 32
    %v248 = vpop.permute.xlu0 %247
    %251 = vrot.lane.b32.xlu0 %v70, 32
    %v252 = vpop.permute.xlu0 %251
    %v254 = vsel %vm74, %v248, %v252
    %vm255 = vcmask 523264
    %v257 = vsel %vm255, %v254, 0
    %259 = vmatprep.subr.mxu0 0.0
    %260 = vmatpush1.msra.mxu0 %v45
    %261 = vmatprep.subr.mxu0 0.0
    %262 = vmatpush1.msra.mxu0 %v46
    %263 = vmatprep.subr.mxu0 0.0
    %264 = vmatpush1.msra.mxu0 %v47
    %265 = vmatprep.subr.mxu0 0.0
    %266 = vmatpush1.msra.mxu0 %v48
    %267 = vmatprep.subr.mxu0 0.0
    %268 = vmatpush1.msra.mxu0 %v49
    %269 = vmatprep.subr.mxu0 0.0
    %270 = vmatpush1.msra.mxu0 %v50
    %271 = vmatprep.subr.mxu0 0.0
    %272 = vmatpush1.msra.mxu0 %v51
    %273 = vmatprep.subr.mxu0 0.0
    %274 = vmatpush1.msra.mxu0 %v52
    %275 = vmatprep.subr.mxu0 0.0
    %276 = vmatpush1.msra.mxu0 0.0
    %277 = vmatprep.subr.mxu0 0.0
    %278 = vmatpush1.msra.mxu0 0.0
    %279 = vmatprep.subr.mxu0 0.0
    %280 = vmatpush1.msra.mxu0 0.0
    %281 = vmatprep.subr.mxu0 0.0
    %282 = vmatpush1.msra.mxu0 0.0
    %283 = vmatprep.subr.mxu0 0.0
    %284 = vmatpush1.msra.mxu0 0.0
    %285 = vmatprep.subr.mxu0 0.0
    %286 = vmatpush1.msra.mxu0 0.0
    %287 = vmatprep.subr.mxu0 0.0
    %288 = vmatpush1.msra.mxu0 0.0
    %289 = vmatprep.subr.mxu0 0.0
    %290 = vmatpush1.msra.mxu0 0.0
    %291 = vmatprep.subr.mxu0 0.0
    %292 = vmatpush1.msra.mxu0 0.0
    %293 = vmatprep.subr.mxu0 0.0
    %294 = vmatpush1.msra.mxu0 0.0
    %295 = vmatprep.subr.mxu0 0.0
    %296 = vmatpush1.msra.mxu0 0.0
    %297 = vmatprep.subr.mxu0 0.0
    %298 = vmatpush1.msra.mxu0 0.0
    %299 = vmatprep.subr.mxu0 0.0
    %300 = vmatpush1.msra.mxu0 0.0
    %301 = vmatprep.subr.mxu0 0.0
    %302 = vmatpush1.msra.mxu0 0.0
    %303 = vmatprep.subr.mxu0 0.0
    %304 = vmatpush1.msra.mxu0 0.0
    %305 = vmatprep.subr.mxu0 0.0
    %306 = vmatpush1.msra.mxu0 0.0
    %307 = vmatprep.subr.mxu0 0.0
    %308 = vmatpush1.msra.mxu0 0.0
    %309 = vmatprep.subr.mxu0 0.0
    %310 = vmatpush1.msra.mxu0 0.0
    %311 = vmatprep.subr.mxu0 0.0
    %312 = vmatpush1.msra.mxu0 0.0
    %313 = vmatprep.subr.mxu0 0.0
    %314 = vmatpush1.msra.mxu0 0.0
    %315 = vmatprep.subr.mxu0 0.0
    %316 = vmatpush1.msra.mxu0 0.0
    %317 = vmatprep.subr.mxu0 0.0
    %318 = vmatpush1.msra.mxu0 0.0
    %319 = vmatprep.subr.mxu0 0.0
    %320 = vmatpush1.msra.mxu0 0.0
    %321 = vmatprep.subr.mxu0 0.0
    %322 = vmatpush1.msra.mxu0 0.0
    %323 = vmatprep.mubr.f32.mxu0 0.0
    %324 = vmatmul.mubr.f32.gmra.mrb[0].mxu0 %v257
    %v325 = vpop.f32.mrb[0].mxu0
    %v326 = vadd.f32 %v65, %v325
    %v327 = vpop.f32.mrb[0].mxu0
    %328 = vdwg.mxu0
    %v329 = vtanh.pop %v326
    %v330 = vadd.f32 %v329, 1.0
    %v331 = vmul.f32 %v330, 0.5
    %333 = vrot.lane.b32.xlu0 %v72, 32
    %v334 = vpop.permute.xlu0 %333
    %v336 = vmul.f32 %v331, %v334
    %338 = vrot.lane.b32.xlu0 %v329, 64
    %v339 = vpop.permute.xlu0 %338
    %v341 = vmul.f32 %v331, %v339
    %343 = vrot.lane.b32.xlu0 %v341, 32
    %v344 = vpop.permute.xlu0 %343
    %v346 = vadd.f32 %v336, %v344
    %v347 = vtanh.pop %v346
    %349 = vrot.lane.b32.xlu0 %v347, 64
    %v350 = vpop.permute.xlu0 %349
    %v352 = vmul.f32 %v331, %v350
    %354 = vrot.lane.b32.xlu0 %v352, 32
    %v355 = vpop.permute.xlu0 %354
    %vm357 = vcmask 254976
    %358 = vst.msk [vmem:[%s6] sm:$0x3] %vm357, %v355
    %s359 = scalar_lea.vmem %s0, 2
    %v360 = vld [vmem:[%s359] sm:$0x3]
    %v362 = vsel %vm74, %v360, 0
    %364 = vmatprep.subr.mxu0 0.0
    %365 = vmatpush1.msra.mxu0 %v37
    %366 = vmatprep.subr.mxu0 0.0
    %367 = vmatpush1.msra.mxu0 %v38
    %368 = vmatprep.subr.mxu0 0.0
    %369 = vmatpush1.msra.mxu0 %v39
    %370 = vmatprep.subr.mxu0 0.0
    %371 = vmatpush1.msra.mxu0 %v40
    %372 = vmatprep.subr.mxu0 0.0
    %373 = vmatpush1.msra.mxu0 0.0
    %374 = vmatprep.subr.mxu0 0.0
    %375 = vmatpush1.msra.mxu0 0.0
    %376 = vmatprep.subr.mxu0 0.0
    %377 = vmatpush1.msra.mxu0 0.0
    %378 = vmatprep.subr.mxu0 0.0
    %379 = vmatpush1.msra.mxu0 0.0
    %380 = vmatprep.subr.mxu0 0.0
    %381 = vmatpush1.msra.mxu0 0.0
    %382 = vmatprep.subr.mxu0 0.0
    %383 = vmatpush1.msra.mxu0 0.0
    %384 = vmatprep.subr.mxu0 0.0
    %385 = vmatpush1.msra.mxu0 0.0
    %386 = vmatprep.subr.mxu0 0.0
    %387 = vmatpush1.msra.mxu0 0.0
    %388 = vmatprep.subr.mxu0 0.0
    %389 = vmatpush1.msra.mxu0 0.0
    %390 = vmatprep.subr.mxu0 0.0
    %391 = vmatpush1.msra.mxu0 0.0
    %392 = vmatprep.subr.mxu0 0.0
    %393 = vmatpush1.msra.mxu0 0.0
    %394 = vmatprep.subr.mxu0 0.0
    %395 = vmatpush1.msra.mxu0 0.0
    %396 = vmatprep.subr.mxu0 0.0
    %397 = vmatpush1.msra.mxu0 0.0
    %398 = vmatprep.subr.mxu0 0.0
    %399 = vmatpush1.msra.mxu0 0.0
    %400 = vmatprep.subr.mxu0 0.0
    %401 = vmatpush1.msra.mxu0 0.0
    %402 = vmatprep.subr.mxu0 0.0
    %403 = vmatpush1.msra.mxu0 0.0
    %404 = vmatprep.subr.mxu0 0.0
    %405 = vmatpush1.msra.mxu0 0.0
    %406 = vmatprep.subr.mxu0 0.0
    %407 = vmatpush1.msra.mxu0 0.0
    %408 = vmatprep.subr.mxu0 0.0
    %409 = vmatpush1.msra.mxu0 0.0
    %410 = vmatprep.subr.mxu0 0.0
    %411 = vmatpush1.msra.mxu0 0.0
    %412 = vmatprep.subr.mxu0 0.0
    %413 = vmatpush1.msra.mxu0 0.0
    %414 = vmatprep.subr.mxu0 0.0
    %415 = vmatpush1.msra.mxu0 0.0
    %416 = vmatprep.subr.mxu0 0.0
    %417 = vmatpush1.msra.mxu0 0.0
    %418 = vmatprep.subr.mxu0 0.0
    %419 = vmatpush1.msra.mxu0 0.0
    %420 = vmatprep.subr.mxu0 0.0
    %421 = vmatpush1.msra.mxu0 0.0
    %422 = vmatprep.subr.mxu0 0.0
    %423 = vmatpush1.msra.mxu0 0.0
    %424 = vmatprep.subr.mxu0 0.0
    %425 = vmatpush1.msra.mxu0 0.0
    %426 = vmatprep.subr.mxu0 0.0
    %427 = vmatpush1.msra.mxu0 0.0
    %428 = vmatprep.mubr.f32.mxu0 0.0
    %429 = vmatmul.mubr.f32.gmra.mrb[0].mxu0 %v362
    %v430 = vpop.f32.mrb[0].mxu0
    %v431 = vadd.f32 %v58, %v430
    %v432 = vpop.f32.mrb[0].mxu0
    %433 = vdwg.mxu0
    %v434 = vsel %vm74, %v248, 0
    %436 = vmatprep.subr.mxu0 0.0
    %437 = vmatpush1.msra.mxu0 %v41
    %438 = vmatprep.subr.mxu0 0.0
    %439 = vmatpush1.msra.mxu0 %v42
    %440 = vmatprep.subr.mxu0 0.0
    %441 = vmatpush1.msra.mxu0 %v43
    %442 = vmatprep.subr.mxu0 0.0
    %443 = vmatpush1.msra.mxu0 %v44
    %444 = vmatprep.subr.mxu0 0.0
    %445 = vmatpush1.msra.mxu0 0.0
    %446 = vmatprep.subr.mxu0 0.0
    %447 = vmatpush1.msra.mxu0 0.0
    %448 = vmatprep.subr.mxu0 0.0
    %449 = vmatpush1.msra.mxu0 0.0
    %450 = vmatprep.subr.mxu0 0.0
    %451 = vmatpush1.msra.mxu0 0.0
    %452 = vmatprep.subr.mxu0 0.0
    %453 = vmatpush1.msra.mxu0 0.0
    %454 = vmatprep.subr.mxu0 0.0
    %455 = vmatpush1.msra.mxu0 0.0
    %456 = vmatprep.subr.mxu0 0.0
    %457 = vmatpush1.msra.mxu0 0.0
    %458 = vmatprep.subr.mxu0 0.0
    %459 = vmatpush1.msra.mxu0 0.0
    %460 = vmatprep.subr.mxu0 0.0
    %461 = vmatpush1.msra.mxu0 0.0
    %462 = vmatprep.subr.mxu0 0.0
    %463 = vmatpush1.msra.mxu0 0.0
    %464 = vmatprep.subr.mxu0 0.0
    %465 = vmatpush1.msra.mxu0 0.0
    %466 = vmatprep.subr.mxu0 0.0
    %467 = vmatpush1.msra.mxu0 0.0
    %468 = vmatprep.subr.mxu0 0.0
    %469 = vmatpush1.msra.mxu0 0.0
    %470 = vmatprep.subr.mxu0 0.0
    %471 = vmatpush1.msra.mxu0 0.0
    %472 = vmatprep.subr.mxu0 0.0
    %473 = vmatpush1.msra.mxu0 0.0
    %474 = vmatprep.subr.mxu0 0.0
    %475 = vmatpush1.msra.mxu0 0.0
    %476 = vmatprep.subr.mxu0 0.0
    %477 = vmatpush1.msra.mxu0 0.0
    %478 = vmatprep.subr.mxu0 0.0
    %479 = vmatpush1.msra.mxu0 0.0
    %480 = vmatprep.subr.mxu0 0.0
    %481 = vmatpush1.msra.mxu0 0.0
    %482 = vmatprep.subr.mxu0 0.0
    %483 = vmatpush1.msra.mxu0 0.0
    %484 = vmatprep.subr.mxu0 0.0
    %485 = vmatpush1.msra.mxu0 0.0
    %486 = vmatprep.subr.mxu0 0.0
    %487 = vmatpush1.msra.mxu0 0.0
    %488 = vmatprep.subr.mxu0 0.0
    %489 = vmatpush1.msra.mxu0 0.0
    %490 = vmatprep.subr.mxu0 0.0
    %491 = vmatpush1.msra.mxu0 0.0
    %492 = vmatprep.subr.mxu0 0.0
    %493 = vmatpush1.msra.mxu0 0.0
    %494 = vmatprep.subr.mxu0 0.0
    %495 = vmatpush1.msra.mxu0 0.0
    %496 = vmatprep.subr.mxu0 0.0
    %497 = vmatpush1.msra.mxu0 0.0
    %498 = vmatprep.subr.mxu0 0.0
    %499 = vmatpush1.msra.mxu0 0.0
    %500 = vmatprep.mubr.f32.mxu0 0.0
    %501 = vmatmul.mubr.f32.gmra.mrb[0].mxu0 %v434
    %v502 = vpop.f32.mrb[0].mxu0
    %v503 = vadd.f32 0.0, %v502
    %v504 = vpop.f32.mrb[0].mxu0
    %505 = vdwg.mxu0
    %v506 = vadd.f32 %v431, %v503
    %v507 = vtanh.pop %v506
    %v508 = vadd.f32 %v507, 1.0
    %v509 = vmul.f32 %v508, 0.5
    %v510 = vmul.f32 %v509, %v239
    %512 = vrot.lane.b32.xlu0 %v507, 64
    %v513 = vpop.permute.xlu0 %512
    %v515 = vmul.f32 %v509, %v513
    %517 = vrot.lane.b32.xlu0 %v515, 32
    %v518 = vpop.permute.xlu0 %517
    %v520 = vadd.f32 %v510, %v518
    %v521 = vtanh.pop %v520
    %523 = vrot.lane.b32.xlu0 %v521, 64
    %v524 = vpop.permute.xlu0 %523
    %v526 = vmul.f32 %v509, %v524
    %528 = vrot.lane.b32.xlu0 %v526, 32
    %v529 = vpop.permute.xlu0 %528
    %531 = vrot.lane.b32.xlu0 %v352, 64
    %v532 = vpop.permute.xlu0 %531
    %v534 = vsel %vm74, %v529, %v532
    %v536 = vsel %vm255, %v534, 0
    %538 = vmatprep.subr.mxu0 0.0
    %539 = vmatpush1.msra.mxu0 %v45
    %540 = vmatprep.subr.mxu0 0.0
    %541 = vmatpush1.msra.mxu0 %v46
    %542 = vmatprep.subr.mxu0 0.0
    %543 = vmatpush1.msra.mxu0 %v47
    %544 = vmatprep.subr.mxu0 0.0
    %545 = vmatpush1.msra.mxu0 %v48
    %546 = vmatprep.subr.mxu0 0.0
    %547 = vmatpush1.msra.mxu0 %v49
    %548 = vmatprep.subr.mxu0 0.0
    %549 = vmatpush1.msra.mxu0 %v50
    %550 = vmatprep.subr.mxu0 0.0
    %551 = vmatpush1.msra.mxu0 %v51
    %552 = vmatprep.subr.mxu0 0.0
    %553 = vmatpush1.msra.mxu0 %v52
    %554 = vmatprep.subr.mxu0 0.0
    %555 = vmatpush1.msra.mxu0 0.0
    %556 = vmatprep.subr.mxu0 0.0
    %557 = vmatpush1.msra.mxu0 0.0
    %558 = vmatprep.subr.mxu0 0.0
    %559 = vmatpush1.msra.mxu0 0.0
    %560 = vmatprep.subr.mxu0 0.0
    %561 = vmatpush1.msra.mxu0 0.0
    %562 = vmatprep.subr.mxu0 0.0
    %563 = vmatpush1.msra.mxu0 0.0
    %564 = vmatprep.subr.mxu0 0.0
    %565 = vmatpush1.msra.mxu0 0.0
    %566 = vmatprep.subr.mxu0 0.0
    %567 = vmatpush1.msra.mxu0 0.0
    %568 = vmatprep.subr.mxu0 0.0
    %569 = vmatpush1.msra.mxu0 0.0
    %570 = vmatprep.subr.mxu0 0.0
    %571 = vmatpush1.msra.mxu0 0.0
    %572 = vmatprep.subr.mxu0 0.0
    %573 = vmatpush1.msra.mxu0 0.0
    %574 = vmatprep.subr.mxu0 0.0
    %575 = vmatpush1.msra.mxu0 0.0
    %576 = vmatprep.subr.mxu0 0.0
    %577 = vmatpush1.msra.mxu0 0.0
    %578 = vmatprep.subr.mxu0 0.0
    %579 = vmatpush1.msra.mxu0 0.0
    %580 = vmatprep.subr.mxu0 0.0
    %581 = vmatpush1.msra.mxu0 0.0
    %582 = vmatprep.subr.mxu0 0.0
    %583 = vmatpush1.msra.mxu0 0.0
    %584 = vmatprep.subr.mxu0 0.0
    %585 = vmatpush1.msra.mxu0 0.0
    %586 = vmatprep.subr.mxu0 0.0
    %587 = vmatpush1.msra.mxu0 0.0
    %588 = vmatprep.subr.mxu0 0.0
    %589 = vmatpush1.msra.mxu0 0.0
    %590 = vmatprep.subr.mxu0 0.0
    %591 = vmatpush1.msra.mxu0 0.0
    %592 = vmatprep.subr.mxu0 0.0
    %593 = vmatpush1.msra.mxu0 0.0
    %594 = vmatprep.subr.mxu0 0.0
    %595 = vmatpush1.msra.mxu0 0.0
    %596 = vmatprep.subr.mxu0 0.0
    %597 = vmatpush1.msra.mxu0 0.0
    %598 = vmatprep.subr.mxu0 0.0
    %599 = vmatpush1.msra.mxu0 0.0
    %600 = vmatprep.subr.mxu0 0.0
    %601 = vmatpush1.msra.mxu0 0.0
    %602 = vmatprep.mubr.f32.mxu0 0.0
    %603 = vmatmul.mubr.f32.gmra.mrb[0].mxu0 %v536
    %v604 = vpop.f32.mrb[0].mxu0
    %v605 = vadd.f32 %v65, %v604
    %v606 = vpop.f32.mrb[0].mxu0
    %607 = vdwg.mxu0
    %v608 = vtanh.pop %v605
    %v609 = vadd.f32 %v608, 1.0
    %v610 = vmul.f32 %v609, 0.5
    %v611 = vmul.f32 %v610, %v346
    %613 = vrot.lane.b32.xlu0 %v608, 64
    %v614 = vpop.permute.xlu0 %613
    %v616 = vmul.f32 %v610, %v614
    %618 = vrot.lane.b32.xlu0 %v616, 32
    %v619 = vpop.permute.xlu0 %618
    %v621 = vadd.f32 %v611, %v619
    %v622 = vtanh.pop %v621
    %624 = vrot.lane.b32.xlu0 %v622, 64
    %v625 = vpop.permute.xlu0 %624
    %v627 = vmul.f32 %v610, %v625
    %629 = vrot.lane.b32.xlu0 %v627, 32
    %v630 = vpop.permute.xlu0 %629
    %s632 = scalar_lea.vmem %s6, 2
    %633 = vst.msk [vmem:[%s632] sm:$0x3] %vm357, %v630
    %s634 = scalar_lea.vmem %s0, 4
    %v635 = vld [vmem:[%s634] sm:$0x3]
    %v637 = vsel %vm74, %v635, 0
    %639 = vmatprep.subr.mxu0 0.0
    %640 = vmatpush1.msra.mxu0 %v37
    %641 = vmatprep.subr.mxu0 0.0
    %642 = vmatpush1.msra.mxu0 %v38
    %643 = vmatprep.subr.mxu0 0.0
    %644 = vmatpush1.msra.mxu0 %v39
    %645 = vmatprep.subr.mxu0 0.0
    %646 = vmatpush1.msra.mxu0 %v40
    %647 = vmatprep.subr.mxu0 0.0
    %648 = vmatpush1.msra.mxu0 0.0
    %649 = vmatprep.subr.mxu0 0.0
    %650 = vmatpush1.msra.mxu0 0.0
    %651 = vmatprep.subr.mxu0 0.0
    %652 = vmatpush1.msra.mxu0 0.0
    %653 = vmatprep.subr.mxu0 0.0
    %654 = vmatpush1.msra.mxu0 0.0
    %655 = vmatprep.subr.mxu0 0.0
    %656 = vmatpush1.msra.mxu0 0.0
    %657 = vmatprep.subr.mxu0 0.0
    %658 = vmatpush1.msra.mxu0 0.0
    %659 = vmatprep.subr.mxu0 0.0
    %660 = vmatpush1.msra.mxu0 0.0
    %661 = vmatprep.subr.mxu0 0.0
    %662 = vmatpush1.msra.mxu0 0.0
    %663 = vmatprep.subr.mxu0 0.0
    %664 = vmatpush1.msra.mxu0 0.0
    %665 = vmatprep.subr.mxu0 0.0
    %666 = vmatpush1.msra.mxu0 0.0
    %667 = vmatprep.subr.mxu0 0.0
    %668 = vmatpush1.msra.mxu0 0.0
    %669 = vmatprep.subr.mxu0 0.0
    %670 = vmatpush1.msra.mxu0 0.0
    %671 = vmatprep.subr.mxu0 0.0
    %672 = vmatpush1.msra.mxu0 0.0
    %673 = vmatprep.subr.mxu0 0.0
    %674 = vmatpush1.msra.mxu0 0.0
    %675 = vmatprep.subr.mxu0 0.0
    %676 = vmatpush1.msra.mxu0 0.0
    %677 = vmatprep.subr.mxu0 0.0
    %678 = vmatpush1.msra.mxu0 0.0
    %679 = vmatprep.subr.mxu0 0.0
    %680 = vmatpush1.msra.mxu0 0.0
    %681 = vmatprep.subr.mxu0 0.0
    %682 = vmatpush1.msra.mxu0 0.0
    %683 = vmatprep.subr.mxu0 0.0
    %684 = vmatpush1.msra.mxu0 0.0
    %685 = vmatprep.subr.mxu0 0.0
    %686 = vmatpush1.msra.mxu0 0.0
    %687 = vmatprep.subr.mxu0 0.0
    %688 = vmatpush1.msra.mxu0 0.0
    %689 = vmatprep.subr.mxu0 0.0
    %690 = vmatpush1.msra.mxu0 0.0
    %691 = vmatprep.subr.mxu0 0.0
    %692 = vmatpush1.msra.mxu0 0.0
    %693 = vmatprep.subr.mxu0 0.0
    %694 = vmatpush1.msra.mxu0 0.0
    %695 = vmatprep.subr.mxu0 0.0
    %696 = vmatpush1.msra.mxu0 0.0
    %697 = vmatprep.subr.mxu0 0.0
    %698 = vmatpush1.msra.mxu0 0.0
    %699 = vmatprep.subr.mxu0 0.0
    %700 = vmatpush1.msra.mxu0 0.0
    %701 = vmatprep.subr.mxu0 0.0
    %702 = vmatpush1.msra.mxu0 0.0
    %703 = vmatprep.mubr.f32.mxu0 0.0
    %704 = vmatmul.mubr.f32.gmra.mrb[0].mxu0 %v637
    %v705 = vpop.f32.mrb[0].mxu0
    %v706 = vadd.f32 %v58, %v705
    %v707 = vpop.f32.mrb[0].mxu0
    %708 = vdwg.mxu0
    %v709 = vsel %vm74, %v529, 0
    %711 = vmatprep.subr.mxu0 0.0
    %712 = vmatpush1.msra.mxu0 %v41
    %713 = vmatprep.subr.mxu0 0.0
    %714 = vmatpush1.msra.mxu0 %v42
    %715 = vmatprep.subr.mxu0 0.0
    %716 = vmatpush1.msra.mxu0 %v43
    %717 = vmatprep.subr.mxu0 0.0
    %718 = vmatpush1.msra.mxu0 %v44
    %719 = vmatprep.subr.mxu0 0.0
    %720 = vmatpush1.msra.mxu0 0.0
    %721 = vmatprep.subr.mxu0 0.0
    %722 = vmatpush1.msra.mxu0 0.0
    %723 = vmatprep.subr.mxu0 0.0
    %724 = vmatpush1.msra.mxu0 0.0
    %725 = vmatprep.subr.mxu0 0.0
    %726 = vmatpush1.msra.mxu0 0.0
    %727 = vmatprep.subr.mxu0 0.0
    %728 = vmatpush1.msra.mxu0 0.0
    %729 = vmatprep.subr.mxu0 0.0
    %730 = vmatpush1.msra.mxu0 0.0
    %731 = vmatprep.subr.mxu0 0.0
    %732 = vmatpush1.msra.mxu0 0.0
    %733 = vmatprep.subr.mxu0 0.0
    %734 = vmatpush1.msra.mxu0 0.0
    %735 = vmatprep.subr.mxu0 0.0
    %736 = vmatpush1.msra.mxu0 0.0
    %737 = vmatprep.subr.mxu0 0.0
    %738 = vmatpush1.msra.mxu0 0.0
    %739 = vmatprep.subr.mxu0 0.0
    %740 = vmatpush1.msra.mxu0 0.0
    %741 = vmatprep.subr.mxu0 0.0
    %742 = vmatpush1.msra.mxu0 0.0
    %743 = vmatprep.subr.mxu0 0.0
    %744 = vmatpush1.msra.mxu0 0.0
    %745 = vmatprep.subr.mxu0 0.0
    %746 = vmatpush1.msra.mxu0 0.0
    %747 = vmatprep.subr.mxu0 0.0
    %748 = vmatpush1.msra.mxu0 0.0
    %749 = vmatprep.subr.mxu0 0.0
    %750 = vmatpush1.msra.mxu0 0.0
    %751 = vmatprep.subr.mxu0 0.0
    %752 = vmatpush1.msra.mxu0 0.0
    %753 = vmatprep.subr.mxu0 0.0
    %754 = vmatpush1.msra.mxu0 0.0
    %755 = vmatprep.subr.mxu0 0.0
    %756 = vmatpush1.msra.mxu0 0.0
    %757 = vmatprep.subr.mxu0 0.0
    %758 = vmatpush1.msra.mxu0 0.0
    %759 = vmatprep.subr.mxu0 0.0
    %760 = vmatpush1.msra.mxu0 0.0
    %761 = vmatprep.subr.mxu0 0.0
    %762 = vmatpush1.msra.mxu0 0.0
    %763 = vmatprep.subr.mxu0 0.0
    %764 = vmatpush1.msra.mxu0 0.0
    %765 = vmatprep.subr.mxu0 0.0
    %766 = vmatpush1.msra.mxu0 0.0
    %767 = vmatprep.subr.mxu0 0.0
    %768 = vmatpush1.msra.mxu0 0.0
    %769 = vmatprep.subr.mxu0 0.0
    %770 = vmatpush1.msra.mxu0 0.0
    %771 = vmatprep.subr.mxu0 0.0
    %772 = vmatpush1.msra.mxu0 0.0
    %773 = vmatprep.subr.mxu0 0.0
    %774 = vmatpush1.msra.mxu0 0.0
    %775 = vmatprep.mubr.f32.mxu0 0.0
    %776 = vmatmul.mubr.f32.gmra.mrb[0].mxu0 %v709
    %v777 = vpop.f32.mrb[0].mxu0
    %v778 = vadd.f32 0.0, %v777
    %v779 = vpop.f32.mrb[0].mxu0
    %780 = vdwg.mxu0
    %v781 = vadd.f32 %v706, %v778
    %v782 = vtanh.pop %v781
    %v783 = vadd.f32 %v782, 1.0
    %v784 = vmul.f32 %v783, 0.5
    %v785 = vmul.f32 %v784, %v520
    %787 = vrot.lane.b32.xlu0 %v782, 64
    %v788 = vpop.permute.xlu0 %787
    %v790 = vmul.f32 %v784, %v788
    %792 = vrot.lane.b32.xlu0 %v790, 32
    %v793 = vpop.permute.xlu0 %792
    %v795 = vadd.f32 %v785, %v793
    %v796 = vtanh.pop %v795
    %798 = vrot.lane.b32.xlu0 %v796, 64
    %v799 = vpop.permute.xlu0 %798
    %v801 = vmul.f32 %v784, %v799
    %803 = vrot.lane.b32.xlu0 %v801, 32
    %v804 = vpop.permute.xlu0 %803
    %806 = vrot.lane.b32.xlu0 %v627, 64
    %v807 = vpop.permute.xlu0 %806
    %v809 = vsel %vm74, %v804, %v807
    %v811 = vsel %vm255, %v809, 0
    %813 = vmatprep.subr.mxu0 0.0
    %814 = vmatpush1.msra.mxu0 %v45
    %815 = vmatprep.subr.mxu0 0.0
    %816 = vmatpush1.msra.mxu0 %v46
    %817 = vmatprep.subr.mxu0 0.0
    %818 = vmatpush1.msra.mxu0 %v47
    %819 = vmatprep.subr.mxu0 0.0
    %820 = vmatpush1.msra.mxu0 %v48
    %821 = vmatprep.subr.mxu0 0.0
    %822 = vmatpush1.msra.mxu0 %v49
    %823 = vmatprep.subr.mxu0 0.0
    %824 = vmatpush1.msra.mxu0 %v50
    %825 = vmatprep.subr.mxu0 0.0
    %826 = vmatpush1.msra.mxu0 %v51
    %827 = vmatprep.subr.mxu0 0.0
    %828 = vmatpush1.msra.mxu0 %v52
    %829 = vmatprep.subr.mxu0 0.0
    %830 = vmatpush1.msra.mxu0 0.0
    %831 = vmatprep.subr.mxu0 0.0
    %832 = vmatpush1.msra.mxu0 0.0
    %833 = vmatprep.subr.mxu0 0.0
    %834 = vmatpush1.msra.mxu0 0.0
    %835 = vmatprep.subr.mxu0 0.0
    %836 = vmatpush1.msra.mxu0 0.0
    %837 = vmatprep.subr.mxu0 0.0
    %838 = vmatpush1.msra.mxu0 0.0
    %839 = vmatprep.subr.mxu0 0.0
    %840 = vmatpush1.msra.mxu0 0.0
    %841 = vmatprep.subr.mxu0 0.0
    %842 = vmatpush1.msra.mxu0 0.0
    %843 = vmatprep.subr.mxu0 0.0
    %844 = vmatpush1.msra.mxu0 0.0
    %845 = vmatprep.subr.mxu0 0.0
    %846 = vmatpush1.msra.mxu0 0.0
    %847 = vmatprep.subr.mxu0 0.0
    %848 = vmatpush1.msra.mxu0 0.0
    %849 = vmatprep.subr.mxu0 0.0
    %850 = vmatpush1.msra.mxu0 0.0
    %851 = vmatprep.subr.mxu0 0.0
    %852 = vmatpush1.msra.mxu0 0.0
    %853 = vmatprep.subr.mxu0 0.0
    %854 = vmatpush1.msra.mxu0 0.0
    %855 = vmatprep.subr.mxu0 0.0
    %856 = vmatpush1.msra.mxu0 0.0
    %857 = vmatprep.subr.mxu0 0.0
    %858 = vmatpush1.msra.mxu0 0.0
    %859 = vmatprep.subr.mxu0 0.0
    %860 = vmatpush1.msra.mxu0 0.0
    %861 = vmatprep.subr.mxu0 0.0
    %862 = vmatpush1.msra.mxu0 0.0
    %863 = vmatprep.subr.mxu0 0.0
    %864 = vmatpush1.msra.mxu0 0.0
    %865 = vmatprep.subr.mxu0 0.0
    %866 = vmatpush1.msra.mxu0 0.0
    %867 = vmatprep.subr.mxu0 0.0
    %868 = vmatpush1.msra.mxu0 0.0
    %869 = vmatprep.subr.mxu0 0.0
    %870 = vmatpush1.msra.mxu0 0.0
    %871 = vmatprep.subr.mxu0 0.0
    %872 = vmatpush1.msra.mxu0 0.0
    %873 = vmatprep.subr.mxu0 0.0
    %874 = vmatpush1.msra.mxu0 0.0
    %875 = vmatprep.subr.mxu0 0.0
    %876 = vmatpush1.msra.mxu0 0.0
    %877 = vmatprep.mubr.f32.mxu0 0.0
    %878 = vmatmul.mubr.f32.gmra.mrb[0].mxu0 %v811
    %v879 = vpop.f32.mrb[0].mxu0
    %v880 = vadd.f32 %v65, %v879
    %v881 = vpop.f32.mrb[0].mxu0
    %882 = vdwg.mxu0
    %v883 = vtanh.pop %v880
    %v884 = vadd.f32 %v883, 1.0
    %v885 = vmul.f32 %v884, 0.5
    %v886 = vmul.f32 %v885, %v621
    %888 = vrot.lane.b32.xlu0 %v883, 64
    %v889 = vpop.permute.xlu0 %888
    %v891 = vmul.f32 %v885, %v889
    %893 = vrot.lane.b32.xlu0 %v891, 32
    %v894 = vpop.permute.xlu0 %893
    %v896 = vadd.f32 %v886, %v894
    %v897 = vtanh.pop %v896
    %899 = vrot.lane.b32.xlu0 %v897, 64
    %v900 = vpop.permute.xlu0 %899
    %v902 = vmul.f32 %v885, %v900
    %904 = vrot.lane.b32.xlu0 %v902, 32
    %v905 = vpop.permute.xlu0 %904
    %s907 = scalar_lea.vmem %s6, 4
    %908 = vst.msk [vmem:[%s907] sm:$0x3] %vm357, %v905
    %s909 = scalar_lea.vmem %s0, 6
    %v910 = vld [vmem:[%s909] sm:$0x3]
    %v912 = vsel %vm74, %v910, 0
    %914 = vmatprep.subr.mxu0 0.0
    %915 = vmatpush1.msra.mxu0 %v37
    %916 = vmatprep.subr.mxu0 0.0
    %917 = vmatpush1.msra.mxu0 %v38
    %918 = vmatprep.subr.mxu0 0.0
    %919 = vmatpush1.msra.mxu0 %v39
    %920 = vmatprep.subr.mxu0 0.0
    %921 = vmatpush1.msra.mxu0 %v40
    %922 = vmatprep.subr.mxu0 0.0
    %923 = vmatpush1.msra.mxu0 0.0
    %924 = vmatprep.subr.mxu0 0.0
    %925 = vmatpush1.msra.mxu0 0.0
    %926 = vmatprep.subr.mxu0 0.0
    %927 = vmatpush1.msra.mxu0 0.0
    %928 = vmatprep.subr.mxu0 0.0
    %929 = vmatpush1.msra.mxu0 0.0
    %930 = vmatprep.subr.mxu0 0.0
    %931 = vmatpush1.msra.mxu0 0.0
    %932 = vmatprep.subr.mxu0 0.0
    %933 = vmatpush1.msra.mxu0 0.0
    %934 = vmatprep.subr.mxu0 0.0
    %935 = vmatpush1.msra.mxu0 0.0
    %936 = vmatprep.subr.mxu0 0.0
    %937 = vmatpush1.msra.mxu0 0.0
    %938 = vmatprep.subr.mxu0 0.0
    %939 = vmatpush1.msra.mxu0 0.0
    %940 = vmatprep.subr.mxu0 0.0
    %941 = vmatpush1.msra.mxu0 0.0
    %942 = vmatprep.subr.mxu0 0.0
    %943 = vmatpush1.msra.mxu0 0.0
    %944 = vmatprep.subr.mxu0 0.0
    %945 = vmatpush1.msra.mxu0 0.0
    %946 = vmatprep.subr.mxu0 0.0
    %947 = vmatpush1.msra.mxu0 0.0
    %948 = vmatprep.subr.mxu0 0.0
    %949 = vmatpush1.msra.mxu0 0.0
    %950 = vmatprep.subr.mxu0 0.0
    %951 = vmatpush1.msra.mxu0 0.0
    %952 = vmatprep.subr.mxu0 0.0
    %953 = vmatpush1.msra.mxu0 0.0
    %954 = vmatprep.subr.mxu0 0.0
    %955 = vmatpush1.msra.mxu0 0.0
    %956 = vmatprep.subr.mxu0 0.0
    %957 = vmatpush1.msra.mxu0 0.0
    %958 = vmatprep.subr.mxu0 0.0
    %959 = vmatpush1.msra.mxu0 0.0
    %960 = vmatprep.subr.mxu0 0.0
    %961 = vmatpush1.msra.mxu0 0.0
    %962 = vmatprep.subr.mxu0 0.0
    %963 = vmatpush1.msra.mxu0 0.0
    %964 = vmatprep.subr.mxu0 0.0
    %965 = vmatpush1.msra.mxu0 0.0
    %966 = vmatprep.subr.mxu0 0.0
    %967 = vmatpush1.msra.mxu0 0.0
    %968 = vmatprep.subr.mxu0 0.0
    %969 = vmatpush1.msra.mxu0 0.0
    %970 = vmatprep.subr.mxu0 0.0
    %971 = vmatpush1.msra.mxu0 0.0
    %972 = vmatprep.subr.mxu0 0.0
    %973 = vmatpush1.msra.mxu0 0.0
    %974 = vmatprep.subr.mxu0 0.0
    %975 = vmatpush1.msra.mxu0 0.0
    %976 = vmatprep.subr.mxu0 0.0
    %977 = vmatpush1.msra.mxu0 0.0
    %978 = vmatprep.mubr.f32.mxu0 0.0
    %979 = vmatmul.mubr.f32.gmra.mrb[0].mxu0 %v912
    %v980 = vpop.f32.mrb[0].mxu0
    %v981 = vadd.f32 %v58, %v980
    %v982 = vpop.f32.mrb[0].mxu0
    %983 = vdwg.mxu0
    %v984 = vsel %vm74, %v804, 0
    %986 = vmatprep.subr.mxu0 0.0
    %987 = vmatpush1.msra.mxu0 %v41
    %988 = vmatprep.subr.mxu0 0.0
    %989 = vmatpush1.msra.mxu0 %v42
    %990 = vmatprep.subr.mxu0 0.0
    %991 = vmatpush1.msra.mxu0 %v43
    %992 = vmatprep.subr.mxu0 0.0
    %993 = vmatpush1.msra.mxu0 %v44
    %994 = vmatprep.subr.mxu0 0.0
    %995 = vmatpush1.msra.mxu0 0.0
    %996 = vmatprep.subr.mxu0 0.0
    %997 = vmatpush1.msra.mxu0 0.0
    %998 = vmatprep.subr.mxu0 0.0
    %999 = vmatpush1.msra.mxu0 0.0
    %1000 = vmatprep.subr.mxu0 0.0
    %1001 = vmatpush1.msra.mxu0 0.0
    %1002 = vmatprep.subr.mxu0 0.0
    %1003 = vmatpush1.msra.mxu0 0.0
    %1004 = vmatprep.subr.mxu0 0.0
    %1005 = vmatpush1.msra.mxu0 0.0
    %1006 = vmatprep.subr.mxu0 0.0
    %1007 = vmatpush1.msra.mxu0 0.0
    %1008 = vmatprep.subr.mxu0 0.0
    %1009 = vmatpush1.msra.mxu0 0.0
    %1010 = vmatprep.subr.mxu0 0.0
    %1011 = vmatpush1.msra.mxu0 0.0
    %1012 = vmatprep.subr.mxu0 0.0
    %1013 = vmatpush1.msra.mxu0 0.0
    %1014 = vmatprep.subr.mxu0 0.0
    %1015 = vmatpush1.msra.mxu0 0.0
    %1016 = vmatprep.subr.mxu0 0.0
    %1017 = vmatpush1.msra.mxu0 0.0
    %1018 = vmatprep.subr.mxu0 0.0
    %1019 = vmatpush1.msra.mxu0 0.0
    %1020 = vmatprep.subr.mxu0 0.0
    %1021 = vmatpush1.msra.mxu0 0.0
    %1022 = vmatprep.subr.mxu0 0.0
    %1023 = vmatpush1.msra.mxu0 0.0
    %1024 = vmatprep.subr.mxu0 0.0
    %1025 = vmatpush1.msra.mxu0 0.0
    %1026 = vmatprep.subr.mxu0 0.0
    %1027 = vmatpush1.msra.mxu0 0.0
    %1028 = vmatprep.subr.mxu0 0.0
    %1029 = vmatpush1.msra.mxu0 0.0
    %1030 = vmatprep.subr.mxu0 0.0
    %1031 = vmatpush1.msra.mxu0 0.0
    %1032 = vmatprep.subr.mxu0 0.0
    %1033 = vmatpush1.msra.mxu0 0.0
    %1034 = vmatprep.subr.mxu0 0.0
    %1035 = vmatpush1.msra.mxu0 0.0
    %1036 = vmatprep.subr.mxu0 0.0
    %1037 = vmatpush1.msra.mxu0 0.0
    %1038 = vmatprep.subr.mxu0 0.0
    %1039 = vmatpush1.msra.mxu0 0.0
    %1040 = vmatprep.subr.mxu0 0.0
    %1041 = vmatpush1.msra.mxu0 0.0
    %1042 = vmatprep.subr.mxu0 0.0
    %1043 = vmatpush1.msra.mxu0 0.0
    %1044 = vmatprep.subr.mxu0 0.0
    %1045 = vmatpush1.msra.mxu0 0.0
    %1046 = vmatprep.subr.mxu0 0.0
    %1047 = vmatpush1.msra.mxu0 0.0
    %1048 = vmatprep.subr.mxu0 0.0
    %1049 = vmatpush1.msra.mxu0 0.0
    %1050 = vmatprep.mubr.f32.mxu0 0.0
    %1051 = vmatmul.mubr.f32.gmra.mrb[0].mxu0 %v984
    %v1052 = vpop.f32.mrb[0].mxu0
    %v1053 = vadd.f32 0.0, %v1052
    %v1054 = vpop.f32.mrb[0].mxu0
    %1055 = vdwg.mxu0
    %v1056 = vadd.f32 %v981, %v1053
    %v1057 = vtanh.pop %v1056
    %v1058 = vadd.f32 %v1057, 1.0
    %v1059 = vmul.f32 %v1058, 0.5
    %v1060 = vmul.f32 %v1059, %v795
    %1062 = vrot.lane.b32.xlu0 %v1057, 64
    %v1063 = vpop.permute.xlu0 %1062
    %v1065 = vmul.f32 %v1059, %v1063
    %1067 = vrot.lane.b32.xlu0 %v1065, 32
    %v1068 = vpop.permute.xlu0 %1067
    %v1070 = vadd.f32 %v1060, %v1068
    %v1071 = vtanh.pop %v1070
    %1073 = vrot.lane.b32.xlu0 %v1071, 64
    %v1074 = vpop.permute.xlu0 %1073
    %v1076 = vmul.f32 %v1059, %v1074
    %1078 = vrot.lane.b32.xlu0 %v1076, 32
    %v1079 = vpop.permute.xlu0 %1078
    %1081 = vrot.lane.b32.xlu0 %v902, 64
    %v1082 = vpop.permute.xlu0 %1081
    %v1084 = vsel %vm74, %v1079, %v1082
    %v1086 = vsel %vm255, %v1084, 0
    %1088 = vmatprep.subr.mxu0 0.0
    %1089 = vmatpush1.msra.mxu0 %v45
    %1090 = vmatprep.subr.mxu0 0.0
    %1091 = vmatpush1.msra.mxu0 %v46
    %1092 = vmatprep.subr.mxu0 0.0
    %1093 = vmatpush1.msra.mxu0 %v47
    %1094 = vmatprep.subr.mxu0 0.0
    %1095 = vmatpush1.msra.mxu0 %v48
    %1096 = vmatprep.subr.mxu0 0.0
    %1097 = vmatpush1.msra.mxu0 %v49
    %1098 = vmatprep.subr.mxu0 0.0
    %1099 = vmatpush1.msra.mxu0 %v50
    %1100 = vmatprep.subr.mxu0 0.0
    %1101 = vmatpush1.msra.mxu0 %v51
    %1102 = vmatprep.subr.mxu0 0.0
    %1103 = vmatpush1.msra.mxu0 %v52
    %1104 = vmatprep.subr.mxu0 0.0
    %1105 = vmatpush1.msra.mxu0 0.0
    %1106 = vmatprep.subr.mxu0 0.0
    %1107 = vmatpush1.msra.mxu0 0.0
    %1108 = vmatprep.subr.mxu0 0.0
    %1109 = vmatpush1.msra.mxu0 0.0
    %1110 = vmatprep.subr.mxu0 0.0
    %1111 = vmatpush1.msra.mxu0 0.0
    %1112 = vmatprep.subr.mxu0 0.0
    %1113 = vmatpush1.msra.mxu0 0.0
    %1114 = vmatprep.subr.mxu0 0.0
    %1115 = vmatpush1.msra.mxu0 0.0
    %1116 = vmatprep.subr.mxu0 0.0
    %1117 = vmatpush1.msra.mxu0 0.0
    %1118 = vmatprep.subr.mxu0 0.0
    %1119 = vmatpush1.msra.mxu0 0.0
    %1120 = vmatprep.subr.mxu0 0.0
    %1121 = vmatpush1.msra.mxu0 0.0
    %1122 = vmatprep.subr.mxu0 0.0
    %1123 = vmatpush1.msra.mxu0 0.0
    %1124 = vmatprep.subr.mxu0 0.0
    %1125 = vmatpush1.msra.mxu0 0.0
    %1126 = vmatprep.subr.mxu0 0.0
    %1127 = vmatpush1.msra.mxu0 0.0
    %1128 = vmatprep.subr.mxu0 0.0
    %1129 = vmatpush1.msra.mxu0 0.0
    %1130 = vmatprep.subr.mxu0 0.0
    %1131 = vmatpush1.msra.mxu0 0.0
    %1132 = vmatprep.subr.mxu0 0.0
    %1133 = vmatpush1.msra.mxu0 0.0
    %1134 = vmatprep.subr.mxu0 0.0
    %1135 = vmatpush1.msra.mxu0 0.0
    %1136 = vmatprep.subr.mxu0 0.0
    %1137 = vmatpush1.msra.mxu0 0.0
    %1138 = vmatprep.subr.mxu0 0.0
    %1139 = vmatpush1.msra.mxu0 0.0
    %1140 = vmatprep.subr.mxu0 0.0
    %1141 = vmatpush1.msra.mxu0 0.0
    %1142 = vmatprep.subr.mxu0 0.0
    %1143 = vmatpush1.msra.mxu0 0.0
    %1144 = vmatprep.subr.mxu0 0.0
    %1145 = vmatpush1.msra.mxu0 0.0
    %1146 = vmatprep.subr.mxu0 0.0
    %1147 = vmatpush1.msra.mxu0 0.0
    %1148 = vmatprep.subr.mxu0 0.0
    %1149 = vmatpush1.msra.mxu0 0.0
    %1150 = vmatprep.subr.mxu0 0.0
    %1151 = vmatpush1.msra.mxu0 0.0
    %1152 = vmatprep.mubr.f32.mxu0 0.0
    %1153 = vmatmul.mubr.f32.gmra.mrb[0].mxu0 %v1086
    %v1154 = vpop.f32.mrb[0].mxu0
    %v1155 = vadd.f32 %v65, %v1154
    %v1156 = vpop.f32.mrb[0].mxu0
    %1157 = vdwg.mxu0
    %v1158 = vtanh.pop %v1155
    %v1159 = vadd.f32 %v1158, 1.0
    %v1160 = vmul.f32 %v1159, 0.5
    %v1161 = vmul.f32 %v1160, %v896
    %1163 = vrot.lane.b32.xlu0 %v1158, 64
    %v1164 = vpop.permute.xlu0 %1163
    %v1166 = vmul.f32 %v1160, %v1164
    %1168 = vrot.lane.b32.xlu0 %v1166, 32
    %v1169 = vpop.permute.xlu0 %1168
    %v1171 = vadd.f32 %v1161, %v1169
    %v1172 = vtanh.pop %v1171
    %1174 = vrot.lane.b32.xlu0 %v1172, 64
    %v1175 = vpop.permute.xlu0 %1174
    %v1177 = vmul.f32 %v1160, %v1175
    %1179 = vrot.lane.b32.xlu0 %v1177, 32
    %v1180 = vpop.permute.xlu0 %1179
    %s1182 = scalar_lea.vmem %s6, 6
    %1183 = vst.msk [vmem:[%s1182] sm:$0x3] %vm357, %v1180
    %s1184 = scalar_lea.vmem %s0, 8
    %v1185 = vld [vmem:[%s1184] sm:$0x3]
    %v1187 = vsel %vm74, %v1185, 0
    %1189 = vmatprep.subr.mxu0 0.0
    %1190 = vmatpush1.msra.mxu0 %v37
    %1191 = vmatprep.subr.mxu0 0.0
    %1192 = vmatpush1.msra.mxu0 %v38
    %1193 = vmatprep.subr.mxu0 0.0
    %1194 = vmatpush1.msra.mxu0 %v39
    %1195 = vmatprep.subr.mxu0 0.0
    %1196 = vmatpush1.msra.mxu0 %v40
    %1197 = vmatprep.subr.mxu0 0.0
    %1198 = vmatpush1.msra.mxu0 0.0
    %1199 = vmatprep.subr.mxu0 0.0
    %1200 = vmatpush1.msra.mxu0 0.0
    %1201 = vmatprep.subr.mxu0 0.0
    %1202 = vmatpush1.msra.mxu0 0.0
    %1203 = vmatprep.subr.mxu0 0.0
    %1204 = vmatpush1.msra.mxu0 0.0
    %1205 = vmatprep.subr.mxu0 0.0
    %1206 = vmatpush1.msra.mxu0 0.0
    %1207 = vmatprep.subr.mxu0 0.0
    %1208 = vmatpush1.msra.mxu0 0.0
    %1209 = vmatprep.subr.mxu0 0.0
    %1210 = vmatpush1.msra.mxu0 0.0
    %1211 = vmatprep.subr.mxu0 0.0
    %1212 = vmatpush1.msra.mxu0 0.0
    %1213 = vmatprep.subr.mxu0 0.0
    %1214 = vmatpush1.msra.mxu0 0.0
    %1215 = vmatprep.subr.mxu0 0.0
    %1216 = vmatpush1.msra.mxu0 0.0
    %1217 = vmatprep.subr.mxu0 0.0
    %1218 = vmatpush1.msra.mxu0 0.0
    %1219 = vmatprep.subr.mxu0 0.0
    %1220 = vmatpush1.msra.mxu0 0.0
    %1221 = vmatprep.subr.mxu0 0.0
    %1222 = vmatpush1.msra.mxu0 0.0
    %1223 = vmatprep.subr.mxu0 0.0
    %1224 = vmatpush1.msra.mxu0 0.0
    %1225 = vmatprep.subr.mxu0 0.0
    %1226 = vmatpush1.msra.mxu0 0.0
    %1227 = vmatprep.subr.mxu0 0.0
    %1228 = vmatpush1.msra.mxu0 0.0
    %1229 = vmatprep.subr.mxu0 0.0
    %1230 = vmatpush1.msra.mxu0 0.0
    %1231 = vmatprep.subr.mxu0 0.0
    %1232 = vmatpush1.msra.mxu0 0.0
    %1233 = vmatprep.subr.mxu0 0.0
    %1234 = vmatpush1.msra.mxu0 0.0
    %1235 = vmatprep.subr.mxu0 0.0
    %1236 = vmatpush1.msra.mxu0 0.0
    %1237 = vmatprep.subr.mxu0 0.0
    %1238 = vmatpush1.msra.mxu0 0.0
    %1239 = vmatprep.subr.mxu0 0.0
    %1240 = vmatpush1.msra.mxu0 0.0
    %1241 = vmatprep.subr.mxu0 0.0
    %1242 = vmatpush1.msra.mxu0 0.0
    %1243 = vmatprep.subr.mxu0 0.0
    %1244 = vmatpush1.msra.mxu0 0.0
    %1245 = vmatprep.subr.mxu0 0.0
    %1246 = vmatpush1.msra.mxu0 0.0
    %1247 = vmatprep.subr.mxu0 0.0
    %1248 = vmatpush1.msra.mxu0 0.0
    %1249 = vmatprep.subr.mxu0 0.0
    %1250 = vmatpush1.msra.mxu0 0.0
    %1251 = vmatprep.subr.mxu0 0.0
    %1252 = vmatpush1.msra.mxu0 0.0
    %1253 = vmatprep.mubr.f32.mxu0 0.0
    %1254 = vmatmul.mubr.f32.gmra.mrb[0].mxu0 %v1187
    %v1255 = vpop.f32.mrb[0].mxu0
    %v1256 = vadd.f32 %v58, %v1255
    %v1257 = vpop.f32.mrb[0].mxu0
    %1258 = vdwg.mxu0
    %v1259 = vsel %vm74, %v1079, 0
    %1261 = vmatprep.subr.mxu0 0.0
    %1262 = vmatpush1.msra.mxu0 %v41
    %1263 = vmatprep.subr.mxu0 0.0
    %1264 = vmatpush1.msra.mxu0 %v42
    %1265 = vmatprep.subr.mxu0 0.0
    %1266 = vmatpush1.msra.mxu0 %v43
    %1267 = vmatprep.subr.mxu0 0.0
    %1268 = vmatpush1.msra.mxu0 %v44
    %1269 = vmatprep.subr.mxu0 0.0
    %1270 = vmatpush1.msra.mxu0 0.0
    %1271 = vmatprep.subr.mxu0 0.0
    %1272 = vmatpush1.msra.mxu0 0.0
    %1273 = vmatprep.subr.mxu0 0.0
    %1274 = vmatpush1.msra.mxu0 0.0
    %1275 = vmatprep.subr.mxu0 0.0
    %1276 = vmatpush1.msra.mxu0 0.0
    %1277 = vmatprep.subr.mxu0 0.0
    %1278 = vmatpush1.msra.mxu0 0.0
    %1279 = vmatprep.subr.mxu0 0.0
    %1280 = vmatpush1.msra.mxu0 0.0
    %1281 = vmatprep.subr.mxu0 0.0
    %1282 = vmatpush1.msra.mxu0 0.0
    %1283 = vmatprep.subr.mxu0 0.0
    %1284 = vmatpush1.msra.mxu0 0.0
    %1285 = vmatprep.subr.mxu0 0.0
    %1286 = vmatpush1.msra.mxu0 0.0
    %1287 = vmatprep.subr.mxu0 0.0
    %1288 = vmatpush1.msra.mxu0 0.0
    %1289 = vmatprep.subr.mxu0 0.0
    %1290 = vmatpush1.msra.mxu0 0.0
    %1291 = vmatprep.subr.mxu0 0.0
    %1292 = vmatpush1.msra.mxu0 0.0
    %1293 = vmatprep.subr.mxu0 0.0
    %1294 = vmatpush1.msra.mxu0 0.0
    %1295 = vmatprep.subr.mxu0 0.0
    %1296 = vmatpush1.msra.mxu0 0.0
    %1297 = vmatprep.subr.mxu0 0.0
    %1298 = vmatpush1.msra.mxu0 0.0
    %1299 = vmatprep.subr.mxu0 0.0
    %1300 = vmatpush1.msra.mxu0 0.0
    %1301 = vmatprep.subr.mxu0 0.0
    %1302 = vmatpush1.msra.mxu0 0.0
    %1303 = vmatprep.subr.mxu0 0.0
    %1304 = vmatpush1.msra.mxu0 0.0
    %1305 = vmatprep.subr.mxu0 0.0
    %1306 = vmatpush1.msra.mxu0 0.0
    %1307 = vmatprep.subr.mxu0 0.0
    %1308 = vmatpush1.msra.mxu0 0.0
    %1309 = vmatprep.subr.mxu0 0.0
    %1310 = vmatpush1.msra.mxu0 0.0
    %1311 = vmatprep.subr.mxu0 0.0
    %1312 = vmatpush1.msra.mxu0 0.0
    %1313 = vmatprep.subr.mxu0 0.0
    %1314 = vmatpush1.msra.mxu0 0.0
    %1315 = vmatprep.subr.mxu0 0.0
    %1316 = vmatpush1.msra.mxu0 0.0
    %1317 = vmatprep.subr.mxu0 0.0
    %1318 = vmatpush1.msra.mxu0 0.0
    %1319 = vmatprep.subr.mxu0 0.0
    %1320 = vmatpush1.msra.mxu0 0.0
    %1321 = vmatprep.subr.mxu0 0.0
    %1322 = vmatpush1.msra.mxu0 0.0
    %1323 = vmatprep.subr.mxu0 0.0
    %1324 = vmatpush1.msra.mxu0 0.0
    %1325 = vmatprep.mubr.f32.mxu0 0.0
    %1326 = vmatmul.mubr.f32.gmra.mrb[0].mxu0 %v1259
    %v1327 = vpop.f32.mrb[0].mxu0
    %v1328 = vadd.f32 0.0, %v1327
    %v1329 = vpop.f32.mrb[0].mxu0
    %1330 = vdwg.mxu0
    %v1331 = vadd.f32 %v1256, %v1328
    %v1332 = vtanh.pop %v1331
    %v1333 = vadd.f32 %v1332, 1.0
    %v1334 = vmul.f32 %v1333, 0.5
    %v1335 = vmul.f32 %v1334, %v1070
    %1337 = vrot.lane.b32.xlu0 %v1332, 64
    %v1338 = vpop.permute.xlu0 %1337
    %v1340 = vmul.f32 %v1334, %v1338
    %1342 = vrot.lane.b32.xlu0 %v1340, 32
    %v1343 = vpop.permute.xlu0 %1342
    %v1345 = vadd.f32 %v1335, %v1343
    %v1346 = vtanh.pop %v1345
    %1348 = vrot.lane.b32.xlu0 %v1346, 64
    %v1349 = vpop.permute.xlu0 %1348
    %v1351 = vmul.f32 %v1334, %v1349
    %1353 = vrot.lane.b32.xlu0 %v1351, 32
    %v1354 = vpop.permute.xlu0 %1353
    %1356 = vrot.lane.b32.xlu0 %v1177, 64
    %v1357 = vpop.permute.xlu0 %1356
    %v1359 = vsel %vm74, %v1354, %v1357
    %v1361 = vsel %vm255, %v1359, 0
    %1363 = vmatprep.subr.mxu0 0.0
    %1364 = vmatpush1.msra.mxu0 %v45
    %1365 = vmatprep.subr.mxu0 0.0
    %1366 = vmatpush1.msra.mxu0 %v46
    %1367 = vmatprep.subr.mxu0 0.0
    %1368 = vmatpush1.msra.mxu0 %v47
    %1369 = vmatprep.subr.mxu0 0.0
    %1370 = vmatpush1.msra.mxu0 %v48
    %1371 = vmatprep.subr.mxu0 0.0
    %1372 = vmatpush1.msra.mxu0 %v49
    %1373 = vmatprep.subr.mxu0 0.0
    %1374 = vmatpush1.msra.mxu0 %v50
    %1375 = vmatprep.subr.mxu0 0.0
    %1376 = vmatpush1.msra.mxu0 %v51
    %1377 = vmatprep.subr.mxu0 0.0
    %1378 = vmatpush1.msra.mxu0 %v52
    %1379 = vmatprep.subr.mxu0 0.0
    %1380 = vmatpush1.msra.mxu0 0.0
    %1381 = vmatprep.subr.mxu0 0.0
    %1382 = vmatpush1.msra.mxu0 0.0
    %1383 = vmatprep.subr.mxu0 0.0
    %1384 = vmatpush1.msra.mxu0 0.0
    %1385 = vmatprep.subr.mxu0 0.0
    %1386 = vmatpush1.msra.mxu0 0.0
    %1387 = vmatprep.subr.mxu0 0.0
    %1388 = vmatpush1.msra.mxu0 0.0
    %1389 = vmatprep.subr.mxu0 0.0
    %1390 = vmatpush1.msra.mxu0 0.0
    %1391 = vmatprep.subr.mxu0 0.0
    %1392 = vmatpush1.msra.mxu0 0.0
    %1393 = vmatprep.subr.mxu0 0.0
    %1394 = vmatpush1.msra.mxu0 0.0
    %1395 = vmatprep.subr.mxu0 0.0
    %1396 = vmatpush1.msra.mxu0 0.0
    %1397 = vmatprep.subr.mxu0 0.0
    %1398 = vmatpush1.msra.mxu0 0.0
    %1399 = vmatprep.subr.mxu0 0.0
    %1400 = vmatpush1.msra.mxu0 0.0
    %1401 = vmatprep.subr.mxu0 0.0
    %1402 = vmatpush1.msra.mxu0 0.0
    %1403 = vmatprep.subr.mxu0 0.0
    %1404 = vmatpush1.msra.mxu0 0.0
    %1405 = vmatprep.subr.mxu0 0.0
    %1406 = vmatpush1.msra.mxu0 0.0
    %1407 = vmatprep.subr.mxu0 0.0
    %1408 = vmatpush1.msra.mxu0 0.0
    %1409 = vmatprep.subr.mxu0 0.0
    %1410 = vmatpush1.msra.mxu0 0.0
    %1411 = vmatprep.subr.mxu0 0.0
    %1412 = vmatpush1.msra.mxu0 0.0
    %1413 = vmatprep.subr.mxu0 0.0
    %1414 = vmatpush1.msra.mxu0 0.0
    %1415 = vmatprep.subr.mxu0 0.0
    %1416 = vmatpush1.msra.mxu0 0.0
    %1417 = vmatprep.subr.mxu0 0.0
    %1418 = vmatpush1.msra.mxu0 0.0
    %1419 = vmatprep.subr.mxu0 0.0
    %1420 = vmatpush1.msra.mxu0 0.0
    %1421 = vmatprep.subr.mxu0 0.0
    %1422 = vmatpush1.msra.mxu0 0.0
    %1423 = vmatprep.subr.mxu0 0.0
    %1424 = vmatpush1.msra.mxu0 0.0
    %1425 = vmatprep.subr.mxu0 0.0
    %1426 = vmatpush1.msra.mxu0 0.0
    %1427 = vmatprep.mubr.f32.mxu0 0.0
    %1428 = vmatmul.mubr.f32.gmra.mrb[0].mxu0 %v1361
    %v1429 = vpop.f32.mrb[0].mxu0
    %v1430 = vadd.f32 %v65, %v1429
    %v1431 = vpop.f32.mrb[0].mxu0
    %1432 = vdwg.mxu0
    %v1433 = vtanh.pop %v1430
    %v1434 = vadd.f32 %v1433, 1.0
    %v1435 = vmul.f32 %v1434, 0.5
    %v1436 = vmul.f32 %v1435, %v1171
    %1438 = vrot.lane.b32.xlu0 %v1433, 64
    %v1439 = vpop.permute.xlu0 %1438
    %v1441 = vmul.f32 %v1435, %v1439
    %1443 = vrot.lane.b32.xlu0 %v1441, 32
    %v1444 = vpop.permute.xlu0 %1443
    %v1446 = vadd.f32 %v1436, %v1444
    %v1447 = vtanh.pop %v1446
    %1449 = vrot.lane.b32.xlu0 %v1447, 64
    %v1450 = vpop.permute.xlu0 %1449
    %v1452 = vmul.f32 %v1435, %v1450
    %1454 = vrot.lane.b32.xlu0 %v1452, 32
    %v1455 = vpop.permute.xlu0 %1454
    %s1457 = scalar_lea.vmem %s6, 8
    %1458 = vst.msk [vmem:[%s1457] sm:$0x3] %vm357, %v1455
    %s1459 = scalar_lea.vmem %s0, 10
    %v1460 = vld [vmem:[%s1459] sm:$0x3]
    %v1462 = vsel %vm74, %v1460, 0
    %1464 = vmatprep.subr.mxu0 0.0
    %1465 = vmatpush1.msra.mxu0 %v37
    %1466 = vmatprep.subr.mxu0 0.0
    %1467 = vmatpush1.msra.mxu0 %v38
    %1468 = vmatprep.subr.mxu0 0.0
    %1469 = vmatpush1.msra.mxu0 %v39
    %1470 = vmatprep.subr.mxu0 0.0
    %1471 = vmatpush1.msra.mxu0 %v40
    %1472 = vmatprep.subr.mxu0 0.0
    %1473 = vmatpush1.msra.mxu0 0.0
    %1474 = vmatprep.subr.mxu0 0.0
    %1475 = vmatpush1.msra.mxu0 0.0
    %1476 = vmatprep.subr.mxu0 0.0
    %1477 = vmatpush1.msra.mxu0 0.0
    %1478 = vmatprep.subr.mxu0 0.0
    %1479 = vmatpush1.msra.mxu0 0.0
    %1480 = vmatprep.subr.mxu0 0.0
    %1481 = vmatpush1.msra.mxu0 0.0
    %1482 = vmatprep.subr.mxu0 0.0
    %1483 = vmatpush1.msra.mxu0 0.0
    %1484 = vmatprep.subr.mxu0 0.0
    %1485 = vmatpush1.msra.mxu0 0.0
    %1486 = vmatprep.subr.mxu0 0.0
    %1487 = vmatpush1.msra.mxu0 0.0
    %1488 = vmatprep.subr.mxu0 0.0
    %1489 = vmatpush1.msra.mxu0 0.0
    %1490 = vmatprep.subr.mxu0 0.0
    %1491 = vmatpush1.msra.mxu0 0.0
    %1492 = vmatprep.subr.mxu0 0.0
    %1493 = vmatpush1.msra.mxu0 0.0
    %1494 = vmatprep.subr.mxu0 0.0
    %1495 = vmatpush1.msra.mxu0 0.0
    %1496 = vmatprep.subr.mxu0 0.0
    %1497 = vmatpush1.msra.mxu0 0.0
    %1498 = vmatprep.subr.mxu0 0.0
    %1499 = vmatpush1.msra.mxu0 0.0
    %1500 = vmatprep.subr.mxu0 0.0
    %1501 = vmatpush1.msra.mxu0 0.0
    %1502 = vmatprep.subr.mxu0 0.0
    %1503 = vmatpush1.msra.mxu0 0.0
    %1504 = vmatprep.subr.mxu0 0.0
    %1505 = vmatpush1.msra.mxu0 0.0
    %1506 = vmatprep.subr.mxu0 0.0
    %1507 = vmatpush1.msra.mxu0 0.0
    %1508 = vmatprep.subr.mxu0 0.0
    %1509 = vmatpush1.msra.mxu0 0.0
    %1510 = vmatprep.subr.mxu0 0.0
    %1511 = vmatpush1.msra.mxu0 0.0
    %1512 = vmatprep.subr.mxu0 0.0
    %1513 = vmatpush1.msra.mxu0 0.0
    %1514 = vmatprep.subr.mxu0 0.0
    %1515 = vmatpush1.msra.mxu0 0.0
    %1516 = vmatprep.subr.mxu0 0.0
    %1517 = vmatpush1.msra.mxu0 0.0
    %1518 = vmatprep.subr.mxu0 0.0
    %1519 = vmatpush1.msra.mxu0 0.0
    %1520 = vmatprep.subr.mxu0 0.0
    %1521 = vmatpush1.msra.mxu0 0.0
    %1522 = vmatprep.subr.mxu0 0.0
    %1523 = vmatpush1.msra.mxu0 0.0
    %1524 = vmatprep.subr.mxu0 0.0
    %1525 = vmatpush1.msra.mxu0 0.0
    %1526 = vmatprep.subr.mxu0 0.0
    %1527 = vmatpush1.msra.mxu0 0.0
    %1528 = vmatprep.mubr.f32.mxu0 0.0
    %1529 = vmatmul.mubr.f32.gmra.mrb[0].mxu0 %v1462
    %v1530 = vpop.f32.mrb[0].mxu0
    %v1531 = vadd.f32 %v58, %v1530
    %v1532 = vpop.f32.mrb[0].mxu0
    %1533 = vdwg.mxu0
    %v1534 = vsel %vm74, %v1354, 0
    %1536 = vmatprep.subr.mxu0 0.0
    %1537 = vmatpush1.msra.mxu0 %v41
    %1538 = vmatprep.subr.mxu0 0.0
    %1539 = vmatpush1.msra.mxu0 %v42
    %1540 = vmatprep.subr.mxu0 0.0
    %1541 = vmatpush1.msra.mxu0 %v43
    %1542 = vmatprep.subr.mxu0 0.0
    %1543 = vmatpush1.msra.mxu0 %v44
    %1544 = vmatprep.subr.mxu0 0.0
    %1545 = vmatpush1.msra.mxu0 0.0
    %1546 = vmatprep.subr.mxu0 0.0
    %1547 = vmatpush1.msra.mxu0 0.0
    %1548 = vmatprep.subr.mxu0 0.0
    %1549 = vmatpush1.msra.mxu0 0.0
    %1550 = vmatprep.subr.mxu0 0.0
    %1551 = vmatpush1.msra.mxu0 0.0
    %1552 = vmatprep.subr.mxu0 0.0
    %1553 = vmatpush1.msra.mxu0 0.0
    %1554 = vmatprep.subr.mxu0 0.0
    %1555 = vmatpush1.msra.mxu0 0.0
    %1556 = vmatprep.subr.mxu0 0.0
    %1557 = vmatpush1.msra.mxu0 0.0
    %1558 = vmatprep.subr.mxu0 0.0
    %1559 = vmatpush1.msra.mxu0 0.0
    %1560 = vmatprep.subr.mxu0 0.0
    %1561 = vmatpush1.msra.mxu0 0.0
    %1562 = vmatprep.subr.mxu0 0.0
    %1563 = vmatpush1.msra.mxu0 0.0
    %1564 = vmatprep.subr.mxu0 0.0
    %1565 = vmatpush1.msra.mxu0 0.0
    %1566 = vmatprep.subr.mxu0 0.0
    %1567 = vmatpush1.msra.mxu0 0.0
    %1568 = vmatprep.subr.mxu0 0.0
    %1569 = vmatpush1.msra.mxu0 0.0
    %1570 = vmatprep.subr.mxu0 0.0
    %1571 = vmatpush1.msra.mxu0 0.0
    %1572 = vmatprep.subr.mxu0 0.0
    %1573 = vmatpush1.msra.mxu0 0.0
    %1574 = vmatprep.subr.mxu0 0.0
    %1575 = vmatpush1.msra.mxu0 0.0
    %1576 = vmatprep.subr.mxu0 0.0
    %1577 = vmatpush1.msra.mxu0 0.0
    %1578 = vmatprep.subr.mxu0 0.0
    %1579 = vmatpush1.msra.mxu0 0.0
    %1580 = vmatprep.subr.mxu0 0.0
    %1581 = vmatpush1.msra.mxu0 0.0
    %1582 = vmatprep.subr.mxu0 0.0
    %1583 = vmatpush1.msra.mxu0 0.0
    %1584 = vmatprep.subr.mxu0 0.0
    %1585 = vmatpush1.msra.mxu0 0.0
    %1586 = vmatprep.subr.mxu0 0.0
    %1587 = vmatpush1.msra.mxu0 0.0
    %1588 = vmatprep.subr.mxu0 0.0
    %1589 = vmatpush1.msra.mxu0 0.0
    %1590 = vmatprep.subr.mxu0 0.0
    %1591 = vmatpush1.msra.mxu0 0.0
    %1592 = vmatprep.subr.mxu0 0.0
    %1593 = vmatpush1.msra.mxu0 0.0
    %1594 = vmatprep.subr.mxu0 0.0
    %1595 = vmatpush1.msra.mxu0 0.0
    %1596 = vmatprep.subr.mxu0 0.0
    %1597 = vmatpush1.msra.mxu0 0.0
    %1598 = vmatprep.subr.mxu0 0.0
    %1599 = vmatpush1.msra.mxu0 0.0
    %1600 = vmatprep.mubr.f32.mxu0 0.0
    %1601 = vmatmul.mubr.f32.gmra.mrb[0].mxu0 %v1534
    %v1602 = vpop.f32.mrb[0].mxu0
    %v1603 = vadd.f32 0.0, %v1602
    %v1604 = vpop.f32.mrb[0].mxu0
    %1605 = vdwg.mxu0
    %v1606 = vadd.f32 %v1531, %v1603
    %v1607 = vtanh.pop %v1606
    %v1608 = vadd.f32 %v1607, 1.0
    %v1609 = vmul.f32 %v1608, 0.5
    %v1610 = vmul.f32 %v1609, %v1345
    %1612 = vrot.lane.b32.xlu0 %v1607, 64
    %v1613 = vpop.permute.xlu0 %1612
    %v1615 = vmul.f32 %v1609, %v1613
    %1617 = vrot.lane.b32.xlu0 %v1615, 32
    %v1618 = vpop.permute.xlu0 %1617
    %v1620 = vadd.f32 %v1610, %v1618
    %v1621 = vtanh.pop %v1620
    %1623 = vrot.lane.b32.xlu0 %v1621, 64
    %v1624 = vpop.permute.xlu0 %1623
    %v1626 = vmul.f32 %v1609, %v1624
    %1628 = vrot.lane.b32.xlu0 %v1626, 32
    %v1629 = vpop.permute.xlu0 %1628
    %1631 = vrot.lane.b32.xlu0 %v1452, 64
    %v1632 = vpop.permute.xlu0 %1631
    %v1634 = vsel %vm74, %v1629, %v1632
    %v1636 = vsel %vm255, %v1634, 0
    %1638 = vmatprep.subr.mxu0 0.0
    %1639 = vmatpush1.msra.mxu0 %v45
    %1640 = vmatprep.subr.mxu0 0.0
    %1641 = vmatpush1.msra.mxu0 %v46
    %1642 = vmatprep.subr.mxu0 0.0
    %1643 = vmatpush1.msra.mxu0 %v47
    %1644 = vmatprep.subr.mxu0 0.0
    %1645 = vmatpush1.msra.mxu0 %v48
    %1646 = vmatprep.subr.mxu0 0.0
    %1647 = vmatpush1.msra.mxu0 %v49
    %1648 = vmatprep.subr.mxu0 0.0
    %1649 = vmatpush1.msra.mxu0 %v50
    %1650 = vmatprep.subr.mxu0 0.0
    %1651 = vmatpush1.msra.mxu0 %v51
    %1652 = vmatprep.subr.mxu0 0.0
    %1653 = vmatpush1.msra.mxu0 %v52
    %1654 = vmatprep.subr.mxu0 0.0
    %1655 = vmatpush1.msra.mxu0 0.0
    %1656 = vmatprep.subr.mxu0 0.0
    %1657 = vmatpush1.msra.mxu0 0.0
    %1658 = vmatprep.subr.mxu0 0.0
    %1659 = vmatpush1.msra.mxu0 0.0
    %1660 = vmatprep.subr.mxu0 0.0
    %1661 = vmatpush1.msra.mxu0 0.0
    %1662 = vmatprep.subr.mxu0 0.0
    %1663 = vmatpush1.msra.mxu0 0.0
    %1664 = vmatprep.subr.mxu0 0.0
    %1665 = vmatpush1.msra.mxu0 0.0
    %1666 = vmatprep.subr.mxu0 0.0
    %1667 = vmatpush1.msra.mxu0 0.0
    %1668 = vmatprep.subr.mxu0 0.0
    %1669 = vmatpush1.msra.mxu0 0.0
    %1670 = vmatprep.subr.mxu0 0.0
    %1671 = vmatpush1.msra.mxu0 0.0
    %1672 = vmatprep.subr.mxu0 0.0
    %1673 = vmatpush1.msra.mxu0 0.0
    %1674 = vmatprep.subr.mxu0 0.0
    %1675 = vmatpush1.msra.mxu0 0.0
    %1676 = vmatprep.subr.mxu0 0.0
    %1677 = vmatpush1.msra.mxu0 0.0
    %1678 = vmatprep.subr.mxu0 0.0
    %1679 = vmatpush1.msra.mxu0 0.0
    %1680 = vmatprep.subr.mxu0 0.0
    %1681 = vmatpush1.msra.mxu0 0.0
    %1682 = vmatprep.subr.mxu0 0.0
    %1683 = vmatpush1.msra.mxu0 0.0
    %1684 = vmatprep.subr.mxu0 0.0
    %1685 = vmatpush1.msra.mxu0 0.0
    %1686 = vmatprep.subr.mxu0 0.0
    %1687 = vmatpush1.msra.mxu0 0.0
    %1688 = vmatprep.subr.mxu0 0.0
    %1689 = vmatpush1.msra.mxu0 0.0
    %1690 = vmatprep.subr.mxu0 0.0
    %1691 = vmatpush1.msra.mxu0 0.0
    %1692 = vmatprep.subr.mxu0 0.0
    %1693 = vmatpush1.msra.mxu0 0.0
    %1694 = vmatprep.subr.mxu0 0.0
    %1695 = vmatpush1.msra.mxu0 0.0
    %1696 = vmatprep.subr.mxu0 0.0
    %1697 = vmatpush1.msra.mxu0 0.0
    %1698 = vmatprep.subr.mxu0 0.0
    %1699 = vmatpush1.msra.mxu0 0.0
    %1700 = vmatprep.subr.mxu0 0.0
    %1701 = vmatpush1.msra.mxu0 0.0
    %1702 = vmatprep.mubr.f32.mxu0 0.0
    %1703 = vmatmul.mubr.f32.gmra.mrb[0].mxu0 %v1636
    %v1704 = vpop.f32.mrb[0].mxu0
    %v1705 = vadd.f32 %v65, %v1704
    %v1706 = vpop.f32.mrb[0].mxu0
    %1707 = vdwg.mxu0
    %v1708 = vtanh.pop %v1705
    %v1709 = vadd.f32 %v1708, 1.0
    %v1710 = vmul.f32 %v1709, 0.5
    %v1711 = vmul.f32 %v1710, %v1446
    %1713 = vrot.lane.b32.xlu0 %v1708, 64
    %v1714 = vpop.permute.xlu0 %1713
    %v1716 = vmul.f32 %v1710, %v1714
    %1718 = vrot.lane.b32.xlu0 %v1716, 32
    %v1719 = vpop.permute.xlu0 %1718
    %v1721 = vadd.f32 %v1711, %v1719
    %v1722 = vtanh.pop %v1721
    %1724 = vrot.lane.b32.xlu0 %v1722, 64
    %v1725 = vpop.permute.xlu0 %1724
    %v1727 = vmul.f32 %v1710, %v1725
    %1729 = vrot.lane.b32.xlu0 %v1727, 32
    %v1730 = vpop.permute.xlu0 %1729
    %s1732 = scalar_lea.vmem %s6, 10
    %1733 = vst.msk [vmem:[%s1732] sm:$0x3] %vm357, %v1730
    %s1734 = scalar_lea.vmem %s0, 12
    %v1735 = vld [vmem:[%s1734] sm:$0x3]
    %v1737 = vsel %vm74, %v1735, 0
    %1739 = vmatprep.subr.mxu0 0.0
    %1740 = vmatpush1.msra.mxu0 %v37
    %1741 = vmatprep.subr.mxu0 0.0
    %1742 = vmatpush1.msra.mxu0 %v38
    %1743 = vmatprep.subr.mxu0 0.0
    %1744 = vmatpush1.msra.mxu0 %v39
    %1745 = vmatprep.subr.mxu0 0.0
    %1746 = vmatpush1.msra.mxu0 %v40
    %1747 = vmatprep.subr.mxu0 0.0
    %1748 = vmatpush1.msra.mxu0 0.0
    %1749 = vmatprep.subr.mxu0 0.0
    %1750 = vmatpush1.msra.mxu0 0.0
    %1751 = vmatprep.subr.mxu0 0.0
    %1752 = vmatpush1.msra.mxu0 0.0
    %1753 = vmatprep.subr.mxu0 0.0
    %1754 = vmatpush1.msra.mxu0 0.0
    %1755 = vmatprep.subr.mxu0 0.0
    %1756 = vmatpush1.msra.mxu0 0.0
    %1757 = vmatprep.subr.mxu0 0.0
    %1758 = vmatpush1.msra.mxu0 0.0
    %1759 = vmatprep.subr.mxu0 0.0
    %1760 = vmatpush1.msra.mxu0 0.0
    %1761 = vmatprep.subr.mxu0 0.0
    %1762 = vmatpush1.msra.mxu0 0.0
    %1763 = vmatprep.subr.mxu0 0.0
    %1764 = vmatpush1.msra.mxu0 0.0
    %1765 = vmatprep.subr.mxu0 0.0
    %1766 = vmatpush1.msra.mxu0 0.0
    %1767 = vmatprep.subr.mxu0 0.0
    %1768 = vmatpush1.msra.mxu0 0.0
    %1769 = vmatprep.subr.mxu0 0.0
    %1770 = vmatpush1.msra.mxu0 0.0
    %1771 = vmatprep.subr.mxu0 0.0
    %1772 = vmatpush1.msra.mxu0 0.0
    %1773 = vmatprep.subr.mxu0 0.0
    %1774 = vmatpush1.msra.mxu0 0.0
    %1775 = vmatprep.subr.mxu0 0.0
    %1776 = vmatpush1.msra.mxu0 0.0
    %1777 = vmatprep.subr.mxu0 0.0
    %1778 = vmatpush1.msra.mxu0 0.0
    %1779 = vmatprep.subr.mxu0 0.0
    %1780 = vmatpush1.msra.mxu0 0.0
    %1781 = vmatprep.subr.mxu0 0.0
    %1782 = vmatpush1.msra.mxu0 0.0
    %1783 = vmatprep.subr.mxu0 0.0
    %1784 = vmatpush1.msra.mxu0 0.0
    %1785 = vmatprep.subr.mxu0 0.0
    %1786 = vmatpush1.msra.mxu0 0.0
    %1787 = vmatprep.subr.mxu0 0.0
    %1788 = vmatpush1.msra.mxu0 0.0
    %1789 = vmatprep.subr.mxu0 0.0
    %1790 = vmatpush1.msra.mxu0 0.0
    %1791 = vmatprep.subr.mxu0 0.0
    %1792 = vmatpush1.msra.mxu0 0.0
    %1793 = vmatprep.subr.mxu0 0.0
    %1794 = vmatpush1.msra.mxu0 0.0
    %1795 = vmatprep.subr.mxu0 0.0
    %1796 = vmatpush1.msra.mxu0 0.0
    %1797 = vmatprep.subr.mxu0 0.0
    %1798 = vmatpush1.msra.mxu0 0.0
    %1799 = vmatprep.subr.mxu0 0.0
    %1800 = vmatpush1.msra.mxu0 0.0
    %1801 = vmatprep.subr.mxu0 0.0
    %1802 = vmatpush1.msra.mxu0 0.0
    %1803 = vmatprep.mubr.f32.mxu0 0.0
    %1804 = vmatmul.mubr.f32.gmra.mrb[0].mxu0 %v1737
    %v1805 = vpop.f32.mrb[0].mxu0
    %v1806 = vadd.f32 %v58, %v1805
    %v1807 = vpop.f32.mrb[0].mxu0
    %1808 = vdwg.mxu0
    %v1809 = vsel %vm74, %v1629, 0
    %1811 = vmatprep.subr.mxu0 0.0
    %1812 = vmatpush1.msra.mxu0 %v41
    %1813 = vmatprep.subr.mxu0 0.0
    %1814 = vmatpush1.msra.mxu0 %v42
    %1815 = vmatprep.subr.mxu0 0.0
    %1816 = vmatpush1.msra.mxu0 %v43
    %1817 = vmatprep.subr.mxu0 0.0
    %1818 = vmatpush1.msra.mxu0 %v44
    %1819 = vmatprep.subr.mxu0 0.0
    %1820 = vmatpush1.msra.mxu0 0.0
    %1821 = vmatprep.subr.mxu0 0.0
    %1822 = vmatpush1.msra.mxu0 0.0
    %1823 = vmatprep.subr.mxu0 0.0
    %1824 = vmatpush1.msra.mxu0 0.0
    %1825 = vmatprep.subr.mxu0 0.0
    %1826 = vmatpush1.msra.mxu0 0.0
    %1827 = vmatprep.subr.mxu0 0.0
    %1828 = vmatpush1.msra.mxu0 0.0
    %1829 = vmatprep.subr.mxu0 0.0
    %1830 = vmatpush1.msra.mxu0 0.0
    %1831 = vmatprep.subr.mxu0 0.0
    %1832 = vmatpush1.msra.mxu0 0.0
    %1833 = vmatprep.subr.mxu0 0.0
    %1834 = vmatpush1.msra.mxu0 0.0
    %1835 = vmatprep.subr.mxu0 0.0
    %1836 = vmatpush1.msra.mxu0 0.0
    %1837 = vmatprep.subr.mxu0 0.0
    %1838 = vmatpush1.msra.mxu0 0.0
    %1839 = vmatprep.subr.mxu0 0.0
    %1840 = vmatpush1.msra.mxu0 0.0
    %1841 = vmatprep.subr.mxu0 0.0
    %1842 = vmatpush1.msra.mxu0 0.0
    %1843 = vmatprep.subr.mxu0 0.0
    %1844 = vmatpush1.msra.mxu0 0.0
    %1845 = vmatprep.subr.mxu0 0.0
    %1846 = vmatpush1.msra.mxu0 0.0
    %1847 = vmatprep.subr.mxu0 0.0
    %1848 = vmatpush1.msra.mxu0 0.0
    %1849 = vmatprep.subr.mxu0 0.0
    %1850 = vmatpush1.msra.mxu0 0.0
    %1851 = vmatprep.subr.mxu0 0.0
    %1852 = vmatpush1.msra.mxu0 0.0
    %1853 = vmatprep.subr.mxu0 0.0
    %1854 = vmatpush1.msra.mxu0 0.0
    %1855 = vmatprep.subr.mxu0 0.0
    %1856 = vmatpush1.msra.mxu0 0.0
    %1857 = vmatprep.subr.mxu0 0.0
    %1858 = vmatpush1.msra.mxu0 0.0
    %1859 = vmatprep.subr.mxu0 0.0
    %1860 = vmatpush1.msra.mxu0 0.0
    %1861 = vmatprep.subr.mxu0 0.0
    %1862 = vmatpush1.msra.mxu0 0.0
    %1863 = vmatprep.subr.mxu0 0.0
    %1864 = vmatpush1.msra.mxu0 0.0
    %1865 = vmatprep.subr.mxu0 0.0
    %1866 = vmatpush1.msra.mxu0 0.0
    %1867 = vmatprep.subr.mxu0 0.0
    %1868 = vmatpush1.msra.mxu0 0.0
    %1869 = vmatprep.subr.mxu0 0.0
    %1870 = vmatpush1.msra.mxu0 0.0
    %1871 = vmatprep.subr.mxu0 0.0
    %1872 = vmatpush1.msra.mxu0 0.0
    %1873 = vmatprep.subr.mxu0 0.0
    %1874 = vmatpush1.msra.mxu0 0.0
    %1875 = vmatprep.mubr.f32.mxu0 0.0
    %1876 = vmatmul.mubr.f32.gmra.mrb[0].mxu0 %v1809
    %v1877 = vpop.f32.mrb[0].mxu0
    %v1878 = vadd.f32 0.0, %v1877
    %v1879 = vpop.f32.mrb[0].mxu0
    %1880 = vdwg.mxu0
    %v1881 = vadd.f32 %v1806, %v1878
    %v1882 = vtanh.pop %v1881
    %v1883 = vadd.f32 %v1882, 1.0
    %v1884 = vmul.f32 %v1883, 0.5
    %v1885 = vmul.f32 %v1884, %v1620
    %1887 = vrot.lane.b32.xlu0 %v1882, 64
    %v1888 = vpop.permute.xlu0 %1887
    %v1890 = vmul.f32 %v1884, %v1888
    %1892 = vrot.lane.b32.xlu0 %v1890, 32
    %v1893 = vpop.permute.xlu0 %1892
    %v1895 = vadd.f32 %v1885, %v1893
    %v1896 = vtanh.pop %v1895
    %1898 = vrot.lane.b32.xlu0 %v1896, 64
    %v1899 = vpop.permute.xlu0 %1898
    %v1901 = vmul.f32 %v1884, %v1899
    %1903 = vrot.lane.b32.xlu0 %v1901, 32
    %v1904 = vpop.permute.xlu0 %1903
    %1906 = vrot.lane.b32.xlu0 %v1727, 64
    %v1907 = vpop.permute.xlu0 %1906
    %v1909 = vsel %vm74, %v1904, %v1907
    %v1911 = vsel %vm255, %v1909, 0
    %1913 = vmatprep.subr.mxu0 0.0
    %1914 = vmatpush1.msra.mxu0 %v45
    %1915 = vmatprep.subr.mxu0 0.0
    %1916 = vmatpush1.msra.mxu0 %v46
    %1917 = vmatprep.subr.mxu0 0.0
    %1918 = vmatpush1.msra.mxu0 %v47
    %1919 = vmatprep.subr.mxu0 0.0
    %1920 = vmatpush1.msra.mxu0 %v48
    %1921 = vmatprep.subr.mxu0 0.0
    %1922 = vmatpush1.msra.mxu0 %v49
    %1923 = vmatprep.subr.mxu0 0.0
    %1924 = vmatpush1.msra.mxu0 %v50
    %1925 = vmatprep.subr.mxu0 0.0
    %1926 = vmatpush1.msra.mxu0 %v51
    %1927 = vmatprep.subr.mxu0 0.0
    %1928 = vmatpush1.msra.mxu0 %v52
    %1929 = vmatprep.subr.mxu0 0.0
    %1930 = vmatpush1.msra.mxu0 0.0
    %1931 = vmatprep.subr.mxu0 0.0
    %1932 = vmatpush1.msra.mxu0 0.0
    %1933 = vmatprep.subr.mxu0 0.0
    %1934 = vmatpush1.msra.mxu0 0.0
    %1935 = vmatprep.subr.mxu0 0.0
    %1936 = vmatpush1.msra.mxu0 0.0
    %1937 = vmatprep.subr.mxu0 0.0
    %1938 = vmatpush1.msra.mxu0 0.0
    %1939 = vmatprep.subr.mxu0 0.0
    %1940 = vmatpush1.msra.mxu0 0.0
    %1941 = vmatprep.subr.mxu0 0.0
    %1942 = vmatpush1.msra.mxu0 0.0
    %1943 = vmatprep.subr.mxu0 0.0
    %1944 = vmatpush1.msra.mxu0 0.0
    %1945 = vmatprep.subr.mxu0 0.0
    %1946 = vmatpush1.msra.mxu0 0.0
    %1947 = vmatprep.subr.mxu0 0.0
    %1948 = vmatpush1.msra.mxu0 0.0
    %1949 = vmatprep.subr.mxu0 0.0
    %1950 = vmatpush1.msra.mxu0 0.0
    %1951 = vmatprep.subr.mxu0 0.0
    %1952 = vmatpush1.msra.mxu0 0.0
    %1953 = vmatprep.subr.mxu0 0.0
    %1954 = vmatpush1.msra.mxu0 0.0
    %1955 = vmatprep.subr.mxu0 0.0
    %1956 = vmatpush1.msra.mxu0 0.0
    %1957 = vmatprep.subr.mxu0 0.0
    %1958 = vmatpush1.msra.mxu0 0.0
    %1959 = vmatprep.subr.mxu0 0.0
    %1960 = vmatpush1.msra.mxu0 0.0
    %1961 = vmatprep.subr.mxu0 0.0
    %1962 = vmatpush1.msra.mxu0 0.0
    %1963 = vmatprep.subr.mxu0 0.0
    %1964 = vmatpush1.msra.mxu0 0.0
    %1965 = vmatprep.subr.mxu0 0.0
    %1966 = vmatpush1.msra.mxu0 0.0
    %1967 = vmatprep.subr.mxu0 0.0
    %1968 = vmatpush1.msra.mxu0 0.0
    %1969 = vmatprep.subr.mxu0 0.0
    %1970 = vmatpush1.msra.mxu0 0.0
    %1971 = vmatprep.subr.mxu0 0.0
    %1972 = vmatpush1.msra.mxu0 0.0
    %1973 = vmatprep.subr.mxu0 0.0
    %1974 = vmatpush1.msra.mxu0 0.0
    %1975 = vmatprep.subr.mxu0 0.0
    %1976 = vmatpush1.msra.mxu0 0.0
    %1977 = vmatprep.mubr.f32.mxu0 0.0
    %1978 = vmatmul.mubr.f32.gmra.mrb[0].mxu0 %v1911
    %v1979 = vpop.f32.mrb[0].mxu0
    %v1980 = vadd.f32 %v65, %v1979
    %v1981 = vpop.f32.mrb[0].mxu0
    %1982 = vdwg.mxu0
    %v1983 = vtanh.pop %v1980
    %v1984 = vadd.f32 %v1983, 1.0
    %v1985 = vmul.f32 %v1984, 0.5
    %v1986 = vmul.f32 %v1985, %v1721
    %1988 = vrot.lane.b32.xlu0 %v1983, 64
    %v1989 = vpop.permute.xlu0 %1988
    %v1991 = vmul.f32 %v1985, %v1989
    %1993 = vrot.lane.b32.xlu0 %v1991, 32
    %v1994 = vpop.permute.xlu0 %1993
    %v1996 = vadd.f32 %v1986, %v1994
    %v1997 = vtanh.pop %v1996
    %1999 = vrot.lane.b32.xlu0 %v1997, 64
    %v2000 = vpop.permute.xlu0 %1999
    %v2002 = vmul.f32 %v1985, %v2000
    %2004 = vrot.lane.b32.xlu0 %v2002, 32
    %v2005 = vpop.permute.xlu0 %2004
    %s2007 = scalar_lea.vmem %s6, 12
    %2008 = vst.msk [vmem:[%s2007] sm:$0x3] %vm357, %v2005
    %s2009 = scalar_lea.vmem %s0, 14
    %v2010 = vld [vmem:[%s2009] sm:$0x3]
    %v2012 = vsel %vm74, %v2010, 0
    %2014 = vmatprep.subr.mxu0 0.0
    %2015 = vmatpush1.msra.mxu0 %v37
    %2016 = vmatprep.subr.mxu0 0.0
    %2017 = vmatpush1.msra.mxu0 %v38
    %2018 = vmatprep.subr.mxu0 0.0
    %2019 = vmatpush1.msra.mxu0 %v39
    %2020 = vmatprep.subr.mxu0 0.0
    %2021 = vmatpush1.msra.mxu0 %v40
    %2022 = vmatprep.subr.mxu0 0.0
    %2023 = vmatpush1.msra.mxu0 0.0
    %2024 = vmatprep.subr.mxu0 0.0
    %2025 = vmatpush1.msra.mxu0 0.0
    %2026 = vmatprep.subr.mxu0 0.0
    %2027 = vmatpush1.msra.mxu0 0.0
    %2028 = vmatprep.subr.mxu0 0.0
    %2029 = vmatpush1.msra.mxu0 0.0
    %2030 = vmatprep.subr.mxu0 0.0
    %2031 = vmatpush1.msra.mxu0 0.0
    %2032 = vmatprep.subr.mxu0 0.0
    %2033 = vmatpush1.msra.mxu0 0.0
    %2034 = vmatprep.subr.mxu0 0.0
    %2035 = vmatpush1.msra.mxu0 0.0
    %2036 = vmatprep.subr.mxu0 0.0
    %2037 = vmatpush1.msra.mxu0 0.0
    %2038 = vmatprep.subr.mxu0 0.0
    %2039 = vmatpush1.msra.mxu0 0.0
    %2040 = vmatprep.subr.mxu0 0.0
    %2041 = vmatpush1.msra.mxu0 0.0
    %2042 = vmatprep.subr.mxu0 0.0
    %2043 = vmatpush1.msra.mxu0 0.0
    %2044 = vmatprep.subr.mxu0 0.0
    %2045 = vmatpush1.msra.mxu0 0.0
    %2046 = vmatprep.subr.mxu0 0.0
    %2047 = vmatpush1.msra.mxu0 0.0
    %2048 = vmatprep.subr.mxu0 0.0
    %2049 = vmatpush1.msra.mxu0 0.0
    %2050 = vmatprep.subr.mxu0 0.0
    %2051 = vmatpush1.msra.mxu0 0.0
    %2052 = vmatprep.subr.mxu0 0.0
    %2053 = vmatpush1.msra.mxu0 0.0
    %2054 = vmatprep.subr.mxu0 0.0
    %2055 = vmatpush1.msra.mxu0 0.0
    %2056 = vmatprep.subr.mxu0 0.0
    %2057 = vmatpush1.msra.mxu0 0.0
    %2058 = vmatprep.subr.mxu0 0.0
    %2059 = vmatpush1.msra.mxu0 0.0
    %2060 = vmatprep.subr.mxu0 0.0
    %2061 = vmatpush1.msra.mxu0 0.0
    %2062 = vmatprep.subr.mxu0 0.0
    %2063 = vmatpush1.msra.mxu0 0.0
    %2064 = vmatprep.subr.mxu0 0.0
    %2065 = vmatpush1.msra.mxu0 0.0
    %2066 = vmatprep.subr.mxu0 0.0
    %2067 = vmatpush1.msra.mxu0 0.0
    %2068 = vmatprep.subr.mxu0 0.0
    %2069 = vmatpush1.msra.mxu0 0.0
    %2070 = vmatprep.subr.mxu0 0.0
    %2071 = vmatpush1.msra.mxu0 0.0
    %2072 = vmatprep.subr.mxu0 0.0
    %2073 = vmatpush1.msra.mxu0 0.0
    %2074 = vmatprep.subr.mxu0 0.0
    %2075 = vmatpush1.msra.mxu0 0.0
    %2076 = vmatprep.subr.mxu0 0.0
    %2077 = vmatpush1.msra.mxu0 0.0
    %2078 = vmatprep.mubr.f32.mxu0 0.0
    %2079 = vmatmul.mubr.f32.gmra.mrb[0].mxu0 %v2012
    %v2080 = vpop.f32.mrb[0].mxu0
    %v2081 = vadd.f32 %v58, %v2080
    %v2082 = vpop.f32.mrb[0].mxu0
    %2083 = vdwg.mxu0
    %v2084 = vsel %vm74, %v1904, 0
    %2086 = vmatprep.subr.mxu0 0.0
    %2087 = vmatpush1.msra.mxu0 %v41
    %2088 = vmatprep.subr.mxu0 0.0
    %2089 = vmatpush1.msra.mxu0 %v42
    %2090 = vmatprep.subr.mxu0 0.0
    %2091 = vmatpush1.msra.mxu0 %v43
    %2092 = vmatprep.subr.mxu0 0.0
    %2093 = vmatpush1.msra.mxu0 %v44
    %2094 = vmatprep.subr.mxu0 0.0
    %2095 = vmatpush1.msra.mxu0 0.0
    %2096 = vmatprep.subr.mxu0 0.0
    %2097 = vmatpush1.msra.mxu0 0.0
    %2098 = vmatprep.subr.mxu0 0.0
    %2099 = vmatpush1.msra.mxu0 0.0
    %2100 = vmatprep.subr.mxu0 0.0
    %2101 = vmatpush1.msra.mxu0 0.0
    %2102 = vmatprep.subr.mxu0 0.0
    %2103 = vmatpush1.msra.mxu0 0.0
    %2104 = vmatprep.subr.mxu0 0.0
    %2105 = vmatpush1.msra.mxu0 0.0
    %2106 = vmatprep.subr.mxu0 0.0
    %2107 = vmatpush1.msra.mxu0 0.0
    %2108 = vmatprep.subr.mxu0 0.0
    %2109 = vmatpush1.msra.mxu0 0.0
    %2110 = vmatprep.subr.mxu0 0.0
    %2111 = vmatpush1.msra.mxu0 0.0
    %2112 = vmatprep.subr.mxu0 0.0
    %2113 = vmatpush1.msra.mxu0 0.0
    %2114 = vmatprep.subr.mxu0 0.0
    %2115 = vmatpush1.msra.mxu0 0.0
    %2116 = vmatprep.subr.mxu0 0.0
    %2117 = vmatpush1.msra.mxu0 0.0
    %2118 = vmatprep.subr.mxu0 0.0
    %2119 = vmatpush1.msra.mxu0 0.0
    %2120 = vmatprep.subr.mxu0 0.0
    %2121 = vmatpush1.msra.mxu0 0.0
    %2122 = vmatprep.subr.mxu0 0.0
    %2123 = vmatpush1.msra.mxu0 0.0
    %2124 = vmatprep.subr.mxu0 0.0
    %2125 = vmatpush1.msra.mxu0 0.0
    %2126 = vmatprep.subr.mxu0 0.0
    %2127 = vmatpush1.msra.mxu0 0.0
    %2128 = vmatprep.subr.mxu0 0.0
    %2129 = vmatpush1.msra.mxu0 0.0
    %2130 = vmatprep.subr.mxu0 0.0
    %2131 = vmatpush1.msra.mxu0 0.0
    %2132 = vmatprep.subr.mxu0 0.0
    %2133 = vmatpush1.msra.mxu0 0.0
    %2134 = vmatprep.subr.mxu0 0.0
    %2135 = vmatpush1.msra.mxu0 0.0
    %2136 = vmatprep.subr.mxu0 0.0
    %2137 = vmatpush1.msra.mxu0 0.0
    %2138 = vmatprep.subr.mxu0 0.0
    %2139 = vmatpush1.msra.mxu0 0.0
    %2140 = vmatprep.subr.mxu0 0.0
    %2141 = vmatpush1.msra.mxu0 0.0
    %2142 = vmatprep.subr.mxu0 0.0
    %2143 = vmatpush1.msra.mxu0 0.0
    %2144 = vmatprep.subr.mxu0 0.0
    %2145 = vmatpush1.msra.mxu0 0.0
    %2146 = vmatprep.subr.mxu0 0.0
    %2147 = vmatpush1.msra.mxu0 0.0
    %2148 = vmatprep.subr.mxu0 0.0
    %2149 = vmatpush1.msra.mxu0 0.0
    %2150 = vmatprep.mubr.f32.mxu0 0.0
    %2151 = vmatmul.mubr.f32.gmra.mrb[0].mxu0 %v2084
    %v2152 = vpop.f32.mrb[0].mxu0
    %v2153 = vadd.f32 0.0, %v2152
    %v2154 = vpop.f32.mrb[0].mxu0
    %2155 = vdwg.mxu0
    %v2156 = vadd.f32 %v2081, %v2153
    %v2157 = vtanh.pop %v2156
    %v2158 = vadd.f32 %v2157, 1.0
    %v2159 = vmul.f32 %v2158, 0.5
    %v2160 = vmul.f32 %v2159, %v1895
    %2162 = vrot.lane.b32.xlu0 %v2157, 64
    %v2163 = vpop.permute.xlu0 %2162
    %v2165 = vmul.f32 %v2159, %v2163
    %2167 = vrot.lane.b32.xlu0 %v2165, 32
    %v2168 = vpop.permute.xlu0 %2167
    %v2170 = vadd.f32 %v2160, %v2168
    %v2171 = vtanh.pop %v2170
    %2173 = vrot.lane.b32.xlu0 %v2171, 64
    %v2174 = vpop.permute.xlu0 %2173
    %v2176 = vmul.f32 %v2159, %v2174
    %2178 = vrot.lane.b32.xlu0 %v2176, 32
    %v2179 = vpop.permute.xlu0 %2178
    %2181 = vrot.lane.b32.xlu0 %v2002, 64
    %v2182 = vpop.permute.xlu0 %2181
    %v2184 = vsel %vm74, %v2179, %v2182
    %v2186 = vsel %vm255, %v2184, 0
    %2188 = vmatprep.subr.mxu0 0.0
    %2189 = vmatpush1.msra.mxu0 %v45
    %2190 = vmatprep.subr.mxu0 0.0
    %2191 = vmatpush1.msra.mxu0 %v46
    %2192 = vmatprep.subr.mxu0 0.0
    %2193 = vmatpush1.msra.mxu0 %v47
    %2194 = vmatprep.subr.mxu0 0.0
    %2195 = vmatpush1.msra.mxu0 %v48
    %2196 = vmatprep.subr.mxu0 0.0
    %2197 = vmatpush1.msra.mxu0 %v49
    %2198 = vmatprep.subr.mxu0 0.0
    %2199 = vmatpush1.msra.mxu0 %v50
    %2200 = vmatprep.subr.mxu0 0.0
    %2201 = vmatpush1.msra.mxu0 %v51
    %2202 = vmatprep.subr.mxu0 0.0
    %2203 = vmatpush1.msra.mxu0 %v52
    %2204 = vmatprep.subr.mxu0 0.0
    %2205 = vmatpush1.msra.mxu0 0.0
    %2206 = vmatprep.subr.mxu0 0.0
    %2207 = vmatpush1.msra.mxu0 0.0
    %2208 = vmatprep.subr.mxu0 0.0
    %2209 = vmatpush1.msra.mxu0 0.0
    %2210 = vmatprep.subr.mxu0 0.0
    %2211 = vmatpush1.msra.mxu0 0.0
    %2212 = vmatprep.subr.mxu0 0.0
    %2213 = vmatpush1.msra.mxu0 0.0
    %2214 = vmatprep.subr.mxu0 0.0
    %2215 = vmatpush1.msra.mxu0 0.0
    %2216 = vmatprep.subr.mxu0 0.0
    %2217 = vmatpush1.msra.mxu0 0.0
    %2218 = vmatprep.subr.mxu0 0.0
    %2219 = vmatpush1.msra.mxu0 0.0
    %2220 = vmatprep.subr.mxu0 0.0
    %2221 = vmatpush1.msra.mxu0 0.0
    %2222 = vmatprep.subr.mxu0 0.0
    %2223 = vmatpush1.msra.mxu0 0.0
    %2224 = vmatprep.subr.mxu0 0.0
    %2225 = vmatpush1.msra.mxu0 0.0
    %2226 = vmatprep.subr.mxu0 0.0
    %2227 = vmatpush1.msra.mxu0 0.0
    %2228 = vmatprep.subr.mxu0 0.0
    %2229 = vmatpush1.msra.mxu0 0.0
    %2230 = vmatprep.subr.mxu0 0.0
    %2231 = vmatpush1.msra.mxu0 0.0
    %2232 = vmatprep.subr.mxu0 0.0
    %2233 = vmatpush1.msra.mxu0 0.0
    %2234 = vmatprep.subr.mxu0 0.0
    %2235 = vmatpush1.msra.mxu0 0.0
    %2236 = vmatprep.subr.mxu0 0.0
    %2237 = vmatpush1.msra.mxu0 0.0
    %2238 = vmatprep.subr.mxu0 0.0
    %2239 = vmatpush1.msra.mxu0 0.0
    %2240 = vmatprep.subr.mxu0 0.0
    %2241 = vmatpush1.msra.mxu0 0.0
    %2242 = vmatprep.subr.mxu0 0.0
    %2243 = vmatpush1.msra.mxu0 0.0
    %2244 = vmatprep.subr.mxu0 0.0
    %2245 = vmatpush1.msra.mxu0 0.0
    %2246 = vmatprep.subr.mxu0 0.0
    %2247 = vmatpush1.msra.mxu0 0.0
    %2248 = vmatprep.subr.mxu0 0.0
    %2249 = vmatpush1.msra.mxu0 0.0
    %2250 = vmatprep.subr.mxu0 0.0
    %2251 = vmatpush1.msra.mxu0 0.0
    %2252 = vmatprep.mubr.f32.mxu0 0.0
    %2253 = vmatmul.mubr.f32.gmra.mrb[0].mxu0 %v2186
    %v2254 = vpop.f32.mrb[0].mxu0
    %v2255 = vadd.f32 %v65, %v2254
    %v2256 = vpop.f32.mrb[0].mxu0
    %2257 = vdwg.mxu0
    %v2258 = vtanh.pop %v2255
    %v2259 = vadd.f32 %v2258, 1.0
    %v2260 = vmul.f32 %v2259, 0.5
    %v2261 = vmul.f32 %v2260, %v1996
    %2263 = vrot.lane.b32.xlu0 %v2258, 64
    %v2264 = vpop.permute.xlu0 %2263
    %v2266 = vmul.f32 %v2260, %v2264
    %2268 = vrot.lane.b32.xlu0 %v2266, 32
    %v2269 = vpop.permute.xlu0 %2268
    %v2271 = vadd.f32 %v2261, %v2269
    %v2272 = vtanh.pop %v2271
    %2274 = vrot.lane.b32.xlu0 %v2272, 64
    %v2275 = vpop.permute.xlu0 %2274
    %v2277 = vmul.f32 %v2260, %v2275
    %2279 = vrot.lane.b32.xlu0 %v2277, 32
    %v2280 = vpop.permute.xlu0 %2279
    %s2282 = scalar_lea.vmem %s6, 14
    %2283 = vst.msk [vmem:[%s2282] sm:$0x3] %vm357, %v2280
    %2284 = vst.msk [vmem:[#allocation2] sm:$0x3] %vm357, %v2179
    %2285 = vst.msk [vmem:[%s69] sm:$0x3] %vm357, %v2280
    %2287 = vrot.lane.b32.xlu0 %v2170, 96
    %v2288 = vpop.permute.xlu0 %2287
    %2290 = vst.msk [vmem:[#allocation3] sm:$0x3] %vm357, %v2288
    %2292 = vrot.lane.b32.xlu0 %v2271, 96
    %v2293 = vpop.permute.xlu0 %2292
    %2295 = vst.msk [vmem:[%s71] sm:$0x3] %vm357, %v2293
    // Predicated region
    $region30: #{lstm_basic_forward.2} parent=1 // pred_check
      %p2296 = pneg %p28
    $region31: #{lstm_basic_forward.2} parent=1 // pred_check_branch
      %2298 = sbr.rel (%p2296) target = $region33
    $region32: #{lstm_basic_forward.2} parent=1 // pred_region
      %2299 = vst.msk [vmem:[#allocation4] sm:$0x3] %vm357, %v2179
      %s2300 = scalar_lea.vmem [#allocation4], 2
      %2301 = vst.msk [vmem:[%s2300] sm:$0x3] %vm357, %v2280
      %2302 = vst.msk [vmem:[#allocation6] sm:$0x3] %vm357, %v2288
      %s2303 = scalar_lea.vmem [#allocation6], 2
      %2304 = vst.msk [vmem:[%s2303] sm:$0x3] %vm357, %v2293
    $region33: #{lstm_basic_forward.2} parent=1 // pred_fallthru
      _
    // Predicated region
    $region34: #{lstm_basic_forward.2} parent=1 // pred_check
      _
    $region35: #{lstm_basic_forward.2} parent=1 // pred_check_branch
      %2306 = sbr.rel (0) target = $region37
    $region36: #{lstm_basic_forward.2} parent=1 // pred_region
      _
    $region37: #{lstm_basic_forward.2} parent=1 // pred_fallthru
      _
    // Predicated region
    $region38: #{lstm_basic_forward.2} parent=1 // pred_check
      _
    $region39: #{lstm_basic_forward.2} parent=1 // pred_check_branch
      %2308 = sbr.rel (0) target = $region41
    $region40: #{lstm_basic_forward.2} parent=1 // pred_region
      %s2310 = ssub.s32 64, 64
      %2311 = vsyncadd [#allocation5], %s2310
      %s2312 = sshll.u32 [#allocation4], 4
      %s2313 = int_to_ptr.vmem [resolvable:$true] %s2312
      %2318 = dma.vmem_to_hbm [thread:$0]  %s2313, 64, %s7, [#allocation5], 32, 32, 2
    $region41: #{lstm_basic_forward.2} parent=1 // pred_fallthru
      _
    // Predicated region
    $region42: #{lstm_basic_forward.2} parent=1 // pred_check
      _
    $region43: #{lstm_basic_forward.2} parent=1 // pred_check_branch
      %2320 = sbr.rel (0) target = $region45
    $region44: #{lstm_basic_forward.2} parent=1 // pred_region
      %s2322 = ssub.s32 64, 64
      %2323 = vsyncadd [#allocation7], %s2322
      %s2324 = sshll.u32 [#allocation6], 4
      %s2325 = int_to_ptr.vmem [resolvable:$true] %s2324
      %2330 = dma.vmem_to_hbm [thread:$0]  %s2325, 64, %s8, [#allocation7], 32, 32, 2
    $region45: #{lstm_basic_forward.2} parent=1 // pred_fallthru
      _
    // Predicated region
    $region46: #{lstm_basic_forward.2} parent=1 // pred_check
      _
    $region47: #{lstm_basic_forward.2} parent=1 // pred_check_branch
      %2332 = sbr.rel (0) target = $region49
    $region48: #{lstm_basic_forward.2} parent=1 // pred_region
      _
    $region49: #{lstm_basic_forward.2} parent=1 // pred_fallthru
      _
    // Predicated region
    $region50: #{lstm_basic_forward.2} parent=1 // pred_check
      _
    $region51: #{lstm_basic_forward.2} parent=1 // pred_check_branch
      %2334 = sbr.rel (0) target = $region53
    $region52: #{lstm_basic_forward.2} parent=1 // pred_region
      %2335 = dma.done [#allocation5], 64
    $region53: #{lstm_basic_forward.2} parent=1 // pred_fallthru
      _
    // Predicated region
    $region54: #{lstm_basic_forward.2} parent=1 // pred_check
      _
    $region55: #{lstm_basic_forward.2} parent=1 // pred_check_branch
      %2337 = sbr.rel (0) target = $region57
    $region56: #{lstm_basic_forward.2} parent=1 // pred_region
      %2338 = dma.done [#allocation7], 64
    $region57: #{lstm_basic_forward.2} parent=1 // pred_fallthru
      _
    %2339 = vsyncpa [#allocation5], 1
    %2340 = vsyncpa [#allocation7], 1

</llo_original>
